<compile_context>
chip_gen: v7x
topology: tpu7x:2x2x1
jax: 0.10.0
libtpu: 0.0.40
codegen_flags: <defaults>
</compile_context>

<pallas_src>
import jax
import jax.numpy as jnp
from jax.experimental import pallas as pl
from jax.experimental.pallas import tpu as pltpu

D_MODEL = 128
N_HEADS = 8
HEAD_DIM = D_MODEL // N_HEADS   # 16
D_FF = 256
N_LAYERS = 6
N_CLASSES = 5                   # Classifier3.num_labels
HEAD_PAD = 128                  # lane-dense padding for the classifier head output
LN_EPS = 1e-5
_BF16 = jnp.bfloat16


def _layer_norm(x, gamma, beta):
    mu = jnp.mean(x, axis=-1, keepdims=True)
    var = jnp.mean(jnp.square(x - mu), axis=-1, keepdims=True)
    return (x - mu) * jax.lax.rsqrt(var + LN_EPS) * gamma + beta


def classifier3_kernel(x_ref,
                       wqkv_ref, bqkv_ref, wo_ref, bo_ref,
                       w1_ref, b1_ref, w2_ref, b2_ref,
                       g1_ref, be1_ref, g2_ref, be2_ref,
                       wc_ref, bc_ref,
                       o_ref,
                       h_ref):
    """One grid step = one post-norm encoder layer; last step also does readout+head."""
    layer = pl.program_id(0)

    @pl.when(layer == 0)
    def _():
        h_ref[...] = x_ref[...]                              # load activation once

    h = h_ref[...]                                           # (N, 128) f32, VMEM-resident
    n = h.shape[0]
    x16 = h.astype(_BF16)

    # Fused Q/K/V projection: one full-width (N,128)@(128,384) MXU pass.
    # 1/sqrt(HEAD_DIM) is already folded into the Wq/bq slices at init time.
    qkv = jnp.dot(x16, wqkv_ref[...],
                  preferred_element_type=jnp.float32) + bqkv_ref[...]    # (N, 384)

    # Split heads only for the score/context einsums (small XLU transposes).
    q = jnp.transpose(qkv[:, 0 * D_MODEL:1 * D_MODEL].reshape(n, N_HEADS, HEAD_DIM),
                      (1, 0, 2))                                         # (H, N, Dh)
    k = jnp.transpose(qkv[:, 1 * D_MODEL:2 * D_MODEL].reshape(n, N_HEADS, HEAD_DIM),
                      (1, 0, 2))
    v = jnp.transpose(qkv[:, 2 * D_MODEL:3 * D_MODEL].reshape(n, N_HEADS, HEAD_DIM),
                      (1, 0, 2))

    # Scaled dot-product attention (scale pre-folded), batched over heads.
    s = jnp.einsum('hqc,hkc->hqk', q.astype(_BF16), k.astype(_BF16),
                   preferred_element_type=jnp.float32)                   # (H, N, N)
    s = s - jnp.max(s, axis=-1, keepdims=True)
    p = jnp.exp(s)
    p = p * pl.reciprocal(jnp.sum(p, axis=-1, keepdims=True), approx=True)

    ctx = jnp.einsum('hqk,hkd->hqd', p.astype(_BF16), v.astype(_BF16),
                     preferred_element_type=jnp.float32)                 # (H, N, Dh)

    # Concat heads back to lane-dense (N, 128), then ONE K=128 output projection.
    ctx128 = jnp.transpose(ctx, (1, 0, 2)).reshape(n, D_MODEL)
    attn = jnp.dot(ctx128.astype(_BF16), wo_ref[...],
                   preferred_element_type=jnp.float32) + bo_ref[...]     # (N, 128)

    # residual + LayerNorm1 (dropout p=0.1 is identity at eval)
    h1 = _layer_norm(h + attn, g1_ref[...], be1_ref[...])

    # feed forward
    ff = jnp.dot(h1.astype(_BF16), w1_ref[...],
                 preferred_element_type=jnp.float32) + b1_ref[...]
    ff = jnp.maximum(ff, 0.0)                                            # ReLU
    ff = jnp.dot(ff.astype(_BF16), w2_ref[...],
                 preferred_element_type=jnp.float32) + b2_ref[...]

    # residual + LayerNorm2; carry h across grid steps in VMEM scratch.
    h_new = _layer_norm(h1 + ff, g2_ref[...], be2_ref[...])
    h_ref[...] = h_new

    @pl.when(layer == pl.num_programs(0) - 1)
    def _():
        # dgl sum readout (single graph) + folded classify1->dropout2(id)->classify2.
        hg = jnp.sum(h_new, axis=0, keepdims=True)                       # (1, 128)
        o_ref[...] = jnp.dot(hg.astype(_BF16), wc_ref[...],
                             preferred_element_type=jnp.float32) + bc_ref[...]


@jax.jit
def classifier3_forward(node_feats, params):
    x = node_feats.astype(jnp.float32)
    n = x.shape[0]

    per_layer = [
        pl.BlockSpec((None, D_MODEL, 3 * D_MODEL), lambda i: (i, 0, 0)),  # wqkv
        pl.BlockSpec((None, 1, 3 * D_MODEL), lambda i: (i, 0, 0)),        # bqkv
        pl.BlockSpec((None, D_MODEL, D_MODEL), lambda i: (i, 0, 0)),      # wo
        pl.BlockSpec((None, 1, D_MODEL), lambda i: (i, 0, 0)),            # bo
        pl.BlockSpec((None, D_MODEL, D_FF), lambda i: (i, 0, 0)),         # w1
        pl.BlockSpec((None, 1, D_FF), lambda i: (i, 0, 0)),               # b1
        pl.BlockSpec((None, D_FF, D_MODEL), lambda i: (i, 0, 0)),         # w2
        pl.BlockSpec((None, 1, D_MODEL), lambda i: (i, 0, 0)),            # b2
        pl.BlockSpec((None, 1, D_MODEL), lambda i: (i, 0, 0)),            # g1
        pl.BlockSpec((None, 1, D_MODEL), lambda i: (i, 0, 0)),            # be1
        pl.BlockSpec((None, 1, D_MODEL), lambda i: (i, 0, 0)),            # g2
        pl.BlockSpec((None, 1, D_MODEL), lambda i: (i, 0, 0)),            # be2
    ]
    in_specs = (
        [pl.BlockSpec((n, D_MODEL), lambda i: (0, 0))]                    # x (layer-invariant)
        + per_layer
        + [pl.BlockSpec((D_MODEL, HEAD_PAD), lambda i: (0, 0)),           # wc (folded head)
           pl.BlockSpec((1, HEAD_PAD), lambda i: (0, 0))]                 # bc
    )

    flops = N_LAYERS * (2 * n * D_MODEL * 3 * D_MODEL          # fused qkv
                        + 2 * 2 * N_HEADS * n * n * HEAD_DIM   # scores + ctx
                        + 2 * n * D_MODEL * D_MODEL            # out proj
                        + 2 * 2 * n * D_MODEL * D_FF           # ffn
                        ) + 2 * D_MODEL * HEAD_PAD
    bytes_accessed = int(sum(int(p.size) * p.dtype.itemsize for p in params)
                         + n * D_MODEL * 4 + HEAD_PAD * 4)

    out = pl.pallas_call(
        classifier3_kernel,
        out_shape=jax.ShapeDtypeStruct((1, HEAD_PAD), jnp.float32),
        grid_spec=pltpu.PrefetchScalarGridSpec(
            num_scalar_prefetch=0,
            grid=(N_LAYERS,),
            in_specs=in_specs,
            out_specs=pl.BlockSpec((1, HEAD_PAD), lambda i: (0, 0)),
            scratch_shapes=[pltpu.VMEM((n, D_MODEL), jnp.float32)],       # resident activation
        ),
        compiler_params=pltpu.CompilerParams(dimension_semantics=("arbitrary",)),
        cost_estimate=pl.CostEstimate(flops=flops,
                                      transcendentals=N_LAYERS * N_HEADS * n * n,
                                      bytes_accessed=bytes_accessed),
    )(x, *params)
    return out[:, :N_CLASSES]                                             # (1, n_classes)


def init_params(key):
    """Deterministic synthetic parameters, pre-packed/pre-folded for the fused kernel."""
    keys = iter(jax.random.split(key, 128))

    def w(shape, scale=0.02):
        return scale * jax.random.normal(next(keys), shape, jnp.float32)

    attn_scale = 1.0 / (HEAD_DIM ** 0.5)

    wqkv, bqkv, wo, bo = [], [], [], []
    w1, b1, w2, b2 = [], [], [], []
    g1, be1, g2, be2 = [], [], [], []
    for _ in range(N_LAYERS):
        # softmax scale folded into BOTH Wq and bq
        Wq = w((D_MODEL, D_MODEL)) * attn_scale
        bq = w((1, D_MODEL)) * attn_scale
        Wk = w((D_MODEL, D_MODEL)); bk = w((1, D_MODEL))
        Wv = w((D_MODEL, D_MODEL)); bv = w((1, D_MODEL))
        wqkv.append(jnp.concatenate([Wq, Wk, Wv], axis=1))    # (128, 384) lane-dense
        bqkv.append(jnp.concatenate([bq, bk, bv], axis=1))    # (1, 384)
        wo.append(w((D_MODEL, D_MODEL)))                      # plain (in, out)
        bo.append(w((1, D_MODEL)))
        w1.append(w((D_MODEL, D_FF)));  b1.append(w((1, D_FF)))
        w2.append(w((D_FF, D_MODEL)));  b2.append(w((1, D_MODEL)))
        g1.append(jnp.ones((1, D_MODEL), jnp.float32))
        be1.append(jnp.zeros((1, D_MODEL), jnp.float32))
        g2.append(jnp.ones((1, D_MODEL), jnp.float32))
        be2.append(jnp.zeros((1, D_MODEL), jnp.float32))

    stack_w = lambda xs: jnp.stack(xs).astype(_BF16)   # weights: bf16
    stack_f = lambda xs: jnp.stack(xs)                 # biases / LN params: f32

    # Classifier head: classify2(dropout2(classify1(hg))) has no activation between
    # the two linears at eval, so fold them offline into one (128, n_classes) linear,
    # zero-padded lane-dense to 128 columns (padding exact, sliced off in wrapper).
    Wc1 = w((D_MODEL, 64)); bc1 = w((1, 64))
    Wc2 = w((64, N_CLASSES)); bc2 = w((1, N_CLASSES))
    Wc = Wc1 @ Wc2
    bc = bc1 @ Wc2 + bc2
    wc_pad = jnp.zeros((D_MODEL, HEAD_PAD), jnp.float32).at[:, :N_CLASSES].set(Wc)
    bc_pad = jnp.zeros((1, HEAD_PAD), jnp.float32).at[:, :N_CLASSES].set(bc)

    return (
        stack_w(wqkv), stack_f(bqkv), stack_w(wo), stack_f(bo),
        stack_w(w1), stack_f(b1), stack_w(w2), stack_f(b2),
        stack_f(g1), stack_f(be1), stack_f(g2), stack_f(be2),
        wc_pad.astype(_BF16), bc_pad,
    )


if __name__ == "__main__":
    key = jax.random.PRNGKey(0)
    k_x, k_p = jax.random.split(key)

    N_NODES = 16  # small single-graph example: 16 nodes, 128-dim features
    x = jax.random.normal(k_x, (N_NODES, D_MODEL), jnp.float32)
    params = init_params(k_p)

    out = classifier3_forward(x, params)
    jax.block_until_ready(out)
    assert out.shape == (1, N_CLASSES), out.shape
    assert bool(jnp.all(jnp.isfinite(out)))
    print("KERNEL_OK")
</pallas_src>

<mosaic_0001>
module attributes {stable_mosaic.version = 11 : i64} {
  func.func @classifier3_kernel(%arg0: i32, %arg1: memref<16x128xf32, #tpu.memory_space<vmem>>, %arg2: memref<1x128x384xbf16, #tpu.memory_space<vmem>>, %arg3: memref<1x1x384xf32, #tpu.memory_space<vmem>>, %arg4: memref<1x128x128xbf16, #tpu.memory_space<vmem>>, %arg5: memref<1x1x128xf32, #tpu.memory_space<vmem>>, %arg6: memref<1x128x256xbf16, #tpu.memory_space<vmem>>, %arg7: memref<1x1x256xf32, #tpu.memory_space<vmem>>, %arg8: memref<1x256x128xbf16, #tpu.memory_space<vmem>>, %arg9: memref<1x1x128xf32, #tpu.memory_space<vmem>>, %arg10: memref<1x1x128xf32, #tpu.memory_space<vmem>>, %arg11: memref<1x1x128xf32, #tpu.memory_space<vmem>>, %arg12: memref<1x1x128xf32, #tpu.memory_space<vmem>>, %arg13: memref<1x1x128xf32, #tpu.memory_space<vmem>>, %arg14: memref<128x128xbf16, #tpu.memory_space<vmem>>, %arg15: memref<1x128xf32, #tpu.memory_space<vmem>>, %arg16: memref<1x128xf32, #tpu.memory_space<vmem>>, %arg17: memref<16x128xf32, #tpu.memory_space<vmem>>) attributes {dimension_semantics = [#tpu.dimension_semantics<arbitrary>], iteration_bounds = array<i64: 6>, scalar_prefetch = 0 : i64, scratch_operands = 1 : i64, tpu.core_type = #tpu.core_type<tc>, window_params = [{pipeline_mode = #tpu.pipeline_mode<synchronous>, transform_indices = @transform_0, window_bounds = array<i64: 16, 128>}, {transform_indices = @transform_1, window_bounds = array<i64: 1, 128, 384>}, {transform_indices = @transform_2, window_bounds = array<i64: 1, 1, 384>}, {transform_indices = @transform_3, window_bounds = array<i64: 1, 128, 128>}, {transform_indices = @transform_4, window_bounds = array<i64: 1, 1, 128>}, {transform_indices = @transform_5, window_bounds = array<i64: 1, 128, 256>}, {transform_indices = @transform_6, window_bounds = array<i64: 1, 1, 256>}, {transform_indices = @transform_7, window_bounds = array<i64: 1, 256, 128>}, {transform_indices = @transform_8, window_bounds = array<i64: 1, 1, 128>}, {transform_indices = @transform_9, window_bounds = array<i64: 1, 1, 128>}, {transform_indices = @transform_10, window_bounds = array<i64: 1, 1, 128>}, {transform_indices = @transform_11, window_bounds = array<i64: 1, 1, 128>}, {transform_indices = @transform_12, window_bounds = array<i64: 1, 1, 128>}, {pipeline_mode = #tpu.pipeline_mode<synchronous>, transform_indices = @transform_13, window_bounds = array<i64: 128, 128>}, {pipeline_mode = #tpu.pipeline_mode<synchronous>, transform_indices = @transform_14, window_bounds = array<i64: 1, 128>}, {pipeline_mode = #tpu.pipeline_mode<synchronous>, transform_indices = @transform_15, window_bounds = array<i64: 1, 128>}]} {
    %c0_i32 = arith.constant 0 : i32
    %0 = arith.cmpi eq, %arg0, %c0_i32 : i32
    %1 = arith.extui %0 : i1 to i32
    %c0_i32_0 = arith.constant 0 : i32
    %2 = arith.cmpi ne, %1, %c0_i32_0 : i32
    scf.if %2 {
      %c0_59 = arith.constant 0 : index
      %c0_60 = arith.constant 0 : index
      %123 = vector.load %arg1[%c0_59, %c0_60] : memref<16x128xf32, #tpu.memory_space<vmem>>, vector<16x128xf32>
      %c0_61 = arith.constant 0 : index
      %c0_62 = arith.constant 0 : index
      %124 = vector.load %arg17[%c0_61, %c0_62] : memref<16x128xf32, #tpu.memory_space<vmem>>, vector<16x128xf32>
      tpu.vector_store %arg17[%c0_61, %c0_62], %123 {strides = array<i32>} : memref<16x128xf32, #tpu.memory_space<vmem>>, vector<16x128xf32>,
    } else {
    }
    %c0 = arith.constant 0 : index
    %c0_1 = arith.constant 0 : index
    %3 = vector.load %arg17[%c0, %c0_1] : memref<16x128xf32, #tpu.memory_space<vmem>>, vector<16x128xf32>
    %4 = arith.truncf %3 : vector<16x128xf32> to vector<16x128xbf16>
    %c0_2 = arith.constant 0 : index
    %c0_3 = arith.constant 0 : index
    %c0_4 = arith.constant 0 : index
    %5 = vector.load %arg2[%c0_2, %c0_3, %c0_4] : memref<1x128x384xbf16, #tpu.memory_space<vmem>>, vector<1x128x384xbf16>
    %6 = vector.shape_cast %5 : vector<1x128x384xbf16> to vector<128x384xbf16>
    %cst = arith.constant dense<0.000000e+00> : vector<16x384xf32>
    %7 = tpu.matmul %4, %6, %cst {dimension_numbers = #tpu.dot_dimension_numbers<[1], [0], [0], [1], [0, 0, 1, 1], [], []>} : vector<16x128xbf16>, vector<128x384xbf16>, vector<16x384xf32> -> vector<16x384xf32>
    %c0_5 = arith.constant 0 : index
    %c0_6 = arith.constant 0 : index
    %c0_7 = arith.constant 0 : index
    %8 = vector.load %arg3[%c0_5, %c0_6, %c0_7] : memref<1x1x384xf32, #tpu.memory_space<vmem>>, vector<1x1x384xf32>
    %9 = vector.shape_cast %8 : vector<1x1x384xf32> to vector<1x384xf32>
    %10 = vector.broadcast %9 : vector<1x384xf32> to vector<16x384xf32>
    %11 = arith.addf %7, %10 : vector<16x384xf32>
    %12 = vector.extract_strided_slice %11 {offsets = [0, 0], sizes = [16, 128], strides = [1, 1]} : vector<16x384xf32> to vector<16x128xf32>
    %13 = vector.shape_cast %12 : vector<16x128xf32> to vector<16x8x16xf32>
    %14 = tpu.transpose %13, [1, 0, 2] : vector<16x8x16xf32> -> vector<8x16x16xf32>
    %15 = vector.extract_strided_slice %11 {offsets = [0, 128], sizes = [16, 128], strides = [1, 1]} : vector<16x384xf32> to vector<16x128xf32>
    %16 = vector.shape_cast %15 : vector<16x128xf32> to vector<16x8x16xf32>
    %17 = tpu.transpose %16, [1, 0, 2] : vector<16x8x16xf32> -> vector<8x16x16xf32>
    %18 = vector.extract_strided_slice %11 {offsets = [0, 256], sizes = [16, 128], strides = [1, 1]} : vector<16x384xf32> to vector<16x128xf32>
    %19 = vector.shape_cast %18 : vector<16x128xf32> to vector<16x8x16xf32>
    %20 = tpu.transpose %19, [1, 0, 2] : vector<16x8x16xf32> -> vector<8x16x16xf32>
    %21 = arith.truncf %14 : vector<8x16x16xf32> to vector<8x16x16xbf16>
    %22 = arith.truncf %17 : vector<8x16x16xf32> to vector<8x16x16xbf16>
    "tpu.trace_start"() <{level = 10 : i32, message = "hqc,hkc->hqk"}> : () -> ()
    %cst_8 = arith.constant dense<0.000000e+00> : vector<8x16x16xf32>
    %23 = tpu.matmul %21, %22, %cst_8 {dimension_numbers = #tpu.dot_dimension_numbers<[2], [2], [1], [1], [0, 0, 0, 1, 1, 1], [0], [0]>} : vector<8x16x16xbf16>, vector<8x16x16xbf16>, vector<8x16x16xf32> -> vector<8x16x16xf32>
    "tpu.trace_stop"() : () -> ()
    %cst_9 = arith.constant dense<0xFF800000> : vector<8x16xf32>
    %24 = vector.multi_reduction <maximumf>, %23, %cst_9 [2] : vector<8x16x16xf32> to vector<8x16xf32>
    %25 = vector.shape_cast %24 : vector<8x16xf32> to vector<8x16x1xf32>
    %26 = vector.broadcast %25 : vector<8x16x1xf32> to vector<8x16x16xf32>
    %27 = arith.subf %23, %26 : vector<8x16x16xf32>
    %28 = math.exp %27 : vector<8x16x16xf32>
    %cst_10 = arith.constant dense<0.000000e+00> : vector<8x16xf32>
    %29 = vector.multi_reduction <add>, %28, %cst_10 [2] : vector<8x16x16xf32> to vector<8x16xf32>
    %30 = vector.shape_cast %29 : vector<8x16xf32> to vector<8x16x1xf32>
    %31 = tpu.reciprocal %30 {approx = true} : vector<8x16x1xf32> -> vector<8x16x1xf32>
    %32 = vector.broadcast %31 : vector<8x16x1xf32> to vector<8x16x16xf32>
    %33 = arith.mulf %28, %32 : vector<8x16x16xf32>
    %34 = arith.truncf %33 : vector<8x16x16xf32> to vector<8x16x16xbf16>
    %35 = arith.truncf %20 : vector<8x16x16xf32> to vector<8x16x16xbf16>
    "tpu.trace_start"() <{level = 10 : i32, message = "hqk,hkd->hqd"}> : () -> ()
    %cst_11 = arith.constant dense<0.000000e+00> : vector<8x16x16xf32>
    %36 = tpu.matmul %34, %35, %cst_11 {dimension_numbers = #tpu.dot_dimension_numbers<[2], [1], [1], [2], [0, 0, 0, 1, 1, 2], [0], [0]>} : vector<8x16x16xbf16>, vector<8x16x16xbf16>, vector<8x16x16xf32> -> vector<8x16x16xf32>
    "tpu.trace_stop"() : () -> ()
    %37 = tpu.transpose %36, [1, 0, 2] : vector<8x16x16xf32> -> vector<16x8x16xf32>
    %38 = vector.shape_cast %37 : vector<16x8x16xf32> to vector<16x128xf32>
    %39 = arith.truncf %38 : vector<16x128xf32> to vector<16x128xbf16>
    %c0_12 = arith.constant 0 : index
    %c0_13 = arith.constant 0 : index
    %c0_14 = arith.constant 0 : index
    %40 = vector.load %arg4[%c0_12, %c0_13, %c0_14] : memref<1x128x128xbf16, #tpu.memory_space<vmem>>, vector<1x128x128xbf16>
    %41 = vector.shape_cast %40 : vector<1x128x128xbf16> to vector<128x128xbf16>
    %cst_15 = arith.constant dense<0.000000e+00> : vector<16x128xf32>
    %42 = tpu.matmul %39, %41, %cst_15 {dimension_numbers = #tpu.dot_dimension_numbers<[1], [0], [0], [1], [0, 0, 1, 1], [], []>} : vector<16x128xbf16>, vector<128x128xbf16>, vector<16x128xf32> -> vector<16x128xf32>
    %c0_16 = arith.constant 0 : index
    %c0_17 = arith.constant 0 : index
    %c0_18 = arith.constant 0 : index
    %43 = vector.load %arg5[%c0_16, %c0_17, %c0_18] : memref<1x1x128xf32, #tpu.memory_space<vmem>>, vector<1x1x128xf32>
    %44 = vector.shape_cast %43 : vector<1x1x128xf32> to vector<1x128xf32>
    %45 = vector.broadcast %44 : vector<1x128xf32> to vector<16x128xf32>
    %46 = arith.addf %42, %45 : vector<16x128xf32>
    %47 = arith.addf %3, %46 : vector<16x128xf32>
    %c0_19 = arith.constant 0 : index
    %c0_20 = arith.constant 0 : index
    %c0_21 = arith.constant 0 : index
    %48 = vector.load %arg10[%c0_19, %c0_20, %c0_21] : memref<1x1x128xf32, #tpu.memory_space<vmem>>, vector<1x1x128xf32>
    %49 = vector.shape_cast %48 : vector<1x1x128xf32> to vector<1x128xf32>
    %c0_22 = arith.constant 0 : index
    %c0_23 = arith.constant 0 : index
    %c0_24 = arith.constant 0 : index
    %50 = vector.load %arg11[%c0_22, %c0_23, %c0_24] : memref<1x1x128xf32, #tpu.memory_space<vmem>>, vector<1x1x128xf32>
    %51 = vector.shape_cast %50 : vector<1x1x128xf32> to vector<1x128xf32>
    %cst_25 = arith.constant dense<0.000000e+00> : vector<16xf32>
    %52 = vector.multi_reduction <add>, %47, %cst_25 [1] : vector<16x128xf32> to vector<16xf32>
    %53 = vector.shape_cast %52 : vector<16xf32> to vector<16x1xf32>
    %cst_26 = arith.constant 1.280000e+02 : f32
    %54 = vector.broadcast %cst_26 : f32 to vector<16x1xf32>
    %55 = arith.divf %53, %54 : vector<16x1xf32>
    %56 = vector.broadcast %55 : vector<16x1xf32> to vector<16x128xf32>
    %57 = arith.subf %47, %56 : vector<16x128xf32>
    %58 = arith.mulf %57, %57 : vector<16x128xf32>
    %cst_27 = arith.constant dense<0.000000e+00> : vector<16xf32>
    %59 = vector.multi_reduction <add>, %58, %cst_27 [1] : vector<16x128xf32> to vector<16xf32>
    %60 = vector.shape_cast %59 : vector<16xf32> to vector<16x1xf32>
    %cst_28 = arith.constant 1.280000e+02 : f32
    %61 = vector.broadcast %cst_28 : f32 to vector<16x1xf32>
    %62 = arith.divf %60, %61 : vector<16x1xf32>
    %63 = vector.broadcast %55 : vector<16x1xf32> to vector<16x128xf32>
    %64 = arith.subf %47, %63 : vector<16x128xf32>
    %cst_29 = arith.constant 9.99999974E-6 : f32
    %65 = vector.broadcast %cst_29 : f32 to vector<16x1xf32>
    %66 = arith.addf %62, %65 : vector<16x1xf32>
    %67 = math.rsqrt %66 : vector<16x1xf32>
    %68 = vector.broadcast %67 : vector<16x1xf32> to vector<16x128xf32>
    %69 = arith.mulf %64, %68 : vector<16x128xf32>
    %70 = vector.broadcast %49 : vector<1x128xf32> to vector<16x128xf32>
    %71 = arith.mulf %69, %70 : vector<16x128xf32>
    %72 = vector.broadcast %51 : vector<1x128xf32> to vector<16x128xf32>
    %73 = arith.addf %71, %72 : vector<16x128xf32>
    %74 = arith.truncf %73 : vector<16x128xf32> to vector<16x128xbf16>
    %c0_30 = arith.constant 0 : index
    %c0_31 = arith.constant 0 : index
    %c0_32 = arith.constant 0 : index
    %75 = vector.load %arg6[%c0_30, %c0_31, %c0_32] : memref<1x128x256xbf16, #tpu.memory_space<vmem>>, vector<1x128x256xbf16>
    %76 = vector.shape_cast %75 : vector<1x128x256xbf16> to vector<128x256xbf16>
    %cst_33 = arith.constant dense<0.000000e+00> : vector<16x256xf32>
    %77 = tpu.matmul %74, %76, %cst_33 {dimension_numbers = #tpu.dot_dimension_numbers<[1], [0], [0], [1], [0, 0, 1, 1], [], []>} : vector<16x128xbf16>, vector<128x256xbf16>, vector<16x256xf32> -> vector<16x256xf32>
    %c0_34 = arith.constant 0 : index
    %c0_35 = arith.constant 0 : index
    %c0_36 = arith.constant 0 : index
    %78 = vector.load %arg7[%c0_34, %c0_35, %c0_36] : memref<1x1x256xf32, #tpu.memory_space<vmem>>, vector<1x1x256xf32>
    %79 = vector.shape_cast %78 : vector<1x1x256xf32> to vector<1x256xf32>
    %80 = vector.broadcast %79 : vector<1x256xf32> to vector<16x256xf32>
    %81 = arith.addf %77, %80 : vector<16x256xf32>
    %cst_37 = arith.constant 0.000000e+00 : f32
    %82 = vector.broadcast %cst_37 : f32 to vector<16x256xf32>
    %83 = arith.maximumf %81, %82 : vector<16x256xf32>
    %84 = arith.truncf %83 : vector<16x256xf32> to vector<16x256xbf16>
    %c0_38 = arith.constant 0 : index
    %c0_39 = arith.constant 0 : index
    %c0_40 = arith.constant 0 : index
    %85 = vector.load %arg8[%c0_38, %c0_39, %c0_40] : memref<1x256x128xbf16, #tpu.memory_space<vmem>>, vector<1x256x128xbf16>
    %86 = vector.shape_cast %85 : vector<1x256x128xbf16> to vector<256x128xbf16>
    %cst_41 = arith.constant dense<0.000000e+00> : vector<16x128xf32>
    %87 = tpu.matmul %84, %86, %cst_41 {dimension_numbers = #tpu.dot_dimension_numbers<[1], [0], [0], [1], [0, 0, 1, 1], [], []>} : vector<16x256xbf16>, vector<256x128xbf16>, vector<16x128xf32> -> vector<16x128xf32>
    %c0_42 = arith.constant 0 : index
    %c0_43 = arith.constant 0 : index
    %c0_44 = arith.constant 0 : index
    %88 = vector.load %arg9[%c0_42, %c0_43, %c0_44] : memref<1x1x128xf32, #tpu.memory_space<vmem>>, vector<1x1x128xf32>
    %89 = vector.shape_cast %88 : vector<1x1x128xf32> to vector<1x128xf32>
    %90 = vector.broadcast %89 : vector<1x128xf32> to vector<16x128xf32>
    %91 = arith.addf %87, %90 : vector<16x128xf32>
    %92 = arith.addf %73, %91 : vector<16x128xf32>
    %c0_45 = arith.constant 0 : index
    %c0_46 = arith.constant 0 : index
    %c0_47 = arith.constant 0 : index
    %93 = vector.load %arg12[%c0_45, %c0_46, %c0_47] : memref<1x1x128xf32, #tpu.memory_space<vmem>>, vector<1x1x128xf32>
    %94 = vector.shape_cast %93 : vector<1x1x128xf32> to vector<1x128xf32>
    %c0_48 = arith.constant 0 : index
    %c0_49 = arith.constant 0 : index
    %c0_50 = arith.constant 0 : index
    %95 = vector.load %arg13[%c0_48, %c0_49, %c0_50] : memref<1x1x128xf32, #tpu.memory_space<vmem>>, vector<1x1x128xf32>
    %96 = vector.shape_cast %95 : vector<1x1x128xf32> to vector<1x128xf32>
    %cst_51 = arith.constant dense<0.000000e+00> : vector<16xf32>
    %97 = vector.multi_reduction <add>, %92, %cst_51 [1] : vector<16x128xf32> to vector<16xf32>
    %98 = vector.shape_cast %97 : vector<16xf32> to vector<16x1xf32>
    %cst_52 = arith.constant 1.280000e+02 : f32
    %99 = vector.broadcast %cst_52 : f32 to vector<16x1xf32>
    %100 = arith.divf %98, %99 : vector<16x1xf32>
    %101 = vector.broadcast %100 : vector<16x1xf32> to vector<16x128xf32>
    %102 = arith.subf %92, %101 : vector<16x128xf32>
    %103 = arith.mulf %102, %102 : vector<16x128xf32>
    %cst_53 = arith.constant dense<0.000000e+00> : vector<16xf32>
    %104 = vector.multi_reduction <add>, %103, %cst_53 [1] : vector<16x128xf32> to vector<16xf32>
    %105 = vector.shape_cast %104 : vector<16xf32> to vector<16x1xf32>
    %cst_54 = arith.constant 1.280000e+02 : f32
    %106 = vector.broadcast %cst_54 : f32 to vector<16x1xf32>
    %107 = arith.divf %105, %106 : vector<16x1xf32>
    %108 = vector.broadcast %100 : vector<16x1xf32> to vector<16x128xf32>
    %109 = arith.subf %92, %108 : vector<16x128xf32>
    %cst_55 = arith.constant 9.99999974E-6 : f32
    %110 = vector.broadcast %cst_55 : f32 to vector<16x1xf32>
    %111 = arith.addf %107, %110 : vector<16x1xf32>
    %112 = math.rsqrt %111 : vector<16x1xf32>
    %113 = vector.broadcast %112 : vector<16x1xf32> to vector<16x128xf32>
    %114 = arith.mulf %109, %113 : vector<16x128xf32>
    %115 = vector.broadcast %94 : vector<1x128xf32> to vector<16x128xf32>
    %116 = arith.mulf %114, %115 : vector<16x128xf32>
    %117 = vector.broadcast %96 : vector<1x128xf32> to vector<16x128xf32>
    %118 = arith.addf %116, %117 : vector<16x128xf32>
    %c0_56 = arith.constant 0 : index
    %c0_57 = arith.constant 0 : index
    %119 = vector.load %arg17[%c0_56, %c0_57] : memref<16x128xf32, #tpu.memory_space<vmem>>, vector<16x128xf32>
    tpu.vector_store %arg17[%c0_56, %c0_57], %118 {strides = array<i32>} : memref<16x128xf32, #tpu.memory_space<vmem>>, vector<16x128xf32>,
    %c5_i32 = arith.constant 5 : i32
    %120 = arith.cmpi eq, %arg0, %c5_i32 : i32
    %121 = arith.extui %120 : i1 to i32
    %c0_i32_58 = arith.constant 0 : i32
    %122 = arith.cmpi ne, %121, %c0_i32_58 : i32
    scf.if %122 {
      %cst_59 = arith.constant dense<0.000000e+00> : vector<128xf32>
      %123 = vector.multi_reduction <add>, %118, %cst_59 [0] : vector<16x128xf32> to vector<128xf32>
      %124 = vector.shape_cast %123 : vector<128xf32> to vector<1x128xf32>
      %125 = arith.truncf %124 : vector<1x128xf32> to vector<1x128xbf16>
      %c0_60 = arith.constant 0 : index
      %c0_61 = arith.constant 0 : index
      %126 = vector.load %arg14[%c0_60, %c0_61] : memref<128x128xbf16, #tpu.memory_space<vmem>>, vector<128x128xbf16>
      %cst_62 = arith.constant dense<0.000000e+00> : vector<1x128xf32>
      %127 = tpu.matmul %125, %126, %cst_62 {dimension_numbers = #tpu.dot_dimension_numbers<[1], [0], [0], [1], [0, 0, 1, 1], [], []>} : vector<1x128xbf16>, vector<128x128xbf16>, vector<1x128xf32> -> vector<1x128xf32>
      %c0_63 = arith.constant 0 : index
      %c0_64 = arith.constant 0 : index
      %128 = vector.load %arg15[%c0_63, %c0_64] : memref<1x128xf32, #tpu.memory_space<vmem>>, vector<1x128xf32>
      %129 = arith.addf %127, %128 : vector<1x128xf32>
      %c0_65 = arith.constant 0 : index
      %c0_66 = arith.constant 0 : index
      %130 = vector.load %arg16[%c0_65, %c0_66] : memref<1x128xf32, #tpu.memory_space<vmem>>, vector<1x128xf32>
      tpu.vector_store %arg16[%c0_65, %c0_66], %129 {strides = array<i32>} : memref<1x128xf32, #tpu.memory_space<vmem>>, vector<1x128xf32>,
    } else {
    }
    return
  }
  func.func @transform_0(%arg0: i32) -> (i32, i32) {
    %c0_i32 = arith.constant 0 : i32
    %c0_i32_0 = arith.constant 0 : i32
    %c0_i32_1 = arith.constant 0 : i32
    return %c0_i32, %c0_i32_0 : i32, i32
  }
  func.func @transform_1(%arg0: i32) -> (i32, i32, i32) {
    %c0_i32 = arith.constant 0 : i32
    %c0_i32_0 = arith.constant 0 : i32
    %c0_i32_1 = arith.constant 0 : i32
    return %arg0, %c0_i32, %c0_i32_0 : i32, i32, i32
  }
  func.func @transform_2(%arg0: i32) -> (i32, i32, i32) {
    %c0_i32 = arith.constant 0 : i32
    %c0_i32_0 = arith.constant 0 : i32
    %c0_i32_1 = arith.constant 0 : i32
    return %arg0, %c0_i32, %c0_i32_0 : i32, i32, i32
  }
  func.func @transform_3(%arg0: i32) -> (i32, i32, i32) {
    %c0_i32 = arith.constant 0 : i32
    %c0_i32_0 = arith.constant 0 : i32
    %c0_i32_1 = arith.constant 0 : i32
    return %arg0, %c0_i32, %c0_i32_0 : i32, i32, i32
  }
  func.func @transform_4(%arg0: i32) -> (i32, i32, i32) {
    %c0_i32 = arith.constant 0 : i32
    %c0_i32_0 = arith.constant 0 : i32
    %c0_i32_1 = arith.constant 0 : i32
    return %arg0, %c0_i32, %c0_i32_0 : i32, i32, i32
  }
  func.func @transform_5(%arg0: i32) -> (i32, i32, i32) {
    %c0_i32 = arith.constant 0 : i32
    %c0_i32_0 = arith.constant 0 : i32
    %c0_i32_1 = arith.constant 0 : i32
    return %arg0, %c0_i32, %c0_i32_0 : i32, i32, i32
  }
  func.func @transform_6(%arg0: i32) -> (i32, i32, i32) {
    %c0_i32 = arith.constant 0 : i32
    %c0_i32_0 = arith.constant 0 : i32
    %c0_i32_1 = arith.constant 0 : i32
    return %arg0, %c0_i32, %c0_i32_0 : i32, i32, i32
  }
  func.func @transform_7(%arg0: i32) -> (i32, i32, i32) {
    %c0_i32 = arith.constant 0 : i32
    %c0_i32_0 = arith.constant 0 : i32
    %c0_i32_1 = arith.constant 0 : i32
    return %arg0, %c0_i32, %c0_i32_0 : i32, i32, i32
  }
  func.func @transform_8(%arg0: i32) -> (i32, i32, i32) {
    %c0_i32 = arith.constant 0 : i32
    %c0_i32_0 = arith.constant 0 : i32
    %c0_i32_1 = arith.constant 0 : i32
    return %arg0, %c0_i32, %c0_i32_0 : i32, i32, i32
  }
  func.func @transform_9(%arg0: i32) -> (i32, i32, i32) {
    %c0_i32 = arith.constant 0 : i32
    %c0_i32_0 = arith.constant 0 : i32
    %c0_i32_1 = arith.constant 0 : i32
    return %arg0, %c0_i32, %c0_i32_0 : i32, i32, i32
  }
  func.func @transform_10(%arg0: i32) -> (i32, i32, i32) {
    %c0_i32 = arith.constant 0 : i32
    %c0_i32_0 = arith.constant 0 : i32
    %c0_i32_1 = arith.constant 0 : i32
    return %arg0, %c0_i32, %c0_i32_0 : i32, i32, i32
  }
  func.func @transform_11(%arg0: i32) -> (i32, i32, i32) {
    %c0_i32 = arith.constant 0 : i32
    %c0_i32_0 = arith.constant 0 : i32
    %c0_i32_1 = arith.constant 0 : i32
    return %arg0, %c0_i32, %c0_i32_0 : i32, i32, i32
  }
  func.func @transform_12(%arg0: i32) -> (i32, i32, i32) {
    %c0_i32 = arith.constant 0 : i32
    %c0_i32_0 = arith.constant 0 : i32
    %c0_i32_1 = arith.constant 0 : i32
    return %arg0, %c0_i32, %c0_i32_0 : i32, i32, i32
  }
  func.func @transform_13(%arg0: i32) -> (i32, i32) {
    %c0_i32 = arith.constant 0 : i32
    %c0_i32_0 = arith.constant 0 : i32
    %c0_i32_1 = arith.constant 0 : i32
    return %c0_i32, %c0_i32_0 : i32, i32
  }
  func.func @transform_14(%arg0: i32) -> (i32, i32) {
    %c0_i32 = arith.constant 0 : i32
    %c0_i32_0 = arith.constant 0 : i32
    %c0_i32_1 = arith.constant 0 : i32
    return %c0_i32, %c0_i32_0 : i32, i32
  }
  func.func @transform_15(%arg0: i32) -> (i32, i32) {
    %c0_i32 = arith.constant 0 : i32
    %c0_i32_0 = arith.constant 0 : i32
    %c0_i32_1 = arith.constant 0 : i32
    return %c0_i32, %c0_i32_0 : i32, i32
  }
}

</mosaic_0001>

<llo_original>
// kernel: classifier3_forward.1
$region0: #{classifier3_forward.1}
  #allocation0 [shape = 'u32[]', space=smem, size = 0x4, offset = 0x4, fixed_abs, tag = 'smem constant byte address 0x4 - core index']
  #allocation1 [shape = 'u32[144,128]{1,0:T(1,128)}', space=vmem, size = 0x12000, scoped, tag = 'internal scratch']
  #allocation2 [shape = 'f32[16,128]{1,0:T(8,128)}', space=vmem, size = 0x2000, scoped, tag = 'scratch operand']
  %s0 = inlined_call_operand.hbm [shape: f32[16,128], index: 0, kind: input, shape index: {}]
  %s1 = inlined_call_operand.hbm [shape: bf16[6,128,384], index: 1, kind: input, shape index: {}]
  %s2 = inlined_call_operand.hbm [shape: f32[6,1,384], index: 2, kind: input, shape index: {}]
  %s3 = inlined_call_operand.hbm [shape: bf16[6,128,128], index: 3, kind: input, shape index: {}]
  %s4 = inlined_call_operand.vmem [shape: f32[6,1,128], index: 4, kind: input, shape index: {}]
  %s5 = inlined_call_operand.hbm [shape: bf16[6,128,256], index: 5, kind: input, shape index: {}]
  %s6 = inlined_call_operand.vmem [shape: f32[6,1,256], index: 6, kind: input, shape index: {}]
  %s7 = inlined_call_operand.hbm [shape: bf16[6,256,128], index: 7, kind: input, shape index: {}]
  %s8 = inlined_call_operand.vmem [shape: f32[6,1,128], index: 8, kind: input, shape index: {}]
  %s9 = inlined_call_operand.vmem [shape: f32[6,1,128], index: 9, kind: input, shape index: {}]
  %s10 = inlined_call_operand.vmem [shape: f32[6,1,128], index: 10, kind: input, shape index: {}]
  %s11 = inlined_call_operand.hbm [shape: f32[6,1,128], index: 11, kind: input, shape index: {}]
  %s12 = inlined_call_operand.vmem [shape: f32[6,1,128], index: 12, kind: input, shape index: {}]
  %s13 = inlined_call_operand.hbm [shape: bf16[128,128], index: 13, kind: input, shape index: {}]
  %s14 = inlined_call_operand.vmem [shape: f32[1,128], index: 14, kind: input, shape index: {}]
  %s15 = inlined_call_operand.hbm [shape: f32[1,128], index: 15, kind: output, shape index: {}]
  %s16 = sld [smem:[#allocation0]]
  $region133: #{classifier3_forward.1} parent=0
    _
  %s18 = ssub.s32 1, %s16
  %s19 = scalar_select 0, %s18, %s16
  $region1: #{classifier3_forward.1} parent=0
    #allocation3 [shape = 'u8[8192]{0}', space=vmem, size = 0x2000, scoped, tag = 'input window, operand 0, single buffered']
    #allocation4 [shape = 's32[2]{0}', space=sflag, size = 0x8, scoped, tag = 'scoped memory for classifier3_forward.1']
    #allocation5 [shape = 's32[2]{0}', space=sflag, size = 0x8, scoped, tag = 'scoped memory for classifier3_forward.1']
    #allocation6 [shape = 'u8[196608]{0}', space=vmem, size = 0x30000, scoped, tag = 'input window, operand 1']
    #allocation7 [shape = 's32[2]{0}', space=sflag, size = 0x8, scoped, tag = 'scoped memory for classifier3_forward.1']
    #allocation8 [shape = 'u8[3072]{0}', space=vmem, size = 0xc00, scoped, tag = 'input window, operand 2']
    #allocation9 [shape = 'u8[65536]{0}', space=vmem, size = 0x10000, scoped, tag = 'input window, operand 3']
    #allocation10 [shape = 's32[2]{0}', space=sflag, size = 0x8, scoped, tag = 'scoped memory for classifier3_forward.1']
    #allocation11 [shape = 'u8[131072]{0}', space=vmem, size = 0x20000, scoped, tag = 'input window, operand 5']
    #allocation12 [shape = 'u8[131072]{0}', space=vmem, size = 0x20000, scoped, tag = 'input window, operand 7']
    #allocation13 [shape = 's32[2]{0}', space=sflag, size = 0x8, scoped, tag = 'scoped memory for classifier3_forward.1']
    #allocation14 [shape = 'u8[1024]{0}', space=vmem, size = 0x400, scoped, tag = 'input window, operand 11']
    #allocation15 [shape = 'u8[32768]{0}', space=vmem, size = 0x8000, scoped, tag = 'input window, operand 13, single buffered']
    #allocation16 [shape = 's32[1]{0}', space=sflag, size = 0x4, scoped, tag = 'scoped memory for classifier3_forward.1']
    #allocation17 [shape = 'u8[512]{0}', space=vmem, size = 0x400, scoped, tag = 'output window, operand 0, single buffered']
    %20 = vsyncpa [#allocation4], 0
    %21 = vsyncpa [#allocation7], 0
    %s22 = scalar_lea.sflag [#allocation7], 1
    %23 = vsyncpa %s22, 0
    %24 = vsyncpa [#allocation10], 0
    %s25 = scalar_lea.sflag [#allocation10], 1
    %26 = vsyncpa %s25, 0
    %27 = vsyncpa [#allocation13], 0
    %s28 = scalar_lea.sflag [#allocation13], 1
    %29 = vsyncpa %s28, 0
    %30 = vsyncpa [#allocation16], 0
    %31 = vsyncpa [#allocation5], 0
    loop: start=0, step=1, limit=8
    $region2: #{classifier3_forward.1} parent=1 // loop_pre_header
      _
    $region3: #{classifier3_forward.1} parent=1 // loop_header
      %s33 = sphi 0, %s37
      %p34 = scmp.ge.s32.totalorder %s33, 8
      %s41 = sphi 0, %s41
      %s43 = sphi 0, %s41
      %s44 = sphi 0, %s43
      %s58 = sphi 0, %s44
      %s64 = sphi 0, %s66
      %s67 = sphi 0, %s64
      %s68 = sphi 0, %s67
      %s84 = sphi 0, %s68
      %s90 = sphi 0, %s92
      %s93 = sphi 0, %s90
      %s94 = sphi 0, %s93
      %s110 = sphi 0, %s94
      %s116 = sphi 0, %s118
      %s119 = sphi 0, %s116
      %s120 = sphi 0, %s119
      %s136 = sphi 0, %s120
      %s142 = sphi 0, %s144
      %s145 = sphi 0, %s142
      %s146 = sphi 0, %s145
      %s162 = sphi 0, %s146
      %s168 = sphi 0, %s170
      %s171 = sphi 0, %s168
      %s172 = sphi 0, %s171
      %s188 = sphi 0, %s172
      %s194 = sphi 0, %s196
      %s197 = sphi 0, %s194
      %s198 = sphi 0, %s197
      %s214 = sphi 0, %s198
      %s220 = sphi 0, %s222
      %s223 = sphi 0, %s220
      %s224 = sphi 0, %s223
      %s240 = sphi 0, %s224
      %s246 = sphi 0, %s248
      %s249 = sphi 0, %s246
      %s250 = sphi 0, %s249
      %s266 = sphi 0, %s250
      %s272 = sphi 0, %s274
      %s275 = sphi 0, %s272
      %s276 = sphi 0, %s275
      %s292 = sphi 0, %s276
      %s298 = sphi 0, %s300
      %s301 = sphi 0, %s298
      %s302 = sphi 0, %s301
      %s318 = sphi 0, %s302
      %s324 = sphi 0, %s326
      %s327 = sphi 0, %s324
      %s328 = sphi 0, %s327
      %s344 = sphi 0, %s328
      %s350 = sphi 0, %s352
      %s353 = sphi 0, %s350
      %s354 = sphi 0, %s353
      %s370 = sphi 0, %s354
      %s374 = sphi 0, %s374
      %s376 = sphi 0, %s374
      %s377 = sphi 0, %s376
      %s391 = sphi 0, %s377
      %s395 = sphi 0, %s395
      %s397 = sphi 0, %s395
      %s398 = sphi 0, %s397
      %s412 = sphi 0, %s398
      %s416 = sphi 0, %s416
      %s418 = sphi 0, %s416
      %s419 = sphi 0, %s418
      %s433 = sphi 0, %s419
    $region4: #{classifier3_forward.1} parent=1 // loop_header_branch
      %36 = sbr.rel (%p34) target = $region8
    $region5: #{classifier3_forward.1} parent=1 // loop_body
      %s38 = ssub.s32 %s33, 1
      %s39 = ssub.s32 %s33, 2
      %s40 = sadd.s32 %s33, 1
      %s42 = sadd.s32 %s41, 1
      %p45 = scmp.eq.s32.totalorder %s33, 5
      %p46 = scmp.ne.s32.totalorder %s41, %s43
      %p47 = scmp.eq.s32.totalorder %s33, 0
      %p48 = por %p46, %p47
      %p49 = scmp.ne.s32.totalorder %s41, %s43
      %p50 = scmp.eq.s32.totalorder %s38, 5
      %p51 = por %p49, %p50
      %p52 = scmp.ne.s32.totalorder %s43, %s44
      %p53 = scmp.eq.s32.totalorder %s38, 0
      %p54 = por %p52, %p53
      %p55 = scmp.ne.s32.totalorder %s43, %s44
      %p56 = scmp.eq.s32.totalorder %s39, 5
      %p57 = por %p55, %p56
      %p59 = scmp.ne.s32.totalorder %s44, %s58
      %p60 = scmp.eq.s32.totalorder %s39, 0
      %p61 = por %p59, %p60
      %s62 = ssub.s32 %s33, %s40
      %p63 = scmp.eq.s32.totalorder %s62, 0
      %s65 = sadd.s32 %s64, 1
      %s66 = scalar_select %p63, %s64, %s65
      %p69 = pneg %p63
      %p70 = scmp.eq.s32.totalorder %s33, 5
      %p71 = por %p69, %p70
      %p72 = scmp.ne.s32.totalorder %s64, %s67
      %p73 = scmp.eq.s32.totalorder %s33, 0
      %p74 = por %p72, %p73
      %p75 = scmp.ne.s32.totalorder %s64, %s67
      %p76 = scmp.eq.s32.totalorder %s38, 5
      %p77 = por %p75, %p76
      %p78 = scmp.ne.s32.totalorder %s67, %s68
      %p79 = scmp.eq.s32.totalorder %s38, 0
      %p80 = por %p78, %p79
      %p81 = scmp.ne.s32.totalorder %s67, %s68
      %p82 = scmp.eq.s32.totalorder %s39, 5
      %p83 = por %p81, %p82
      %p85 = scmp.ne.s32.totalorder %s68, %s84
      %p86 = scmp.eq.s32.totalorder %s39, 0
      %p87 = por %p85, %p86
      %s88 = ssub.s32 %s33, %s40
      %p89 = scmp.eq.s32.totalorder %s88, 0
      %s91 = sadd.s32 %s90, 1
      %s92 = scalar_select %p89, %s90, %s91
      %p95 = pneg %p89
      %p96 = scmp.eq.s32.totalorder %s33, 5
      %p97 = por %p95, %p96
      %p98 = scmp.ne.s32.totalorder %s90, %s93
      %p99 = scmp.eq.s32.totalorder %s33, 0
      %p100 = por %p98, %p99
      %p101 = scmp.ne.s32.totalorder %s90, %s93
      %p102 = scmp.eq.s32.totalorder %s38, 5
      %p103 = por %p101, %p102
      %p104 = scmp.ne.s32.totalorder %s93, %s94
      %p105 = scmp.eq.s32.totalorder %s38, 0
      %p106 = por %p104, %p105
      %p107 = scmp.ne.s32.totalorder %s93, %s94
      %p108 = scmp.eq.s32.totalorder %s39, 5
      %p109 = por %p107, %p108
      %p111 = scmp.ne.s32.totalorder %s94, %s110
      %p112 = scmp.eq.s32.totalorder %s39, 0
      %p113 = por %p111, %p112
      %s114 = ssub.s32 %s33, %s40
      %p115 = scmp.eq.s32.totalorder %s114, 0
      %s117 = sadd.s32 %s116, 1
      %s118 = scalar_select %p115, %s116, %s117
      %p121 = pneg %p115
      %p122 = scmp.eq.s32.totalorder %s33, 5
      %p123 = por %p121, %p122
      %p124 = scmp.ne.s32.totalorder %s116, %s119
      %p125 = scmp.eq.s32.totalorder %s33, 0
      %p126 = por %p124, %p125
      %p127 = scmp.ne.s32.totalorder %s116, %s119
      %p128 = scmp.eq.s32.totalorder %s38, 5
      %p129 = por %p127, %p128
      %p130 = scmp.ne.s32.totalorder %s119, %s120
      %p131 = scmp.eq.s32.totalorder %s38, 0
      %p132 = por %p130, %p131
      %p133 = scmp.ne.s32.totalorder %s119, %s120
      %p134 = scmp.eq.s32.totalorder %s39, 5
      %p135 = por %p133, %p134
      %p137 = scmp.ne.s32.totalorder %s120, %s136
      %p138 = scmp.eq.s32.totalorder %s39, 0
      %p139 = por %p137, %p138
      %s140 = ssub.s32 %s33, %s40
      %p141 = scmp.eq.s32.totalorder %s140, 0
      %s143 = sadd.s32 %s142, 1
      %s144 = scalar_select %p141, %s142, %s143
      %p147 = pneg %p141
      %p148 = scmp.eq.s32.totalorder %s33, 5
      %p149 = por %p147, %p148
      %p150 = scmp.ne.s32.totalorder %s142, %s145
      %p151 = scmp.eq.s32.totalorder %s33, 0
      %p152 = por %p150, %p151
      %p153 = scmp.ne.s32.totalorder %s142, %s145
      %p154 = scmp.eq.s32.totalorder %s38, 5
      %p155 = por %p153, %p154
      %p156 = scmp.ne.s32.totalorder %s145, %s146
      %p157 = scmp.eq.s32.totalorder %s38, 0
      %p158 = por %p156, %p157
      %p159 = scmp.ne.s32.totalorder %s145, %s146
      %p160 = scmp.eq.s32.totalorder %s39, 5
      %p161 = por %p159, %p160
      %p163 = scmp.ne.s32.totalorder %s146, %s162
      %p164 = scmp.eq.s32.totalorder %s39, 0
      %p165 = por %p163, %p164
      %s166 = ssub.s32 %s33, %s40
      %p167 = scmp.eq.s32.totalorder %s166, 0
      %s169 = sadd.s32 %s168, 1
      %s170 = scalar_select %p167, %s168, %s169
      %p173 = pneg %p167
      %p174 = scmp.eq.s32.totalorder %s33, 5
      %p175 = por %p173, %p174
      %p176 = scmp.ne.s32.totalorder %s168, %s171
      %p177 = scmp.eq.s32.totalorder %s33, 0
      %p178 = por %p176, %p177
      %p179 = scmp.ne.s32.totalorder %s168, %s171
      %p180 = scmp.eq.s32.totalorder %s38, 5
      %p181 = por %p179, %p180
      %p182 = scmp.ne.s32.totalorder %s171, %s172
      %p183 = scmp.eq.s32.totalorder %s38, 0
      %p184 = por %p182, %p183
      %p185 = scmp.ne.s32.totalorder %s171, %s172
      %p186 = scmp.eq.s32.totalorder %s39, 5
      %p187 = por %p185, %p186
      %p189 = scmp.ne.s32.totalorder %s172, %s188
      %p190 = scmp.eq.s32.totalorder %s39, 0
      %p191 = por %p189, %p190
      %s192 = ssub.s32 %s33, %s40
      %p193 = scmp.eq.s32.totalorder %s192, 0
      %s195 = sadd.s32 %s194, 1
      %s196 = scalar_select %p193, %s194, %s195
      %p199 = pneg %p193
      %p200 = scmp.eq.s32.totalorder %s33, 5
      %p201 = por %p199, %p200
      %p202 = scmp.ne.s32.totalorder %s194, %s197
      %p203 = scmp.eq.s32.totalorder %s33, 0
      %p204 = por %p202, %p203
      %p205 = scmp.ne.s32.totalorder %s194, %s197
      %p206 = scmp.eq.s32.totalorder %s38, 5
      %p207 = por %p205, %p206
      %p208 = scmp.ne.s32.totalorder %s197, %s198
      %p209 = scmp.eq.s32.totalorder %s38, 0
      %p210 = por %p208, %p209
      %p211 = scmp.ne.s32.totalorder %s197, %s198
      %p212 = scmp.eq.s32.totalorder %s39, 5
      %p213 = por %p211, %p212
      %p215 = scmp.ne.s32.totalorder %s198, %s214
      %p216 = scmp.eq.s32.totalorder %s39, 0
      %p217 = por %p215, %p216
      %s218 = ssub.s32 %s33, %s40
      %p219 = scmp.eq.s32.totalorder %s218, 0
      %s221 = sadd.s32 %s220, 1
      %s222 = scalar_select %p219, %s220, %s221
      %p225 = pneg %p219
      %p226 = scmp.eq.s32.totalorder %s33, 5
      %p227 = por %p225, %p226
      %p228 = scmp.ne.s32.totalorder %s220, %s223
      %p229 = scmp.eq.s32.totalorder %s33, 0
      %p230 = por %p228, %p229
      %p231 = scmp.ne.s32.totalorder %s220, %s223
      %p232 = scmp.eq.s32.totalorder %s38, 5
      %p233 = por %p231, %p232
      %p234 = scmp.ne.s32.totalorder %s223, %s224
      %p235 = scmp.eq.s32.totalorder %s38, 0
      %p236 = por %p234, %p235
      %p237 = scmp.ne.s32.totalorder %s223, %s224
      %p238 = scmp.eq.s32.totalorder %s39, 5
      %p239 = por %p237, %p238
      %p241 = scmp.ne.s32.totalorder %s224, %s240
      %p242 = scmp.eq.s32.totalorder %s39, 0
      %p243 = por %p241, %p242
      %s244 = ssub.s32 %s33, %s40
      %p245 = scmp.eq.s32.totalorder %s244, 0
      %s247 = sadd.s32 %s246, 1
      %s248 = scalar_select %p245, %s246, %s247
      %p251 = pneg %p245
      %p252 = scmp.eq.s32.totalorder %s33, 5
      %p253 = por %p251, %p252
      %p254 = scmp.ne.s32.totalorder %s246, %s249
      %p255 = scmp.eq.s32.totalorder %s33, 0
      %p256 = por %p254, %p255
      %p257 = scmp.ne.s32.totalorder %s246, %s249
      %p258 = scmp.eq.s32.totalorder %s38, 5
      %p259 = por %p257, %p258
      %p260 = scmp.ne.s32.totalorder %s249, %s250
      %p261 = scmp.eq.s32.totalorder %s38, 0
      %p262 = por %p260, %p261
      %p263 = scmp.ne.s32.totalorder %s249, %s250
      %p264 = scmp.eq.s32.totalorder %s39, 5
      %p265 = por %p263, %p264
      %p267 = scmp.ne.s32.totalorder %s250, %s266
      %p268 = scmp.eq.s32.totalorder %s39, 0
      %p269 = por %p267, %p268
      %s270 = ssub.s32 %s33, %s40
      %p271 = scmp.eq.s32.totalorder %s270, 0
      %s273 = sadd.s32 %s272, 1
      %s274 = scalar_select %p271, %s272, %s273
      %p277 = pneg %p271
      %p278 = scmp.eq.s32.totalorder %s33, 5
      %p279 = por %p277, %p278
      %p280 = scmp.ne.s32.totalorder %s272, %s275
      %p281 = scmp.eq.s32.totalorder %s33, 0
      %p282 = por %p280, %p281
      %p283 = scmp.ne.s32.totalorder %s272, %s275
      %p284 = scmp.eq.s32.totalorder %s38, 5
      %p285 = por %p283, %p284
      %p286 = scmp.ne.s32.totalorder %s275, %s276
      %p287 = scmp.eq.s32.totalorder %s38, 0
      %p288 = por %p286, %p287
      %p289 = scmp.ne.s32.totalorder %s275, %s276
      %p290 = scmp.eq.s32.totalorder %s39, 5
      %p291 = por %p289, %p290
      %p293 = scmp.ne.s32.totalorder %s276, %s292
      %p294 = scmp.eq.s32.totalorder %s39, 0
      %p295 = por %p293, %p294
      %s296 = ssub.s32 %s33, %s40
      %p297 = scmp.eq.s32.totalorder %s296, 0
      %s299 = sadd.s32 %s298, 1
      %s300 = scalar_select %p297, %s298, %s299
      %p303 = pneg %p297
      %p304 = scmp.eq.s32.totalorder %s33, 5
      %p305 = por %p303, %p304
      %p306 = scmp.ne.s32.totalorder %s298, %s301
      %p307 = scmp.eq.s32.totalorder %s33, 0
      %p308 = por %p306, %p307
      %p309 = scmp.ne.s32.totalorder %s298, %s301
      %p310 = scmp.eq.s32.totalorder %s38, 5
      %p311 = por %p309, %p310
      %p312 = scmp.ne.s32.totalorder %s301, %s302
      %p313 = scmp.eq.s32.totalorder %s38, 0
      %p314 = por %p312, %p313
      %p315 = scmp.ne.s32.totalorder %s301, %s302
      %p316 = scmp.eq.s32.totalorder %s39, 5
      %p317 = por %p315, %p316
      %p319 = scmp.ne.s32.totalorder %s302, %s318
      %p320 = scmp.eq.s32.totalorder %s39, 0
      %p321 = por %p319, %p320
      %s322 = ssub.s32 %s33, %s40
      %p323 = scmp.eq.s32.totalorder %s322, 0
      %s325 = sadd.s32 %s324, 1
      %s326 = scalar_select %p323, %s324, %s325
      %p329 = pneg %p323
      %p330 = scmp.eq.s32.totalorder %s33, 5
      %p331 = por %p329, %p330
      %p332 = scmp.ne.s32.totalorder %s324, %s327
      %p333 = scmp.eq.s32.totalorder %s33, 0
      %p334 = por %p332, %p333
      %p335 = scmp.ne.s32.totalorder %s324, %s327
      %p336 = scmp.eq.s32.totalorder %s38, 5
      %p337 = por %p335, %p336
      %p338 = scmp.ne.s32.totalorder %s327, %s328
      %p339 = scmp.eq.s32.totalorder %s38, 0
      %p340 = por %p338, %p339
      %p341 = scmp.ne.s32.totalorder %s327, %s328
      %p342 = scmp.eq.s32.totalorder %s39, 5
      %p343 = por %p341, %p342
      %p345 = scmp.ne.s32.totalorder %s328, %s344
      %p346 = scmp.eq.s32.totalorder %s39, 0
      %p347 = por %p345, %p346
      %s348 = ssub.s32 %s33, %s40
      %p349 = scmp.eq.s32.totalorder %s348, 0
      %s351 = sadd.s32 %s350, 1
      %s352 = scalar_select %p349, %s350, %s351
      %p355 = pneg %p349
      %p356 = scmp.eq.s32.totalorder %s33, 5
      %p357 = por %p355, %p356
      %p358 = scmp.ne.s32.totalorder %s350, %s353
      %p359 = scmp.eq.s32.totalorder %s33, 0
      %p360 = por %p358, %p359
      %p361 = scmp.ne.s32.totalorder %s350, %s353
      %p362 = scmp.eq.s32.totalorder %s38, 5
      %p363 = por %p361, %p362
      %p364 = scmp.ne.s32.totalorder %s353, %s354
      %p365 = scmp.eq.s32.totalorder %s38, 0
      %p366 = por %p364, %p365
      %p367 = scmp.ne.s32.totalorder %s353, %s354
      %p368 = scmp.eq.s32.totalorder %s39, 5
      %p369 = por %p367, %p368
      %p371 = scmp.ne.s32.totalorder %s354, %s370
      %p372 = scmp.eq.s32.totalorder %s39, 0
      %p373 = por %p371, %p372
      %s375 = sadd.s32 %s374, 1
      %p378 = scmp.eq.s32.totalorder %s33, 5
      %p379 = scmp.ne.s32.totalorder %s374, %s376
      %p380 = scmp.eq.s32.totalorder %s33, 0
      %p381 = por %p379, %p380
      %p382 = scmp.ne.s32.totalorder %s374, %s376
      %p383 = scmp.eq.s32.totalorder %s38, 5
      %p384 = por %p382, %p383
      %p385 = scmp.ne.s32.totalorder %s376, %s377
      %p386 = scmp.eq.s32.totalorder %s38, 0
      %p387 = por %p385, %p386
      %p388 = scmp.ne.s32.totalorder %s376, %s377
      %p389 = scmp.eq.s32.totalorder %s39, 5
      %p390 = por %p388, %p389
      %p392 = scmp.ne.s32.totalorder %s377, %s391
      %p393 = scmp.eq.s32.totalorder %s39, 0
      %p394 = por %p392, %p393
      %s396 = sadd.s32 %s395, 1
      %p399 = scmp.eq.s32.totalorder %s33, 5
      %p400 = scmp.ne.s32.totalorder %s395, %s397
      %p401 = scmp.eq.s32.totalorder %s33, 0
      %p402 = por %p400, %p401
      %p403 = scmp.ne.s32.totalorder %s395, %s397
      %p404 = scmp.eq.s32.totalorder %s38, 5
      %p405 = por %p403, %p404
      %p406 = scmp.ne.s32.totalorder %s397, %s398
      %p407 = scmp.eq.s32.totalorder %s38, 0
      %p408 = por %p406, %p407
      %p409 = scmp.ne.s32.totalorder %s397, %s398
      %p410 = scmp.eq.s32.totalorder %s39, 5
      %p411 = por %p409, %p410
      %p413 = scmp.ne.s32.totalorder %s398, %s412
      %p414 = scmp.eq.s32.totalorder %s39, 0
      %p415 = por %p413, %p414
      %s417 = sadd.s32 %s416, 1
      %p420 = scmp.eq.s32.totalorder %s33, 5
      %p421 = scmp.ne.s32.totalorder %s416, %s418
      %p422 = scmp.eq.s32.totalorder %s33, 0
      %p423 = por %p421, %p422
      %p424 = scmp.ne.s32.totalorder %s416, %s418
      %p425 = scmp.eq.s32.totalorder %s38, 5
      %p426 = por %p424, %p425
      %p427 = scmp.ne.s32.totalorder %s418, %s419
      %p428 = scmp.eq.s32.totalorder %s38, 0
      %p429 = por %p427, %p428
      %p430 = scmp.ne.s32.totalorder %s418, %s419
      %p431 = scmp.eq.s32.totalorder %s39, 5
      %p432 = por %p430, %p431
      %p434 = scmp.ne.s32.totalorder %s419, %s433
      %p435 = scmp.eq.s32.totalorder %s39, 0
      %p436 = por %p434, %p435
      %p437 = scmp.le.s32.totalorder 1, %s33
      %p438 = scmp.lt.s32.totalorder %s33, 7
      %p439 = pnand %p437, %p438
      %p440 = pneg %p439
      // Predicated region
      $region9: #{classifier3_forward.1} parent=5 // pred_check
        _
      $region10: #{classifier3_forward.1} parent=5 // pred_check_branch
        %442 = sbr.rel (%p439) target = $region12
      $region11: #{classifier3_forward.1} parent=5 // pred_region
        %s443 = ssub.s32 %s33, 1
        // Predicated region
        $region13: #{classifier3_forward.1} parent=11 // pred_check
          %p444 = pneg %p54
        $region14: #{classifier3_forward.1} parent=11 // pred_check_branch
          %446 = sbr.rel (%p444) target = $region16
        $region15: #{classifier3_forward.1} parent=11 // pred_region
          %s448 = ssub.s32 256, 256
          %449 = vsyncadd [#allocation4], %s448
          %s450 = sshll.u32 [#allocation3], 4
          %s451 = int_to_ptr.vmem [resolvable:$true] %s450
          %456 = dma.hbm_to_vmem [thread:$0]  %s0, 256, %s451, [#allocation4], 128, 128, 8
        $region16: #{classifier3_forward.1} parent=11 // pred_fallthru
          _
        // Predicated region
        $region17: #{classifier3_forward.1} parent=11 // pred_check
          %p457 = pneg %p387
        $region18: #{classifier3_forward.1} parent=11 // pred_check_branch
          %459 = sbr.rel (%p457) target = $region20
        $region19: #{classifier3_forward.1} parent=11 // pred_region
          %s461 = ssub.s32 1024, 1024
          %462 = vsyncadd [#allocation16], %s461
          %s463 = sshll.u32 [#allocation15], 4
          %s464 = int_to_ptr.vmem [resolvable:$true] %s463
          %469 = dma.hbm_to_vmem [thread:$0]  %s13, 1024, %s464, [#allocation16], 64, 64, 4
        $region20: #{classifier3_forward.1} parent=11 // pred_fallthru
          _
        // Predicated region
        $region21: #{classifier3_forward.1} parent=11 // pred_check
          %p470 = pneg %p408
        $region22: #{classifier3_forward.1} parent=11 // pred_check_branch
          %472 = sbr.rel (%p470) target = $region24
        $region23: #{classifier3_forward.1} parent=11 // pred_region
          _
        $region24: #{classifier3_forward.1} parent=11 // pred_fallthru
          _
      $region12: #{classifier3_forward.1} parent=5 // pred_fallthru
        _
      %p473 = scmp.lt.s32.totalorder %s33, 6
      // Predicated region
      $region25: #{classifier3_forward.1} parent=5 // pred_check
        %p474 = pneg %p473
      $region26: #{classifier3_forward.1} parent=5 // pred_check_branch
        %476 = sbr.rel (%p474) target = $region28
      $region27: #{classifier3_forward.1} parent=5 // pred_region
        // Predicated region
        $region29: #{classifier3_forward.1} parent=27 // pred_check
          %p477 = pneg %p74
        $region30: #{classifier3_forward.1} parent=27 // pred_check_branch
          %479 = sbr.rel (%p477) target = $region32
        $region31: #{classifier3_forward.1} parent=27 // pred_region
          %s480 = sand.u32 %s33, 1
          %s481 = scalar_lea.sflag [#allocation7], %s480
          %s482 = sand.u32 %s64, 1
          %s483 = smul.addr %s482, 192
          %s484 = scalar_lea.vmem [#allocation6], %s483
          %s486 = ssub.s32 3072, 3072
          %487 = vsyncadd %s481, %s486
          %s488 = smul.addr %s33, 48
          %s489 = smul.addr %s488, 64
          %s490 = scalar_lea.hbm %s1, %s489
          %s491 = sshll.u32 %s484, 4
          %s492 = int_to_ptr.vmem [resolvable:$true] %s491
          %497 = dma.hbm_to_vmem [thread:$0]  %s490, 3072, %s492, %s481, 192, 192, 12
        $region32: #{classifier3_forward.1} parent=27 // pred_fallthru
          _
        // Predicated region
        $region33: #{classifier3_forward.1} parent=27 // pred_check
          %p498 = pneg %p100
        $region34: #{classifier3_forward.1} parent=27 // pred_check_branch
          %500 = sbr.rel (%p498) target = $region36
        $region35: #{classifier3_forward.1} parent=27 // pred_region
          %s501 = sand.u32 %s33, 1
          %s502 = scalar_lea.sflag [#allocation7], %s501
          %s503 = sand.u32 %s90, 1
          %s504 = smul.addr %s503, 3
          %s505 = scalar_lea.vmem [#allocation8], %s504
          %s507 = ssub.s32 48, 48
          %508 = vsyncadd %s502, %s507
          %s509 = smul.addr %s33, 3
          %s510 = smul.addr %s509, 16
          %s511 = scalar_lea.hbm %s2, %s510
          %s513 = sshll.u32 %s505, 4
          %s514 = int_to_ptr.vmem [resolvable:$true] %s513
          %516 = dma.hbm_to_vmem [thread:$0]  %s511, 48, %s514, %s502
        $region36: #{classifier3_forward.1} parent=27 // pred_fallthru
          _
        // Predicated region
        $region37: #{classifier3_forward.1} parent=27 // pred_check
          %p517 = pneg %p126
        $region38: #{classifier3_forward.1} parent=27 // pred_check_branch
          %519 = sbr.rel (%p517) target = $region40
        $region39: #{classifier3_forward.1} parent=27 // pred_region
          %s520 = sand.u32 %s33, 1
          %s521 = scalar_lea.sflag [#allocation10], %s520
          %s522 = sand.u32 %s116, 1
          %s523 = smul.addr %s522, 64
          %s524 = scalar_lea.vmem [#allocation9], %s523
          %s526 = ssub.s32 1024, 1024
          %527 = vsyncadd %s521, %s526
          %s528 = smul.addr %s33, 16
          %s529 = smul.addr %s528, 64
          %s530 = scalar_lea.hbm %s3, %s529
          %s531 = sshll.u32 %s524, 4
          %s532 = int_to_ptr.vmem [resolvable:$true] %s531
          %537 = dma.hbm_to_vmem [thread:$0]  %s530, 1024, %s532, %s521, 64, 64, 4
        $region40: #{classifier3_forward.1} parent=27 // pred_fallthru
          _
        // Predicated region
        $region41: #{classifier3_forward.1} parent=27 // pred_check
          %p538 = pneg %p152
        $region42: #{classifier3_forward.1} parent=27 // pred_check_branch
          %540 = sbr.rel (%p538) target = $region44
        $region43: #{classifier3_forward.1} parent=27 // pred_region
          %p541 = scmp.lt.s32.totalorder %s33, 5
          %s542 = scalar_select %p541, %s33, 5
          %s543 = scalar_lea.vmem %s4, %s542
        $region44: #{classifier3_forward.1} parent=27 // pred_fallthru
          _
        // Predicated region
        $region45: #{classifier3_forward.1} parent=27 // pred_check
          %p544 = pneg %p178
        $region46: #{classifier3_forward.1} parent=27 // pred_check_branch
          %546 = sbr.rel (%p544) target = $region48
        $region47: #{classifier3_forward.1} parent=27 // pred_region
          %s547 = sand.u32 %s33, 1
          %s548 = scalar_lea.sflag [#allocation10], %s547
          %s549 = sand.u32 %s168, 1
          %s550 = smul.addr %s549, 128
          %s551 = scalar_lea.vmem [#allocation11], %s550
          %s553 = ssub.s32 2048, 2048
          %554 = vsyncadd %s548, %s553
          %s555 = smul.addr %s33, 32
          %s556 = smul.addr %s555, 64
          %s557 = scalar_lea.hbm %s5, %s556
          %s558 = sshll.u32 %s551, 4
          %s559 = int_to_ptr.vmem [resolvable:$true] %s558
          %564 = dma.hbm_to_vmem [thread:$0]  %s557, 2048, %s559, %s548, 128, 128, 8
        $region48: #{classifier3_forward.1} parent=27 // pred_fallthru
          _
        // Predicated region
        $region49: #{classifier3_forward.1} parent=27 // pred_check
          %p565 = pneg %p204
        $region50: #{classifier3_forward.1} parent=27 // pred_check_branch
          %567 = sbr.rel (%p565) target = $region52
        $region51: #{classifier3_forward.1} parent=27 // pred_region
          %p568 = scmp.lt.s32.totalorder %s33, 5
          %s569 = scalar_select %p568, %s33, 5
          %s570 = smul.addr %s569, 2
          %s571 = scalar_lea.vmem %s6, %s570
        $region52: #{classifier3_forward.1} parent=27 // pred_fallthru
          _
        // Predicated region
        $region53: #{classifier3_forward.1} parent=27 // pred_check
          %p572 = pneg %p230
        $region54: #{classifier3_forward.1} parent=27 // pred_check_branch
          %574 = sbr.rel (%p572) target = $region56
        $region55: #{classifier3_forward.1} parent=27 // pred_region
          %s575 = sand.u32 %s33, 1
          %s576 = scalar_lea.sflag [#allocation13], %s575
          %s577 = sand.u32 %s220, 1
          %s578 = smul.addr %s577, 128
          %s579 = scalar_lea.vmem [#allocation12], %s578
          %s581 = ssub.s32 2048, 2048
          %582 = vsyncadd %s576, %s581
          %s583 = smul.addr %s33, 32
          %s584 = smul.addr %s583, 64
          %s585 = scalar_lea.hbm %s7, %s584
          %s586 = sshll.u32 %s579, 4
          %s587 = int_to_ptr.vmem [resolvable:$true] %s586
          %592 = dma.hbm_to_vmem [thread:$0]  %s585, 2048, %s587, %s576, 64, 64, 4
        $region56: #{classifier3_forward.1} parent=27 // pred_fallthru
          _
        // Predicated region
        $region57: #{classifier3_forward.1} parent=27 // pred_check
          %p593 = pneg %p256
        $region58: #{classifier3_forward.1} parent=27 // pred_check_branch
          %595 = sbr.rel (%p593) target = $region60
        $region59: #{classifier3_forward.1} parent=27 // pred_region
          %p596 = scmp.lt.s32.totalorder %s33, 5
          %s597 = scalar_select %p596, %s33, 5
          %s598 = scalar_lea.vmem %s8, %s597
        $region60: #{classifier3_forward.1} parent=27 // pred_fallthru
          _
        // Predicated region
        $region61: #{classifier3_forward.1} parent=27 // pred_check
          %p599 = pneg %p282
        $region62: #{classifier3_forward.1} parent=27 // pred_check_branch
          %601 = sbr.rel (%p599) target = $region64
        $region63: #{classifier3_forward.1} parent=27 // pred_region
          %p602 = scmp.lt.s32.totalorder %s33, 5
          %s603 = scalar_select %p602, %s33, 5
          %s604 = scalar_lea.vmem %s9, %s603
        $region64: #{classifier3_forward.1} parent=27 // pred_fallthru
          _
        // Predicated region
        $region65: #{classifier3_forward.1} parent=27 // pred_check
          %p605 = pneg %p308
        $region66: #{classifier3_forward.1} parent=27 // pred_check_branch
          %607 = sbr.rel (%p605) target = $region68
        $region67: #{classifier3_forward.1} parent=27 // pred_region
          %p608 = scmp.lt.s32.totalorder %s33, 5
          %s609 = scalar_select %p608, %s33, 5
          %s610 = scalar_lea.vmem %s10, %s609
        $region68: #{classifier3_forward.1} parent=27 // pred_fallthru
          _
        // Predicated region
        $region69: #{classifier3_forward.1} parent=27 // pred_check
          %p611 = pneg %p334
        $region70: #{classifier3_forward.1} parent=27 // pred_check_branch
          %613 = sbr.rel (%p611) target = $region72
        $region71: #{classifier3_forward.1} parent=27 // pred_region
          %s614 = sand.u32 %s33, 1
          %s615 = scalar_lea.sflag [#allocation13], %s614
          %s616 = sand.u32 %s324, 1
          %s617 = scalar_lea.vmem [#allocation14], %s616
          %s619 = ssub.s32 16, 16
          %620 = vsyncadd %s615, %s619
          %s621 = smul.addr %s33, 16
          %s622 = scalar_lea.hbm %s11, %s621
          %s624 = sshll.u32 %s617, 4
          %s625 = int_to_ptr.vmem [resolvable:$true] %s624
          %627 = dma.hbm_to_vmem [thread:$0]  %s622, 16, %s625, %s615
        $region72: #{classifier3_forward.1} parent=27 // pred_fallthru
          _
        // Predicated region
        $region73: #{classifier3_forward.1} parent=27 // pred_check
          %p628 = pneg %p360
        $region74: #{classifier3_forward.1} parent=27 // pred_check_branch
          %630 = sbr.rel (%p628) target = $region76
        $region75: #{classifier3_forward.1} parent=27 // pred_region
          %p631 = scmp.lt.s32.totalorder %s33, 5
          %s632 = scalar_select %p631, %s33, 5
          %s633 = scalar_lea.vmem %s12, %s632
        $region76: #{classifier3_forward.1} parent=27 // pred_fallthru
          _
      $region28: #{classifier3_forward.1} parent=5 // pred_fallthru
        _
      %p634 = scmp.le.s32.totalorder 1, %s33
      %p635 = scmp.lt.s32.totalorder %s33, 7
      %p636 = pnand %p634, %p635
      %p637 = pneg %p636
      // Predicated region
      $region77: #{classifier3_forward.1} parent=5 // pred_check
        _
      $region78: #{classifier3_forward.1} parent=5 // pred_check_branch
        %639 = sbr.rel (%p636) target = $region80
      $region79: #{classifier3_forward.1} parent=5 // pred_region
        %s640 = ssub.s32 %s33, 1
        // Predicated region
        $region81: #{classifier3_forward.1} parent=79 // pred_check
          %p641 = pneg %p54
        $region82: #{classifier3_forward.1} parent=79 // pred_check_branch
          %643 = sbr.rel (%p641) target = $region84
        $region83: #{classifier3_forward.1} parent=79 // pred_region
          %644 = dma.done [#allocation4], 256
        $region84: #{classifier3_forward.1} parent=79 // pred_fallthru
          _
        %s645 = sand.u32 %s38, 1
        %s646 = scalar_lea.sflag [#allocation7], %s645
        %s647 = sand.u32 %s67, 1
        %s648 = smul.addr %s647, 192
        %s649 = scalar_lea.vmem [#allocation6], %s648
        // Predicated region
        $region85: #{classifier3_forward.1} parent=79 // pred_check
          %p650 = pneg %p80
        $region86: #{classifier3_forward.1} parent=79 // pred_check_branch
          %652 = sbr.rel (%p650) target = $region88
        $region87: #{classifier3_forward.1} parent=79 // pred_region
          %653 = dma.done %s646, 3072
        $region88: #{classifier3_forward.1} parent=79 // pred_fallthru
          _
        %s654 = sand.u32 %s38, 1
        %s655 = scalar_lea.sflag [#allocation7], %s654
        %s656 = sand.u32 %s93, 1
        %s657 = smul.addr %s656, 3
        %s658 = scalar_lea.vmem [#allocation8], %s657
        // Predicated region
        $region89: #{classifier3_forward.1} parent=79 // pred_check
          %p659 = pneg %p106
        $region90: #{classifier3_forward.1} parent=79 // pred_check_branch
          %661 = sbr.rel (%p659) target = $region92
        $region91: #{classifier3_forward.1} parent=79 // pred_region
          %662 = dma.done %s655, 48
        $region92: #{classifier3_forward.1} parent=79 // pred_fallthru
          _
        %s663 = sand.u32 %s38, 1
        %s664 = scalar_lea.sflag [#allocation10], %s663
        %s665 = sand.u32 %s119, 1
        %s666 = smul.addr %s665, 64
        %s667 = scalar_lea.vmem [#allocation9], %s666
        // Predicated region
        $region93: #{classifier3_forward.1} parent=79 // pred_check
          %p668 = pneg %p132
        $region94: #{classifier3_forward.1} parent=79 // pred_check_branch
          %670 = sbr.rel (%p668) target = $region96
        $region95: #{classifier3_forward.1} parent=79 // pred_region
          %671 = dma.done %s664, 1024
        $region96: #{classifier3_forward.1} parent=79 // pred_fallthru
          _
        %s672 = sand.u32 %s38, 1
        %s673 = scalar_lea.sflag [#allocation10], %s672
        %s674 = sand.u32 %s171, 1
        %s675 = smul.addr %s674, 128
        %s676 = scalar_lea.vmem [#allocation11], %s675
        // Predicated region
        $region97: #{classifier3_forward.1} parent=79 // pred_check
          %p677 = pneg %p184
        $region98: #{classifier3_forward.1} parent=79 // pred_check_branch
          %679 = sbr.rel (%p677) target = $region100
        $region99: #{classifier3_forward.1} parent=79 // pred_region
          %680 = dma.done %s673, 2048
        $region100: #{classifier3_forward.1} parent=79 // pred_fallthru
          _
        %s681 = sand.u32 %s38, 1
        %s682 = scalar_lea.sflag [#allocation13], %s681
        %s683 = sand.u32 %s223, 1
        %s684 = smul.addr %s683, 128
        %s685 = scalar_lea.vmem [#allocation12], %s684
        // Predicated region
        $region101: #{classifier3_forward.1} parent=79 // pred_check
          %p686 = pneg %p236
        $region102: #{classifier3_forward.1} parent=79 // pred_check_branch
          %688 = sbr.rel (%p686) target = $region104
        $region103: #{classifier3_forward.1} parent=79 // pred_region
          %689 = dma.done %s682, 2048
        $region104: #{classifier3_forward.1} parent=79 // pred_fallthru
          _
        %s690 = sand.u32 %s38, 1
        %s691 = scalar_lea.sflag [#allocation13], %s690
        %s692 = sand.u32 %s327, 1
        %s693 = scalar_lea.vmem [#allocation14], %s692
        // Predicated region
        $region105: #{classifier3_forward.1} parent=79 // pred_check
          %p694 = pneg %p340
        $region106: #{classifier3_forward.1} parent=79 // pred_check_branch
          %696 = sbr.rel (%p694) target = $region108
        $region107: #{classifier3_forward.1} parent=79 // pred_region
          %697 = dma.done %s691, 16
        $region108: #{classifier3_forward.1} parent=79 // pred_fallthru
          _
        // Predicated region
        $region109: #{classifier3_forward.1} parent=79 // pred_check
          %p698 = pneg %p387
        $region110: #{classifier3_forward.1} parent=79 // pred_check_branch
          %700 = sbr.rel (%p698) target = $region112
        $region111: #{classifier3_forward.1} parent=79 // pred_region
          %701 = dma.done [#allocation16], 1024
        $region112: #{classifier3_forward.1} parent=79 // pred_fallthru
          _
        %p702 = pneg %p54
        %p703 = pneg %p51
        %s704 = sand.u32 %s38, 1
        %s705 = scalar_lea.sflag [#allocation7], %s704
        %s706 = sand.u32 %s67, 1
        %s707 = smul.addr %s706, 192
        %s708 = scalar_lea.vmem [#allocation6], %s707
        %p709 = pneg %p80
        %p710 = pneg %p77
        %s711 = sand.u32 %s38, 1
        %s712 = scalar_lea.sflag [#allocation7], %s711
        %s713 = sand.u32 %s93, 1
        %s714 = smul.addr %s713, 3
        %s715 = scalar_lea.vmem [#allocation8], %s714
        %p716 = pneg %p106
        %p717 = pneg %p103
        %s718 = sand.u32 %s38, 1
        %s719 = scalar_lea.sflag [#allocation10], %s718
        %s720 = sand.u32 %s119, 1
        %s721 = smul.addr %s720, 64
        %s722 = scalar_lea.vmem [#allocation9], %s721
        %p723 = pneg %p132
        %p724 = pneg %p129
        %p725 = scmp.lt.s32.totalorder %s38, 5
        %s726 = scalar_select %p725, %s38, 5
        %s727 = scalar_lea.vmem %s4, %s726
        %p728 = pneg %p158
        %p729 = pneg %p155
        %s730 = sand.u32 %s38, 1
        %s731 = scalar_lea.sflag [#allocation10], %s730
        %s732 = sand.u32 %s171, 1
        %s733 = smul.addr %s732, 128
        %s734 = scalar_lea.vmem [#allocation11], %s733
        %p735 = pneg %p184
        %p736 = pneg %p181
        %p737 = scmp.lt.s32.totalorder %s38, 5
        %s738 = scalar_select %p737, %s38, 5
        %s739 = smul.addr %s738, 2
        %s740 = scalar_lea.vmem %s6, %s739
        %p741 = pneg %p210
        %p742 = pneg %p207
        %s743 = sand.u32 %s38, 1
        %s744 = scalar_lea.sflag [#allocation13], %s743
        %s745 = sand.u32 %s223, 1
        %s746 = smul.addr %s745, 128
        %s747 = scalar_lea.vmem [#allocation12], %s746
        %p748 = pneg %p236
        %p749 = pneg %p233
        %p750 = scmp.lt.s32.totalorder %s38, 5
        %s751 = scalar_select %p750, %s38, 5
        %s752 = scalar_lea.vmem %s8, %s751
        %p753 = pneg %p262
        %p754 = pneg %p259
        %p755 = scmp.lt.s32.totalorder %s38, 5
        %s756 = scalar_select %p755, %s38, 5
        %s757 = scalar_lea.vmem %s9, %s756
        %p758 = pneg %p288
        %p759 = pneg %p285
        %p760 = scmp.lt.s32.totalorder %s38, 5
        %s761 = scalar_select %p760, %s38, 5
        %s762 = scalar_lea.vmem %s10, %s761
        %p763 = pneg %p314
        %p764 = pneg %p311
        %s765 = sand.u32 %s38, 1
        %s766 = scalar_lea.sflag [#allocation13], %s765
        %s767 = sand.u32 %s327, 1
        %s768 = scalar_lea.vmem [#allocation14], %s767
        %p769 = pneg %p340
        %p770 = pneg %p337
        %p771 = scmp.lt.s32.totalorder %s38, 5
        %s772 = scalar_select %p771, %s38, 5
        %s773 = scalar_lea.vmem %s12, %s772
        %p774 = pneg %p366
        %p775 = pneg %p363
        %p776 = pneg %p387
        %p777 = pneg %p384
        %p778 = pneg %p408
        %p779 = pneg %p405
        %p780 = pneg %p429
        %p781 = pneg %p426
        %p782 = scmp.lt.s32.totalorder %s38, 5
        %s783 = scalar_select %p782, %s38, 5
        %s784 = scalar_lea.vmem %s4, %s783
        %p785 = scmp.lt.s32.totalorder %s38, 5
        %s786 = scalar_select %p785, %s38, 5
        %s787 = smul.addr %s786, 2
        %s788 = scalar_lea.vmem %s6, %s787
        %p789 = scmp.lt.s32.totalorder %s38, 5
        %s790 = scalar_select %p789, %s38, 5
        %s791 = scalar_lea.vmem %s8, %s790
        %p792 = scmp.lt.s32.totalorder %s38, 5
        %s793 = scalar_select %p792, %s38, 5
        %s794 = scalar_lea.vmem %s9, %s793
        %p795 = scmp.lt.s32.totalorder %s38, 5
        %s796 = scalar_select %p795, %s38, 5
        %s797 = scalar_lea.vmem %s10, %s796
        %p798 = scmp.lt.s32.totalorder %s38, 5
        %s799 = scalar_select %p798, %s38, 5
        %s800 = scalar_lea.vmem %s12, %s799
        %p802 = scmp.eq.s32.totalorder %s38, 0
        // Predicated region
        $region113: #{classifier3_forward.1} parent=79 // pred_check
          %p803 = pneg %p802
        $region114: #{classifier3_forward.1} parent=79 // pred_check_branch
          %805 = sbr.rel (%p803) target = $region116
        $region115: #{classifier3_forward.1} parent=79 // pred_region
          %v806 = vld [vmem:[#allocation3] sm:$0xff]
          %v807 = vld [vmem:[#allocation3 + $0x8] sm:$0xff]
          %808 = vst [vmem:[#allocation2] sm:$0xff] %v806
          %809 = vst [vmem:[#allocation2 + $0x8] sm:$0xff] %v807
        $region116: #{classifier3_forward.1} parent=79 // pred_fallthru
          _
        %v810 = vld [vmem:[#allocation2] sm:$0xff]
        %v811 = vld [vmem:[#allocation2 + $0x8] sm:$0xff]
        %v812 = vpack.c.bf16 %v811, %v810
        %v813 = vld [vmem:[%s649] sm:$0xff]
        %v814 = vld [vmem:[%s649 + $0x8] sm:$0xf]
        %v815 = vld [vmem:[%s649 + $0xc] sm:$0xff]
        %v816 = vld [vmem:[%s649 + $0x14] sm:$0xf]
        %v817 = vld [vmem:[%s649 + $0x18] sm:$0xff]
        %v818 = vld [vmem:[%s649 + $0x20] sm:$0xf]
        %v819 = vld [vmem:[%s649 + $0x24] sm:$0xff]
        %v820 = vld [vmem:[%s649 + $0x2c] sm:$0xf]
        %v821 = vld [vmem:[%s649 + $0x30] sm:$0xff]
        %v822 = vld [vmem:[%s649 + $0x38] sm:$0xf]
        %v823 = vld [vmem:[%s649 + $0x3c] sm:$0xff]
        %v824 = vld [vmem:[%s649 + $0x44] sm:$0xf]
        %v825 = vld [vmem:[%s649 + $0x48] sm:$0xff]
        %v826 = vld [vmem:[%s649 + $0x50] sm:$0xf]
        %v827 = vld [vmem:[%s649 + $0x54] sm:$0xff]
        %v828 = vld [vmem:[%s649 + $0x5c] sm:$0xf]
        %v829 = vld [vmem:[%s649 + $0x60] sm:$0xff]
        %v830 = vld [vmem:[%s649 + $0x68] sm:$0xf]
        %v831 = vld [vmem:[%s649 + $0x6c] sm:$0xff]
        %v832 = vld [vmem:[%s649 + $0x74] sm:$0xf]
        %v833 = vld [vmem:[%s649 + $0x78] sm:$0xff]
        %v834 = vld [vmem:[%s649 + $0x80] sm:$0xf]
        %v835 = vld [vmem:[%s649 + $0x84] sm:$0xff]
        %v836 = vld [vmem:[%s649 + $0x8c] sm:$0xf]
        %v837 = vld [vmem:[%s649 + $0x90] sm:$0xff]
        %v838 = vld [vmem:[%s649 + $0x98] sm:$0xf]
        %v839 = vld [vmem:[%s649 + $0x9c] sm:$0xff]
        %v840 = vld [vmem:[%s649 + $0xa4] sm:$0xf]
        %v841 = vld [vmem:[%s649 + $0xa8] sm:$0xff]
        %v842 = vld [vmem:[%s649 + $0xb0] sm:$0xf]
        %v843 = vld [vmem:[%s649 + $0xb4] sm:$0xff]
        %v844 = vld [vmem:[%s649 + $0xbc] sm:$0xf]
        %v845 = vld [vmem:[%s658] sm:$0x7]
        %v847 = vlaneseq
        %v848 = vshrl.u32 %v847, 7
        %v849 = vsub.s32 0, %v848
        %v850 = vrot.slane %v845, %v849
        %v851 = vlaneseq
        %v852 = vshrl.u32 %v851, 7
        %v853 = vsub.s32 1, %v852
        %v854 = vrot.slane %v845, %v853
        %v855 = vlaneseq
        %v856 = vshrl.u32 %v855, 7
        %v857 = vsub.s32 2, %v856
        %v858 = vrot.slane %v845, %v857
        %v894 = vunpack.c.l.b16 %v813
        %v895 = vunpack.c.h.b16 %v813
        %v896 = vunpack.c.l.b16 %v814
        %v897 = vunpack.c.l.b16 %v815
        %v898 = vunpack.c.h.b16 %v815
        %v899 = vunpack.c.l.b16 %v816
        %v900 = vunpack.c.l.b16 %v817
        %v901 = vunpack.c.h.b16 %v817
        %v902 = vunpack.c.l.b16 %v818
        %v903 = vunpack.c.l.b16 %v819
        %v904 = vunpack.c.h.b16 %v819
        %v905 = vunpack.c.l.b16 %v820
        %v906 = vunpack.c.l.b16 %v821
        %v907 = vunpack.c.h.b16 %v821
        %v908 = vunpack.c.l.b16 %v822
        %v909 = vunpack.c.l.b16 %v823
        %v910 = vunpack.c.h.b16 %v823
        %v911 = vunpack.c.l.b16 %v824
        %v912 = vunpack.c.l.b16 %v825
        %v913 = vunpack.c.h.b16 %v825
        %v914 = vunpack.c.l.b16 %v826
        %v915 = vunpack.c.l.b16 %v827
        %v916 = vunpack.c.h.b16 %v827
        %v917 = vunpack.c.l.b16 %v828
        %v918 = vunpack.c.l.b16 %v829
        %v919 = vunpack.c.h.b16 %v829
        %v920 = vunpack.c.l.b16 %v830
        %v921 = vunpack.c.l.b16 %v831
        %v922 = vunpack.c.h.b16 %v831
        %v923 = vunpack.c.l.b16 %v832
        %v924 = vunpack.c.l.b16 %v833
        %v925 = vunpack.c.h.b16 %v833
        %v926 = vunpack.c.l.b16 %v834
        %v927 = vunpack.c.l.b16 %v835
        %v928 = vunpack.c.h.b16 %v835
        %v929 = vunpack.c.l.b16 %v836
        %v930 = vunpack.c.l.b16 %v837
        %v931 = vunpack.c.h.b16 %v837
        %v932 = vunpack.c.l.b16 %v838
        %v933 = vunpack.c.l.b16 %v839
        %v934 = vunpack.c.h.b16 %v839
        %v935 = vunpack.c.l.b16 %v840
        %v936 = vunpack.c.l.b16 %v841
        %v937 = vunpack.c.h.b16 %v841
        %v938 = vunpack.c.l.b16 %v842
        %v939 = vunpack.c.l.b16 %v843
        %v940 = vunpack.c.h.b16 %v843
        %v941 = vunpack.c.l.b16 %v844
        %v942 = vpack.c.b16 %v897, %v894
        %v943 = vpack.c.b16 %v898, %v895
        %v944 = vpack.c.b16 %v899, %v896
        %v945 = vpack.c.b16 %v903, %v900
        %v946 = vpack.c.b16 %v904, %v901
        %v947 = vpack.c.b16 %v905, %v902
        %v948 = vpack.c.b16 %v909, %v906
        %v949 = vpack.c.b16 %v910, %v907
        %v950 = vpack.c.b16 %v911, %v908
        %v951 = vpack.c.b16 %v915, %v912
        %v952 = vpack.c.b16 %v916, %v913
        %v953 = vpack.c.b16 %v917, %v914
        %v954 = vpack.c.b16 %v921, %v918
        %v955 = vpack.c.b16 %v922, %v919
        %v956 = vpack.c.b16 %v923, %v920
        %v957 = vpack.c.b16 %v927, %v924
        %v958 = vpack.c.b16 %v928, %v925
        %v959 = vpack.c.b16 %v929, %v926
        %v960 = vpack.c.b16 %v933, %v930
        %v961 = vpack.c.b16 %v934, %v931
        %v962 = vpack.c.b16 %v935, %v932
        %v963 = vpack.c.b16 %v939, %v936
        %v964 = vpack.c.b16 %v940, %v937
        %v965 = vpack.c.b16 %v941, %v938
        %990 = vmatprep.subr.bf16.mxu0 %v943
        %991 = vmatpush1.bf16.msra.mxu0 %v942
        %992 = vmatprep.subr.bf16.mxu0 %v946
        %993 = vmatpush1.bf16.msra.mxu0 %v945
        %994 = vmatprep.subr.bf16.mxu0 %v949
        %995 = vmatpush1.bf16.msra.mxu0 %v948
        %996 = vmatprep.subr.bf16.mxu0 %v952
        %997 = vmatpush1.bf16.msra.mxu0 %v951
        %998 = vmatprep.subr.bf16.mxu0 %v955
        %999 = vmatpush1.bf16.msra.mxu0 %v954
        %1000 = vmatprep.subr.bf16.mxu0 %v958
        %1001 = vmatpush1.bf16.msra.mxu0 %v957
        %1002 = vmatprep.subr.bf16.mxu0 %v961
        %1003 = vmatpush1.bf16.msra.mxu0 %v960
        %1004 = vmatprep.subr.bf16.mxu0 %v964
        %1005 = vmatpush1.bf16.msra.mxu0 %v963
        %1006 = vmatprep.subr.bf16.mxu0 0
        %1007 = vmatpush1.bf16.msra.mxu0 0
        %1008 = vmatprep.subr.bf16.mxu0 0
        %1009 = vmatpush1.bf16.msra.mxu0 0
        %1010 = vmatprep.subr.bf16.mxu0 0
        %1011 = vmatpush1.bf16.msra.mxu0 0
        %1012 = vmatprep.subr.bf16.mxu0 0
        %1013 = vmatpush1.bf16.msra.mxu0 0
        %1014 = vmatprep.subr.bf16.mxu0 0
        %1015 = vmatpush1.bf16.msra.mxu0 0
        %1016 = vmatprep.subr.bf16.mxu0 0
        %1017 = vmatpush1.bf16.msra.mxu0 0
        %1018 = vmatprep.subr.bf16.mxu0 0
        %1019 = vmatpush1.bf16.msra.mxu0 0
        %1020 = vmatprep.subr.bf16.mxu0 0
        %1021 = vmatpush1.bf16.msra.mxu0 0
        %1022 = vmatprep.mubr.bf16.mxu0 0
        %1023 = vmatmul.mubr.bf16.gmra.mrb[0].mxu0 %v812
        %v1024 = vpop.f32.mrb[0].mxu0
        %v1025 = vadd.f32 %v850, %v1024
        %v1026 = vpop.f32.mrb[0].mxu0
        %v1027 = vadd.f32 %v854, %v1026
        %v1028 = vpop.f32.mrb[0].mxu0
        %v1029 = vadd.f32 %v850, %v1028
        %v1030 = vpop.f32.mrb[0].mxu0
        %v1031 = vadd.f32 %v854, %v1030
        %1032 = vdwg.mxu0
        %1033 = vmatprep.subr.bf16.mxu0 0
        %1034 = vmatpush1.bf16.msra.mxu0 %v944
        %1035 = vmatprep.subr.bf16.mxu0 0
        %1036 = vmatpush1.bf16.msra.mxu0 %v947
        %1037 = vmatprep.subr.bf16.mxu0 0
        %1038 = vmatpush1.bf16.msra.mxu0 %v950
        %1039 = vmatprep.subr.bf16.mxu0 0
        %1040 = vmatpush1.bf16.msra.mxu0 %v953
        %1041 = vmatprep.subr.bf16.mxu0 0
        %1042 = vmatpush1.bf16.msra.mxu0 %v956
        %1043 = vmatprep.subr.bf16.mxu0 0
        %1044 = vmatpush1.bf16.msra.mxu0 %v959
        %1045 = vmatprep.subr.bf16.mxu0 0
        %1046 = vmatpush1.bf16.msra.mxu0 %v962
        %1047 = vmatprep.subr.bf16.mxu0 0
        %1048 = vmatpush1.bf16.msra.mxu0 %v965
        %1049 = vmatprep.subr.bf16.mxu0 0
        %1050 = vmatpush1.bf16.msra.mxu0 0
        %1051 = vmatprep.subr.bf16.mxu0 0
        %1052 = vmatpush1.bf16.msra.mxu0 0
        %1053 = vmatprep.subr.bf16.mxu0 0
        %1054 = vmatpush1.bf16.msra.mxu0 0
        %1055 = vmatprep.subr.bf16.mxu0 0
        %1056 = vmatpush1.bf16.msra.mxu0 0
        %1057 = vmatprep.subr.bf16.mxu0 0
        %1058 = vmatpush1.bf16.msra.mxu0 0
        %1059 = vmatprep.subr.bf16.mxu0 0
        %1060 = vmatpush1.bf16.msra.mxu0 0
        %1061 = vmatprep.subr.bf16.mxu0 0
        %1062 = vmatpush1.bf16.msra.mxu0 0
        %1063 = vmatprep.subr.bf16.mxu0 0
        %1064 = vmatpush1.bf16.msra.mxu0 0
        %1065 = vmatprep.mubr.bf16.mxu0 0
        %1066 = vmatmul.mubr.bf16.gmra.mrb[0].mxu0 %v812
        %v1067 = vpop.f32.mrb[0].mxu0
        %v1068 = vadd.f32 %v858, %v1067
        %v1069 = vpop.f32.mrb[0].mxu0
        %v1070 = vpop.f32.mrb[0].mxu0
        %v1071 = vadd.f32 %v858, %v1070
        %v1072 = vpop.f32.mrb[0].mxu0
        %1073 = vdwg.mxu0
        %1076 = vrot.lane.b32.xlu0 %v1025, 112
        %v1077 = vpop.permute.xlu0 %1076
        %1078 = vrot.lane.b32.xlu0 %v1029, 112
        %v1079 = vpop.permute.xlu0 %1078
        %1082 = vrot.lane.b32.xlu0 %v1025, 96
        %v1083 = vpop.permute.xlu0 %1082
        %1084 = vrot.lane.b32.xlu0 %v1029, 96
        %v1085 = vpop.permute.xlu0 %1084
        %1088 = vrot.lane.b32.xlu0 %v1025, 80
        %v1089 = vpop.permute.xlu0 %1088
        %1090 = vrot.lane.b32.xlu0 %v1029, 80
        %v1091 = vpop.permute.xlu0 %1090
        %1094 = vrot.lane.b32.xlu0 %v1025, 64
        %v1095 = vpop.permute.xlu0 %1094
        %1096 = vrot.lane.b32.xlu0 %v1029, 64
        %v1097 = vpop.permute.xlu0 %1096
        %1100 = vrot.lane.b32.xlu0 %v1025, 48
        %v1101 = vpop.permute.xlu0 %1100
        %1102 = vrot.lane.b32.xlu0 %v1029, 48
        %v1103 = vpop.permute.xlu0 %1102
        %1106 = vrot.lane.b32.xlu0 %v1025, 32
        %v1107 = vpop.permute.xlu0 %1106
        %1108 = vrot.lane.b32.xlu0 %v1029, 32
        %v1109 = vpop.permute.xlu0 %1108
        %1112 = vrot.lane.b32.xlu0 %v1025, 16
        %v1113 = vpop.permute.xlu0 %1112
        %1114 = vrot.lane.b32.xlu0 %v1029, 16
        %v1115 = vpop.permute.xlu0 %1114
        %v1118 = vcombine.low %v1025, %v1083
        %v1119 = vcombine.high %v1025, %v1083
        %v1121 = vunpack.c.l.s4 1983009808
        %v1122 = vunpack.c.0.s8 %v1121
        %v1123 = vlaneseq
        %v1124 = vshrl.u32 %v1123, 7
        %v1125 = vsub.s32 %v1122, %v1124
        %v1126 = vrot.slane %v1118, %v1125
        %v1128 = vunpack.c.l.s4 1983009808
        %v1129 = vunpack.c.0.s8 %v1128
        %v1130 = vlaneseq
        %v1131 = vshrl.u32 %v1130, 7
        %v1132 = vsub.s32 %v1129, %v1131
        %v1133 = vrot.slane %v1119, %v1132
        %v1134 = vcombine.low %v1077, %v1089
        %v1135 = vcombine.high %v1077, %v1089
        %v1137 = vunpack.c.l.s4 1983009808
        %v1138 = vunpack.c.0.s8 %v1137
        %v1139 = vlaneseq
        %v1140 = vshrl.u32 %v1139, 7
        %v1141 = vsub.s32 %v1138, %v1140
        %v1142 = vrot.slane %v1134, %v1141
        %v1144 = vunpack.c.l.s4 1983009808
        %v1145 = vunpack.c.0.s8 %v1144
        %v1146 = vlaneseq
        %v1147 = vshrl.u32 %v1146, 7
        %v1148 = vsub.s32 %v1145, %v1147
        %v1149 = vrot.slane %v1135, %v1148
        %v1150 = vcombine.low %v1095, %v1107
        %v1151 = vcombine.high %v1095, %v1107
        %v1153 = vunpack.c.l.s4 1983009808
        %v1154 = vunpack.c.0.s8 %v1153
        %v1155 = vlaneseq
        %v1156 = vshrl.u32 %v1155, 7
        %v1157 = vsub.s32 %v1154, %v1156
        %v1158 = vrot.slane %v1150, %v1157
        %v1160 = vunpack.c.l.s4 1983009808
        %v1161 = vunpack.c.0.s8 %v1160
        %v1162 = vlaneseq
        %v1163 = vshrl.u32 %v1162, 7
        %v1164 = vsub.s32 %v1161, %v1163
        %v1165 = vrot.slane %v1151, %v1164
        %v1166 = vcombine.low %v1101, %v1113
        %v1167 = vcombine.high %v1101, %v1113
        %v1169 = vunpack.c.l.s4 1983009808
        %v1170 = vunpack.c.0.s8 %v1169
        %v1171 = vlaneseq
        %v1172 = vshrl.u32 %v1171, 7
        %v1173 = vsub.s32 %v1170, %v1172
        %v1174 = vrot.slane %v1166, %v1173
        %v1176 = vunpack.c.l.s4 1983009808
        %v1177 = vunpack.c.0.s8 %v1176
        %v1178 = vlaneseq
        %v1179 = vshrl.u32 %v1178, 7
        %v1180 = vsub.s32 %v1177, %v1179
        %v1181 = vrot.slane %v1167, %v1180
        %v1182 = vcombine.low %v1126, %v1142
        %v1183 = vcombine.high %v1126, %v1142
        %v1185 = vunpack.c.l.s4 1934713408
        %v1186 = vunpack.c.0.s8 %v1185
        %v1187 = vlaneseq
        %v1188 = vshrl.u32 %v1187, 7
        %v1189 = vsub.s32 %v1186, %v1188
        %v1190 = vrot.slane %v1182, %v1189
        %v1192 = vunpack.c.l.s4 1934713408
        %v1193 = vunpack.c.0.s8 %v1192
        %v1194 = vlaneseq
        %v1195 = vshrl.u32 %v1194, 7
        %v1196 = vsub.s32 %v1193, %v1195
        %v1197 = vrot.slane %v1183, %v1196
        %v1198 = vcombine.low %v1133, %v1149
        %v1199 = vcombine.high %v1133, %v1149
        %v1201 = vunpack.c.l.s4 1934713408
        %v1202 = vunpack.c.0.s8 %v1201
        %v1203 = vlaneseq
        %v1204 = vshrl.u32 %v1203, 7
        %v1205 = vsub.s32 %v1202, %v1204
        %v1206 = vrot.slane %v1198, %v1205
        %v1208 = vunpack.c.l.s4 1934713408
        %v1209 = vunpack.c.0.s8 %v1208
        %v1210 = vlaneseq
        %v1211 = vshrl.u32 %v1210, 7
        %v1212 = vsub.s32 %v1209, %v1211
        %v1213 = vrot.slane %v1199, %v1212
        %v1214 = vcombine.low %v1158, %v1174
        %v1215 = vcombine.high %v1158, %v1174
        %v1217 = vunpack.c.l.s4 1934713408
        %v1218 = vunpack.c.0.s8 %v1217
        %v1219 = vlaneseq
        %v1220 = vshrl.u32 %v1219, 7
        %v1221 = vsub.s32 %v1218, %v1220
        %v1222 = vrot.slane %v1214, %v1221
        %v1224 = vunpack.c.l.s4 1934713408
        %v1225 = vunpack.c.0.s8 %v1224
        %v1226 = vlaneseq
        %v1227 = vshrl.u32 %v1226, 7
        %v1228 = vsub.s32 %v1225, %v1227
        %v1229 = vrot.slane %v1215, %v1228
        %v1230 = vcombine.low %v1165, %v1181
        %v1231 = vcombine.high %v1165, %v1181
        %v1233 = vunpack.c.l.s4 1934713408
        %v1234 = vunpack.c.0.s8 %v1233
        %v1235 = vlaneseq
        %v1236 = vshrl.u32 %v1235, 7
        %v1237 = vsub.s32 %v1234, %v1236
        %v1238 = vrot.slane %v1230, %v1237
        %v1240 = vunpack.c.l.s4 1934713408
        %v1241 = vunpack.c.0.s8 %v1240
        %v1242 = vlaneseq
        %v1243 = vshrl.u32 %v1242, 7
        %v1244 = vsub.s32 %v1241, %v1243
        %v1245 = vrot.slane %v1231, %v1244
        %v1246 = vcombine.low %v1190, %v1222
        %v1247 = vcombine.high %v1190, %v1222
        %v1248 = vcombine.low %v1197, %v1229
        %v1249 = vcombine.high %v1197, %v1229
        %v1250 = vcombine.low %v1206, %v1238
        %v1251 = vcombine.high %v1206, %v1238
        %v1252 = vcombine.low %v1213, %v1245
        %v1253 = vcombine.high %v1213, %v1245
        %v1254 = vcombine.low %v1029, %v1085
        %v1255 = vcombine.high %v1029, %v1085
        %v1257 = vunpack.c.l.s4 1983009808
        %v1258 = vunpack.c.0.s8 %v1257
        %v1259 = vlaneseq
        %v1260 = vshrl.u32 %v1259, 7
        %v1261 = vsub.s32 %v1258, %v1260
        %v1262 = vrot.slane %v1254, %v1261
        %v1264 = vunpack.c.l.s4 1983009808
        %v1265 = vunpack.c.0.s8 %v1264
        %v1266 = vlaneseq
        %v1267 = vshrl.u32 %v1266, 7
        %v1268 = vsub.s32 %v1265, %v1267
        %v1269 = vrot.slane %v1255, %v1268
        %v1270 = vcombine.low %v1079, %v1091
        %v1271 = vcombine.high %v1079, %v1091
        %v1273 = vunpack.c.l.s4 1983009808
        %v1274 = vunpack.c.0.s8 %v1273
        %v1275 = vlaneseq
        %v1276 = vshrl.u32 %v1275, 7
        %v1277 = vsub.s32 %v1274, %v1276
        %v1278 = vrot.slane %v1270, %v1277
        %v1280 = vunpack.c.l.s4 1983009808
        %v1281 = vunpack.c.0.s8 %v1280
        %v1282 = vlaneseq
        %v1283 = vshrl.u32 %v1282, 7
        %v1284 = vsub.s32 %v1281, %v1283
        %v1285 = vrot.slane %v1271, %v1284
        %v1286 = vcombine.low %v1097, %v1109
        %v1287 = vcombine.high %v1097, %v1109
        %v1289 = vunpack.c.l.s4 1983009808
        %v1290 = vunpack.c.0.s8 %v1289
        %v1291 = vlaneseq
        %v1292 = vshrl.u32 %v1291, 7
        %v1293 = vsub.s32 %v1290, %v1292
        %v1294 = vrot.slane %v1286, %v1293
        %v1296 = vunpack.c.l.s4 1983009808
        %v1297 = vunpack.c.0.s8 %v1296
        %v1298 = vlaneseq
        %v1299 = vshrl.u32 %v1298, 7
        %v1300 = vsub.s32 %v1297, %v1299
        %v1301 = vrot.slane %v1287, %v1300
        %v1302 = vcombine.low %v1103, %v1115
        %v1303 = vcombine.high %v1103, %v1115
        %v1305 = vunpack.c.l.s4 1983009808
        %v1306 = vunpack.c.0.s8 %v1305
        %v1307 = vlaneseq
        %v1308 = vshrl.u32 %v1307, 7
        %v1309 = vsub.s32 %v1306, %v1308
        %v1310 = vrot.slane %v1302, %v1309
        %v1312 = vunpack.c.l.s4 1983009808
        %v1313 = vunpack.c.0.s8 %v1312
        %v1314 = vlaneseq
        %v1315 = vshrl.u32 %v1314, 7
        %v1316 = vsub.s32 %v1313, %v1315
        %v1317 = vrot.slane %v1303, %v1316
        %v1318 = vcombine.low %v1262, %v1278
        %v1319 = vcombine.high %v1262, %v1278
        %v1321 = vunpack.c.l.s4 1934713408
        %v1322 = vunpack.c.0.s8 %v1321
        %v1323 = vlaneseq
        %v1324 = vshrl.u32 %v1323, 7
        %v1325 = vsub.s32 %v1322, %v1324
        %v1326 = vrot.slane %v1318, %v1325
        %v1328 = vunpack.c.l.s4 1934713408
        %v1329 = vunpack.c.0.s8 %v1328
        %v1330 = vlaneseq
        %v1331 = vshrl.u32 %v1330, 7
        %v1332 = vsub.s32 %v1329, %v1331
        %v1333 = vrot.slane %v1319, %v1332
        %v1334 = vcombine.low %v1269, %v1285
        %v1335 = vcombine.high %v1269, %v1285
        %v1337 = vunpack.c.l.s4 1934713408
        %v1338 = vunpack.c.0.s8 %v1337
        %v1339 = vlaneseq
        %v1340 = vshrl.u32 %v1339, 7
        %v1341 = vsub.s32 %v1338, %v1340
        %v1342 = vrot.slane %v1334, %v1341
        %v1344 = vunpack.c.l.s4 1934713408
        %v1345 = vunpack.c.0.s8 %v1344
        %v1346 = vlaneseq
        %v1347 = vshrl.u32 %v1346, 7
        %v1348 = vsub.s32 %v1345, %v1347
        %v1349 = vrot.slane %v1335, %v1348
        %v1350 = vcombine.low %v1294, %v1310
        %v1351 = vcombine.high %v1294, %v1310
        %v1353 = vunpack.c.l.s4 1934713408
        %v1354 = vunpack.c.0.s8 %v1353
        %v1355 = vlaneseq
        %v1356 = vshrl.u32 %v1355, 7
        %v1357 = vsub.s32 %v1354, %v1356
        %v1358 = vrot.slane %v1350, %v1357
        %v1360 = vunpack.c.l.s4 1934713408
        %v1361 = vunpack.c.0.s8 %v1360
        %v1362 = vlaneseq
        %v1363 = vshrl.u32 %v1362, 7
        %v1364 = vsub.s32 %v1361, %v1363
        %v1365 = vrot.slane %v1351, %v1364
        %v1366 = vcombine.low %v1301, %v1317
        %v1367 = vcombine.high %v1301, %v1317
        %v1369 = vunpack.c.l.s4 1934713408
        %v1370 = vunpack.c.0.s8 %v1369
        %v1371 = vlaneseq
        %v1372 = vshrl.u32 %v1371, 7
        %v1373 = vsub.s32 %v1370, %v1372
        %v1374 = vrot.slane %v1366, %v1373
        %v1376 = vunpack.c.l.s4 1934713408
        %v1377 = vunpack.c.0.s8 %v1376
        %v1378 = vlaneseq
        %v1379 = vshrl.u32 %v1378, 7
        %v1380 = vsub.s32 %v1377, %v1379
        %v1381 = vrot.slane %v1367, %v1380
        %v1382 = vcombine.low %v1326, %v1358
        %v1383 = vcombine.high %v1326, %v1358
        %v1384 = vcombine.low %v1333, %v1365
        %v1385 = vcombine.high %v1333, %v1365
        %v1386 = vcombine.low %v1342, %v1374
        %v1387 = vcombine.high %v1342, %v1374
        %v1388 = vcombine.low %v1349, %v1381
        %v1389 = vcombine.high %v1349, %v1381
        %v1390 = vcombine.low %v1246, %v1248
        %v1391 = vcombine.high %v1246, %v1248
        %v1393 = vunpack.c.l.s4 1983009808
        %v1394 = vunpack.c.0.s8 %v1393
        %v1395 = vlaneseq
        %v1396 = vshrl.u32 %v1395, 7
        %v1397 = vsub.s32 %v1394, %v1396
        %v1398 = vrot.slane %v1390, %v1397
        %v1400 = vunpack.c.l.s4 1983009808
        %v1401 = vunpack.c.0.s8 %v1400
        %v1402 = vlaneseq
        %v1403 = vshrl.u32 %v1402, 7
        %v1404 = vsub.s32 %v1401, %v1403
        %v1405 = vrot.slane %v1391, %v1404
        %v1406 = vcombine.low %v1247, %v1249
        %v1407 = vcombine.high %v1247, %v1249
        %v1409 = vunpack.c.l.s4 1983009808
        %v1410 = vunpack.c.0.s8 %v1409
        %v1411 = vlaneseq
        %v1412 = vshrl.u32 %v1411, 7
        %v1413 = vsub.s32 %v1410, %v1412
        %v1414 = vrot.slane %v1406, %v1413
        %v1416 = vunpack.c.l.s4 1983009808
        %v1417 = vunpack.c.0.s8 %v1416
        %v1418 = vlaneseq
        %v1419 = vshrl.u32 %v1418, 7
        %v1420 = vsub.s32 %v1417, %v1419
        %v1421 = vrot.slane %v1407, %v1420
        %v1422 = vcombine.low %v1250, %v1252
        %v1423 = vcombine.high %v1250, %v1252
        %v1425 = vunpack.c.l.s4 1983009808
        %v1426 = vunpack.c.0.s8 %v1425
        %v1427 = vlaneseq
        %v1428 = vshrl.u32 %v1427, 7
        %v1429 = vsub.s32 %v1426, %v1428
        %v1430 = vrot.slane %v1422, %v1429
        %v1432 = vunpack.c.l.s4 1983009808
        %v1433 = vunpack.c.0.s8 %v1432
        %v1434 = vlaneseq
        %v1435 = vshrl.u32 %v1434, 7
        %v1436 = vsub.s32 %v1433, %v1435
        %v1437 = vrot.slane %v1423, %v1436
        %v1438 = vcombine.low %v1251, %v1253
        %v1439 = vcombine.high %v1251, %v1253
        %v1441 = vunpack.c.l.s4 1983009808
        %v1442 = vunpack.c.0.s8 %v1441
        %v1443 = vlaneseq
        %v1444 = vshrl.u32 %v1443, 7
        %v1445 = vsub.s32 %v1442, %v1444
        %v1446 = vrot.slane %v1438, %v1445
        %v1448 = vunpack.c.l.s4 1983009808
        %v1449 = vunpack.c.0.s8 %v1448
        %v1450 = vlaneseq
        %v1451 = vshrl.u32 %v1450, 7
        %v1452 = vsub.s32 %v1449, %v1451
        %v1453 = vrot.slane %v1439, %v1452
        %v1454 = vcombine.low %v1398, %v1414
        %v1455 = vcombine.high %v1398, %v1414
        %v1457 = vunpack.c.l.s4 1934713408
        %v1458 = vunpack.c.0.s8 %v1457
        %v1459 = vlaneseq
        %v1460 = vshrl.u32 %v1459, 7
        %v1461 = vsub.s32 %v1458, %v1460
        %v1462 = vrot.slane %v1454, %v1461
        %v1464 = vunpack.c.l.s4 1934713408
        %v1465 = vunpack.c.0.s8 %v1464
        %v1466 = vlaneseq
        %v1467 = vshrl.u32 %v1466, 7
        %v1468 = vsub.s32 %v1465, %v1467
        %v1469 = vrot.slane %v1455, %v1468
        %v1470 = vcombine.low %v1405, %v1421
        %v1471 = vcombine.high %v1405, %v1421
        %v1473 = vunpack.c.l.s4 1934713408
        %v1474 = vunpack.c.0.s8 %v1473
        %v1475 = vlaneseq
        %v1476 = vshrl.u32 %v1475, 7
        %v1477 = vsub.s32 %v1474, %v1476
        %v1478 = vrot.slane %v1470, %v1477
        %v1480 = vunpack.c.l.s4 1934713408
        %v1481 = vunpack.c.0.s8 %v1480
        %v1482 = vlaneseq
        %v1483 = vshrl.u32 %v1482, 7
        %v1484 = vsub.s32 %v1481, %v1483
        %v1485 = vrot.slane %v1471, %v1484
        %v1486 = vcombine.low %v1430, %v1446
        %v1487 = vcombine.high %v1430, %v1446
        %v1489 = vunpack.c.l.s4 1934713408
        %v1490 = vunpack.c.0.s8 %v1489
        %v1491 = vlaneseq
        %v1492 = vshrl.u32 %v1491, 7
        %v1493 = vsub.s32 %v1490, %v1492
        %v1494 = vrot.slane %v1486, %v1493
        %v1496 = vunpack.c.l.s4 1934713408
        %v1497 = vunpack.c.0.s8 %v1496
        %v1498 = vlaneseq
        %v1499 = vshrl.u32 %v1498, 7
        %v1500 = vsub.s32 %v1497, %v1499
        %v1501 = vrot.slane %v1487, %v1500
        %v1502 = vcombine.low %v1437, %v1453
        %v1503 = vcombine.high %v1437, %v1453
        %v1505 = vunpack.c.l.s4 1934713408
        %v1506 = vunpack.c.0.s8 %v1505
        %v1507 = vlaneseq
        %v1508 = vshrl.u32 %v1507, 7
        %v1509 = vsub.s32 %v1506, %v1508
        %v1510 = vrot.slane %v1502, %v1509
        %v1512 = vunpack.c.l.s4 1934713408
        %v1513 = vunpack.c.0.s8 %v1512
        %v1514 = vlaneseq
        %v1515 = vshrl.u32 %v1514, 7
        %v1516 = vsub.s32 %v1513, %v1515
        %v1517 = vrot.slane %v1503, %v1516
        %v1518 = vcombine.low %v1462, %v1494
        %v1519 = vcombine.high %v1462, %v1494
        %v1520 = vcombine.low %v1469, %v1501
        %v1521 = vcombine.high %v1469, %v1501
        %v1522 = vcombine.low %v1478, %v1510
        %v1523 = vcombine.high %v1478, %v1510
        %v1524 = vcombine.low %v1485, %v1517
        %v1525 = vcombine.high %v1485, %v1517
        %v1526 = vcombine.low %v1382, %v1384
        %v1527 = vcombine.high %v1382, %v1384
        %v1529 = vunpack.c.l.s4 1983009808
        %v1530 = vunpack.c.0.s8 %v1529
        %v1531 = vlaneseq
        %v1532 = vshrl.u32 %v1531, 7
        %v1533 = vsub.s32 %v1530, %v1532
        %v1534 = vrot.slane %v1526, %v1533
        %v1536 = vunpack.c.l.s4 1983009808
        %v1537 = vunpack.c.0.s8 %v1536
        %v1538 = vlaneseq
        %v1539 = vshrl.u32 %v1538, 7
        %v1540 = vsub.s32 %v1537, %v1539
        %v1541 = vrot.slane %v1527, %v1540
        %v1542 = vcombine.low %v1383, %v1385
        %v1543 = vcombine.high %v1383, %v1385
        %v1545 = vunpack.c.l.s4 1983009808
        %v1546 = vunpack.c.0.s8 %v1545
        %v1547 = vlaneseq
        %v1548 = vshrl.u32 %v1547, 7
        %v1549 = vsub.s32 %v1546, %v1548
        %v1550 = vrot.slane %v1542, %v1549
        %v1552 = vunpack.c.l.s4 1983009808
        %v1553 = vunpack.c.0.s8 %v1552
        %v1554 = vlaneseq
        %v1555 = vshrl.u32 %v1554, 7
        %v1556 = vsub.s32 %v1553, %v1555
        %v1557 = vrot.slane %v1543, %v1556
        %v1558 = vcombine.low %v1386, %v1388
        %v1559 = vcombine.high %v1386, %v1388
        %v1561 = vunpack.c.l.s4 1983009808
        %v1562 = vunpack.c.0.s8 %v1561
        %v1563 = vlaneseq
        %v1564 = vshrl.u32 %v1563, 7
        %v1565 = vsub.s32 %v1562, %v1564
        %v1566 = vrot.slane %v1558, %v1565
        %v1568 = vunpack.c.l.s4 1983009808
        %v1569 = vunpack.c.0.s8 %v1568
        %v1570 = vlaneseq
        %v1571 = vshrl.u32 %v1570, 7
        %v1572 = vsub.s32 %v1569, %v1571
        %v1573 = vrot.slane %v1559, %v1572
        %v1574 = vcombine.low %v1387, %v1389
        %v1575 = vcombine.high %v1387, %v1389
        %v1577 = vunpack.c.l.s4 1983009808
        %v1578 = vunpack.c.0.s8 %v1577
        %v1579 = vlaneseq
        %v1580 = vshrl.u32 %v1579, 7
        %v1581 = vsub.s32 %v1578, %v1580
        %v1582 = vrot.slane %v1574, %v1581
        %v1584 = vunpack.c.l.s4 1983009808
        %v1585 = vunpack.c.0.s8 %v1584
        %v1586 = vlaneseq
        %v1587 = vshrl.u32 %v1586, 7
        %v1588 = vsub.s32 %v1585, %v1587
        %v1589 = vrot.slane %v1575, %v1588
        %v1590 = vcombine.low %v1534, %v1550
        %v1591 = vcombine.high %v1534, %v1550
        %v1593 = vunpack.c.l.s4 1934713408
        %v1594 = vunpack.c.0.s8 %v1593
        %v1595 = vlaneseq
        %v1596 = vshrl.u32 %v1595, 7
        %v1597 = vsub.s32 %v1594, %v1596
        %v1598 = vrot.slane %v1590, %v1597
        %v1600 = vunpack.c.l.s4 1934713408
        %v1601 = vunpack.c.0.s8 %v1600
        %v1602 = vlaneseq
        %v1603 = vshrl.u32 %v1602, 7
        %v1604 = vsub.s32 %v1601, %v1603
        %v1605 = vrot.slane %v1591, %v1604
        %v1606 = vcombine.low %v1541, %v1557
        %v1607 = vcombine.high %v1541, %v1557
        %v1609 = vunpack.c.l.s4 1934713408
        %v1610 = vunpack.c.0.s8 %v1609
        %v1611 = vlaneseq
        %v1612 = vshrl.u32 %v1611, 7
        %v1613 = vsub.s32 %v1610, %v1612
        %v1614 = vrot.slane %v1606, %v1613
        %v1616 = vunpack.c.l.s4 1934713408
        %v1617 = vunpack.c.0.s8 %v1616
        %v1618 = vlaneseq
        %v1619 = vshrl.u32 %v1618, 7
        %v1620 = vsub.s32 %v1617, %v1619
        %v1621 = vrot.slane %v1607, %v1620
        %v1622 = vcombine.low %v1566, %v1582
        %v1623 = vcombine.high %v1566, %v1582
        %v1625 = vunpack.c.l.s4 1934713408
        %v1626 = vunpack.c.0.s8 %v1625
        %v1627 = vlaneseq
        %v1628 = vshrl.u32 %v1627, 7
        %v1629 = vsub.s32 %v1626, %v1628
        %v1630 = vrot.slane %v1622, %v1629
        %v1632 = vunpack.c.l.s4 1934713408
        %v1633 = vunpack.c.0.s8 %v1632
        %v1634 = vlaneseq
        %v1635 = vshrl.u32 %v1634, 7
        %v1636 = vsub.s32 %v1633, %v1635
        %v1637 = vrot.slane %v1623, %v1636
        %v1638 = vcombine.low %v1573, %v1589
        %v1639 = vcombine.high %v1573, %v1589
        %v1641 = vunpack.c.l.s4 1934713408
        %v1642 = vunpack.c.0.s8 %v1641
        %v1643 = vlaneseq
        %v1644 = vshrl.u32 %v1643, 7
        %v1645 = vsub.s32 %v1642, %v1644
        %v1646 = vrot.slane %v1638, %v1645
        %v1648 = vunpack.c.l.s4 1934713408
        %v1649 = vunpack.c.0.s8 %v1648
        %v1650 = vlaneseq
        %v1651 = vshrl.u32 %v1650, 7
        %v1652 = vsub.s32 %v1649, %v1651
        %v1653 = vrot.slane %v1639, %v1652
        %v1654 = vcombine.low %v1598, %v1630
        %v1655 = vcombine.high %v1598, %v1630
        %v1656 = vcombine.low %v1605, %v1637
        %v1657 = vcombine.high %v1605, %v1637
        %v1658 = vcombine.low %v1614, %v1646
        %v1659 = vcombine.high %v1614, %v1646
        %v1660 = vcombine.low %v1621, %v1653
        %v1661 = vcombine.high %v1621, %v1653
        %1664 = vrot.lane.b32.xlu0 %v1027, 112
        %v1665 = vpop.permute.xlu0 %1664
        %1666 = vrot.lane.b32.xlu0 %v1031, 112
        %v1667 = vpop.permute.xlu0 %1666
        %1670 = vrot.lane.b32.xlu0 %v1027, 96
        %v1671 = vpop.permute.xlu0 %1670
        %1672 = vrot.lane.b32.xlu0 %v1031, 96
        %v1673 = vpop.permute.xlu0 %1672
        %1676 = vrot.lane.b32.xlu0 %v1027, 80
        %v1677 = vpop.permute.xlu0 %1676
        %1678 = vrot.lane.b32.xlu0 %v1031, 80
        %v1679 = vpop.permute.xlu0 %1678
        %1682 = vrot.lane.b32.xlu0 %v1027, 64
        %v1683 = vpop.permute.xlu0 %1682
        %1684 = vrot.lane.b32.xlu0 %v1031, 64
        %v1685 = vpop.permute.xlu0 %1684
        %1688 = vrot.lane.b32.xlu0 %v1027, 48
        %v1689 = vpop.permute.xlu0 %1688
        %1690 = vrot.lane.b32.xlu0 %v1031, 48
        %v1691 = vpop.permute.xlu0 %1690
        %1694 = vrot.lane.b32.xlu0 %v1027, 32
        %v1695 = vpop.permute.xlu0 %1694
        %1696 = vrot.lane.b32.xlu0 %v1031, 32
        %v1697 = vpop.permute.xlu0 %1696
        %1700 = vrot.lane.b32.xlu0 %v1027, 16
        %v1701 = vpop.permute.xlu0 %1700
        %1702 = vrot.lane.b32.xlu0 %v1031, 16
        %v1703 = vpop.permute.xlu0 %1702
        %v1706 = vcombine.low %v1027, %v1671
        %v1707 = vcombine.high %v1027, %v1671
        %v1709 = vunpack.c.l.s4 1983009808
        %v1710 = vunpack.c.0.s8 %v1709
        %v1711 = vlaneseq
        %v1712 = vshrl.u32 %v1711, 7
        %v1713 = vsub.s32 %v1710, %v1712
        %v1714 = vrot.slane %v1706, %v1713
        %v1716 = vunpack.c.l.s4 1983009808
        %v1717 = vunpack.c.0.s8 %v1716
        %v1718 = vlaneseq
        %v1719 = vshrl.u32 %v1718, 7
        %v1720 = vsub.s32 %v1717, %v1719
        %v1721 = vrot.slane %v1707, %v1720
        %v1722 = vcombine.low %v1665, %v1677
        %v1723 = vcombine.high %v1665, %v1677
        %v1725 = vunpack.c.l.s4 1983009808
        %v1726 = vunpack.c.0.s8 %v1725
        %v1727 = vlaneseq
        %v1728 = vshrl.u32 %v1727, 7
        %v1729 = vsub.s32 %v1726, %v1728
        %v1730 = vrot.slane %v1722, %v1729
        %v1732 = vunpack.c.l.s4 1983009808
        %v1733 = vunpack.c.0.s8 %v1732
        %v1734 = vlaneseq
        %v1735 = vshrl.u32 %v1734, 7
        %v1736 = vsub.s32 %v1733, %v1735
        %v1737 = vrot.slane %v1723, %v1736
        %v1738 = vcombine.low %v1683, %v1695
        %v1739 = vcombine.high %v1683, %v1695
        %v1741 = vunpack.c.l.s4 1983009808
        %v1742 = vunpack.c.0.s8 %v1741
        %v1743 = vlaneseq
        %v1744 = vshrl.u32 %v1743, 7
        %v1745 = vsub.s32 %v1742, %v1744
        %v1746 = vrot.slane %v1738, %v1745
        %v1748 = vunpack.c.l.s4 1983009808
        %v1749 = vunpack.c.0.s8 %v1748
        %v1750 = vlaneseq
        %v1751 = vshrl.u32 %v1750, 7
        %v1752 = vsub.s32 %v1749, %v1751
        %v1753 = vrot.slane %v1739, %v1752
        %v1754 = vcombine.low %v1689, %v1701
        %v1755 = vcombine.high %v1689, %v1701
        %v1757 = vunpack.c.l.s4 1983009808
        %v1758 = vunpack.c.0.s8 %v1757
        %v1759 = vlaneseq
        %v1760 = vshrl.u32 %v1759, 7
        %v1761 = vsub.s32 %v1758, %v1760
        %v1762 = vrot.slane %v1754, %v1761
        %v1764 = vunpack.c.l.s4 1983009808
        %v1765 = vunpack.c.0.s8 %v1764
        %v1766 = vlaneseq
        %v1767 = vshrl.u32 %v1766, 7
        %v1768 = vsub.s32 %v1765, %v1767
        %v1769 = vrot.slane %v1755, %v1768
        %v1770 = vcombine.low %v1714, %v1730
        %v1771 = vcombine.high %v1714, %v1730
        %v1773 = vunpack.c.l.s4 1934713408
        %v1774 = vunpack.c.0.s8 %v1773
        %v1775 = vlaneseq
        %v1776 = vshrl.u32 %v1775, 7
        %v1777 = vsub.s32 %v1774, %v1776
        %v1778 = vrot.slane %v1770, %v1777
        %v1780 = vunpack.c.l.s4 1934713408
        %v1781 = vunpack.c.0.s8 %v1780
        %v1782 = vlaneseq
        %v1783 = vshrl.u32 %v1782, 7
        %v1784 = vsub.s32 %v1781, %v1783
        %v1785 = vrot.slane %v1771, %v1784
        %v1786 = vcombine.low %v1721, %v1737
        %v1787 = vcombine.high %v1721, %v1737
        %v1789 = vunpack.c.l.s4 1934713408
        %v1790 = vunpack.c.0.s8 %v1789
        %v1791 = vlaneseq
        %v1792 = vshrl.u32 %v1791, 7
        %v1793 = vsub.s32 %v1790, %v1792
        %v1794 = vrot.slane %v1786, %v1793
        %v1796 = vunpack.c.l.s4 1934713408
        %v1797 = vunpack.c.0.s8 %v1796
        %v1798 = vlaneseq
        %v1799 = vshrl.u32 %v1798, 7
        %v1800 = vsub.s32 %v1797, %v1799
        %v1801 = vrot.slane %v1787, %v1800
        %v1802 = vcombine.low %v1746, %v1762
        %v1803 = vcombine.high %v1746, %v1762
        %v1805 = vunpack.c.l.s4 1934713408
        %v1806 = vunpack.c.0.s8 %v1805
        %v1807 = vlaneseq
        %v1808 = vshrl.u32 %v1807, 7
        %v1809 = vsub.s32 %v1806, %v1808
        %v1810 = vrot.slane %v1802, %v1809
        %v1812 = vunpack.c.l.s4 1934713408
        %v1813 = vunpack.c.0.s8 %v1812
        %v1814 = vlaneseq
        %v1815 = vshrl.u32 %v1814, 7
        %v1816 = vsub.s32 %v1813, %v1815
        %v1817 = vrot.slane %v1803, %v1816
        %v1818 = vcombine.low %v1753, %v1769
        %v1819 = vcombine.high %v1753, %v1769
        %v1821 = vunpack.c.l.s4 1934713408
        %v1822 = vunpack.c.0.s8 %v1821
        %v1823 = vlaneseq
        %v1824 = vshrl.u32 %v1823, 7
        %v1825 = vsub.s32 %v1822, %v1824
        %v1826 = vrot.slane %v1818, %v1825
        %v1828 = vunpack.c.l.s4 1934713408
        %v1829 = vunpack.c.0.s8 %v1828
        %v1830 = vlaneseq
        %v1831 = vshrl.u32 %v1830, 7
        %v1832 = vsub.s32 %v1829, %v1831
        %v1833 = vrot.slane %v1819, %v1832
        %v1834 = vcombine.low %v1778, %v1810
        %v1835 = vcombine.high %v1778, %v1810
        %v1836 = vcombine.low %v1785, %v1817
        %v1837 = vcombine.high %v1785, %v1817
        %v1838 = vcombine.low %v1794, %v1826
        %v1839 = vcombine.high %v1794, %v1826
        %v1840 = vcombine.low %v1801, %v1833
        %v1841 = vcombine.high %v1801, %v1833
        %v1842 = vcombine.low %v1031, %v1673
        %v1843 = vcombine.high %v1031, %v1673
        %v1845 = vunpack.c.l.s4 1983009808
        %v1846 = vunpack.c.0.s8 %v1845
        %v1847 = vlaneseq
        %v1848 = vshrl.u32 %v1847, 7
        %v1849 = vsub.s32 %v1846, %v1848
        %v1850 = vrot.slane %v1842, %v1849
        %v1852 = vunpack.c.l.s4 1983009808
        %v1853 = vunpack.c.0.s8 %v1852
        %v1854 = vlaneseq
        %v1855 = vshrl.u32 %v1854, 7
        %v1856 = vsub.s32 %v1853, %v1855
        %v1857 = vrot.slane %v1843, %v1856
        %v1858 = vcombine.low %v1667, %v1679
        %v1859 = vcombine.high %v1667, %v1679
        %v1861 = vunpack.c.l.s4 1983009808
        %v1862 = vunpack.c.0.s8 %v1861
        %v1863 = vlaneseq
        %v1864 = vshrl.u32 %v1863, 7
        %v1865 = vsub.s32 %v1862, %v1864
        %v1866 = vrot.slane %v1858, %v1865
        %v1868 = vunpack.c.l.s4 1983009808
        %v1869 = vunpack.c.0.s8 %v1868
        %v1870 = vlaneseq
        %v1871 = vshrl.u32 %v1870, 7
        %v1872 = vsub.s32 %v1869, %v1871
        %v1873 = vrot.slane %v1859, %v1872
        %v1874 = vcombine.low %v1685, %v1697
        %v1875 = vcombine.high %v1685, %v1697
        %v1877 = vunpack.c.l.s4 1983009808
        %v1878 = vunpack.c.0.s8 %v1877
        %v1879 = vlaneseq
        %v1880 = vshrl.u32 %v1879, 7
        %v1881 = vsub.s32 %v1878, %v1880
        %v1882 = vrot.slane %v1874, %v1881
        %v1884 = vunpack.c.l.s4 1983009808
        %v1885 = vunpack.c.0.s8 %v1884
        %v1886 = vlaneseq
        %v1887 = vshrl.u32 %v1886, 7
        %v1888 = vsub.s32 %v1885, %v1887
        %v1889 = vrot.slane %v1875, %v1888
        %v1890 = vcombine.low %v1691, %v1703
        %v1891 = vcombine.high %v1691, %v1703
        %v1893 = vunpack.c.l.s4 1983009808
        %v1894 = vunpack.c.0.s8 %v1893
        %v1895 = vlaneseq
        %v1896 = vshrl.u32 %v1895, 7
        %v1897 = vsub.s32 %v1894, %v1896
        %v1898 = vrot.slane %v1890, %v1897
        %v1900 = vunpack.c.l.s4 1983009808
        %v1901 = vunpack.c.0.s8 %v1900
        %v1902 = vlaneseq
        %v1903 = vshrl.u32 %v1902, 7
        %v1904 = vsub.s32 %v1901, %v1903
        %v1905 = vrot.slane %v1891, %v1904
        %v1906 = vcombine.low %v1850, %v1866
        %v1907 = vcombine.high %v1850, %v1866
        %v1909 = vunpack.c.l.s4 1934713408
        %v1910 = vunpack.c.0.s8 %v1909
        %v1911 = vlaneseq
        %v1912 = vshrl.u32 %v1911, 7
        %v1913 = vsub.s32 %v1910, %v1912
        %v1914 = vrot.slane %v1906, %v1913
        %v1916 = vunpack.c.l.s4 1934713408
        %v1917 = vunpack.c.0.s8 %v1916
        %v1918 = vlaneseq
        %v1919 = vshrl.u32 %v1918, 7
        %v1920 = vsub.s32 %v1917, %v1919
        %v1921 = vrot.slane %v1907, %v1920
        %v1922 = vcombine.low %v1857, %v1873
        %v1923 = vcombine.high %v1857, %v1873
        %v1925 = vunpack.c.l.s4 1934713408
        %v1926 = vunpack.c.0.s8 %v1925
        %v1927 = vlaneseq
        %v1928 = vshrl.u32 %v1927, 7
        %v1929 = vsub.s32 %v1926, %v1928
        %v1930 = vrot.slane %v1922, %v1929
        %v1932 = vunpack.c.l.s4 1934713408
        %v1933 = vunpack.c.0.s8 %v1932
        %v1934 = vlaneseq
        %v1935 = vshrl.u32 %v1934, 7
        %v1936 = vsub.s32 %v1933, %v1935
        %v1937 = vrot.slane %v1923, %v1936
        %v1938 = vcombine.low %v1882, %v1898
        %v1939 = vcombine.high %v1882, %v1898
        %v1941 = vunpack.c.l.s4 1934713408
        %v1942 = vunpack.c.0.s8 %v1941
        %v1943 = vlaneseq
        %v1944 = vshrl.u32 %v1943, 7
        %v1945 = vsub.s32 %v1942, %v1944
        %v1946 = vrot.slane %v1938, %v1945
        %v1948 = vunpack.c.l.s4 1934713408
        %v1949 = vunpack.c.0.s8 %v1948
        %v1950 = vlaneseq
        %v1951 = vshrl.u32 %v1950, 7
        %v1952 = vsub.s32 %v1949, %v1951
        %v1953 = vrot.slane %v1939, %v1952
        %v1954 = vcombine.low %v1889, %v1905
        %v1955 = vcombine.high %v1889, %v1905
        %v1957 = vunpack.c.l.s4 1934713408
        %v1958 = vunpack.c.0.s8 %v1957
        %v1959 = vlaneseq
        %v1960 = vshrl.u32 %v1959, 7
        %v1961 = vsub.s32 %v1958, %v1960
        %v1962 = vrot.slane %v1954, %v1961
        %v1964 = vunpack.c.l.s4 1934713408
        %v1965 = vunpack.c.0.s8 %v1964
        %v1966 = vlaneseq
        %v1967 = vshrl.u32 %v1966, 7
        %v1968 = vsub.s32 %v1965, %v1967
        %v1969 = vrot.slane %v1955, %v1968
        %v1970 = vcombine.low %v1914, %v1946
        %v1971 = vcombine.high %v1914, %v1946
        %v1972 = vcombine.low %v1921, %v1953
        %v1973 = vcombine.high %v1921, %v1953
        %v1974 = vcombine.low %v1930, %v1962
        %v1975 = vcombine.high %v1930, %v1962
        %v1976 = vcombine.low %v1937, %v1969
        %v1977 = vcombine.high %v1937, %v1969
        %v1978 = vcombine.low %v1834, %v1836
        %v1979 = vcombine.high %v1834, %v1836
        %v1981 = vunpack.c.l.s4 1983009808
        %v1982 = vunpack.c.0.s8 %v1981
        %v1983 = vlaneseq
        %v1984 = vshrl.u32 %v1983, 7
        %v1985 = vsub.s32 %v1982, %v1984
        %v1986 = vrot.slane %v1978, %v1985
        %v1988 = vunpack.c.l.s4 1983009808
        %v1989 = vunpack.c.0.s8 %v1988
        %v1990 = vlaneseq
        %v1991 = vshrl.u32 %v1990, 7
        %v1992 = vsub.s32 %v1989, %v1991
        %v1993 = vrot.slane %v1979, %v1992
        %v1994 = vcombine.low %v1835, %v1837
        %v1995 = vcombine.high %v1835, %v1837
        %v1997 = vunpack.c.l.s4 1983009808
        %v1998 = vunpack.c.0.s8 %v1997
        %v1999 = vlaneseq
        %v2000 = vshrl.u32 %v1999, 7
        %v2001 = vsub.s32 %v1998, %v2000
        %v2002 = vrot.slane %v1994, %v2001
        %v2004 = vunpack.c.l.s4 1983009808
        %v2005 = vunpack.c.0.s8 %v2004
        %v2006 = vlaneseq
        %v2007 = vshrl.u32 %v2006, 7
        %v2008 = vsub.s32 %v2005, %v2007
        %v2009 = vrot.slane %v1995, %v2008
        %v2010 = vcombine.low %v1838, %v1840
        %v2011 = vcombine.high %v1838, %v1840
        %v2013 = vunpack.c.l.s4 1983009808
        %v2014 = vunpack.c.0.s8 %v2013
        %v2015 = vlaneseq
        %v2016 = vshrl.u32 %v2015, 7
        %v2017 = vsub.s32 %v2014, %v2016
        %v2018 = vrot.slane %v2010, %v2017
        %v2020 = vunpack.c.l.s4 1983009808
        %v2021 = vunpack.c.0.s8 %v2020
        %v2022 = vlaneseq
        %v2023 = vshrl.u32 %v2022, 7
        %v2024 = vsub.s32 %v2021, %v2023
        %v2025 = vrot.slane %v2011, %v2024
        %v2026 = vcombine.low %v1839, %v1841
        %v2027 = vcombine.high %v1839, %v1841
        %v2029 = vunpack.c.l.s4 1983009808
        %v2030 = vunpack.c.0.s8 %v2029
        %v2031 = vlaneseq
        %v2032 = vshrl.u32 %v2031, 7
        %v2033 = vsub.s32 %v2030, %v2032
        %v2034 = vrot.slane %v2026, %v2033
        %v2036 = vunpack.c.l.s4 1983009808
        %v2037 = vunpack.c.0.s8 %v2036
        %v2038 = vlaneseq
        %v2039 = vshrl.u32 %v2038, 7
        %v2040 = vsub.s32 %v2037, %v2039
        %v2041 = vrot.slane %v2027, %v2040
        %v2042 = vcombine.low %v1986, %v2002
        %v2043 = vcombine.high %v1986, %v2002
        %v2045 = vunpack.c.l.s4 1934713408
        %v2046 = vunpack.c.0.s8 %v2045
        %v2047 = vlaneseq
        %v2048 = vshrl.u32 %v2047, 7
        %v2049 = vsub.s32 %v2046, %v2048
        %v2050 = vrot.slane %v2042, %v2049
        %v2052 = vunpack.c.l.s4 1934713408
        %v2053 = vunpack.c.0.s8 %v2052
        %v2054 = vlaneseq
        %v2055 = vshrl.u32 %v2054, 7
        %v2056 = vsub.s32 %v2053, %v2055
        %v2057 = vrot.slane %v2043, %v2056
        %v2058 = vcombine.low %v1993, %v2009
        %v2059 = vcombine.high %v1993, %v2009
        %v2061 = vunpack.c.l.s4 1934713408
        %v2062 = vunpack.c.0.s8 %v2061
        %v2063 = vlaneseq
        %v2064 = vshrl.u32 %v2063, 7
        %v2065 = vsub.s32 %v2062, %v2064
        %v2066 = vrot.slane %v2058, %v2065
        %v2068 = vunpack.c.l.s4 1934713408
        %v2069 = vunpack.c.0.s8 %v2068
        %v2070 = vlaneseq
        %v2071 = vshrl.u32 %v2070, 7
        %v2072 = vsub.s32 %v2069, %v2071
        %v2073 = vrot.slane %v2059, %v2072
        %v2074 = vcombine.low %v2018, %v2034
        %v2075 = vcombine.high %v2018, %v2034
        %v2077 = vunpack.c.l.s4 1934713408
        %v2078 = vunpack.c.0.s8 %v2077
        %v2079 = vlaneseq
        %v2080 = vshrl.u32 %v2079, 7
        %v2081 = vsub.s32 %v2078, %v2080
        %v2082 = vrot.slane %v2074, %v2081
        %v2084 = vunpack.c.l.s4 1934713408
        %v2085 = vunpack.c.0.s8 %v2084
        %v2086 = vlaneseq
        %v2087 = vshrl.u32 %v2086, 7
        %v2088 = vsub.s32 %v2085, %v2087
        %v2089 = vrot.slane %v2075, %v2088
        %v2090 = vcombine.low %v2025, %v2041
        %v2091 = vcombine.high %v2025, %v2041
        %v2093 = vunpack.c.l.s4 1934713408
        %v2094 = vunpack.c.0.s8 %v2093
        %v2095 = vlaneseq
        %v2096 = vshrl.u32 %v2095, 7
        %v2097 = vsub.s32 %v2094, %v2096
        %v2098 = vrot.slane %v2090, %v2097
        %v2100 = vunpack.c.l.s4 1934713408
        %v2101 = vunpack.c.0.s8 %v2100
        %v2102 = vlaneseq
        %v2103 = vshrl.u32 %v2102, 7
        %v2104 = vsub.s32 %v2101, %v2103
        %v2105 = vrot.slane %v2091, %v2104
        %v2106 = vcombine.low %v2050, %v2082
        %v2107 = vcombine.high %v2050, %v2082
        %v2108 = vcombine.low %v2057, %v2089
        %v2109 = vcombine.high %v2057, %v2089
        %v2110 = vcombine.low %v2066, %v2098
        %v2111 = vcombine.high %v2066, %v2098
        %v2112 = vcombine.low %v2073, %v2105
        %v2113 = vcombine.high %v2073, %v2105
        %v2114 = vcombine.low %v1970, %v1972
        %v2115 = vcombine.high %v1970, %v1972
        %v2117 = vunpack.c.l.s4 1983009808
        %v2118 = vunpack.c.0.s8 %v2117
        %v2119 = vlaneseq
        %v2120 = vshrl.u32 %v2119, 7
        %v2121 = vsub.s32 %v2118, %v2120
        %v2122 = vrot.slane %v2114, %v2121
        %v2124 = vunpack.c.l.s4 1983009808
        %v2125 = vunpack.c.0.s8 %v2124
        %v2126 = vlaneseq
        %v2127 = vshrl.u32 %v2126, 7
        %v2128 = vsub.s32 %v2125, %v2127
        %v2129 = vrot.slane %v2115, %v2128
        %v2130 = vcombine.low %v1971, %v1973
        %v2131 = vcombine.high %v1971, %v1973
        %v2133 = vunpack.c.l.s4 1983009808
        %v2134 = vunpack.c.0.s8 %v2133
        %v2135 = vlaneseq
        %v2136 = vshrl.u32 %v2135, 7
        %v2137 = vsub.s32 %v2134, %v2136
        %v2138 = vrot.slane %v2130, %v2137
        %v2140 = vunpack.c.l.s4 1983009808
        %v2141 = vunpack.c.0.s8 %v2140
        %v2142 = vlaneseq
        %v2143 = vshrl.u32 %v2142, 7
        %v2144 = vsub.s32 %v2141, %v2143
        %v2145 = vrot.slane %v2131, %v2144
        %v2146 = vcombine.low %v1974, %v1976
        %v2147 = vcombine.high %v1974, %v1976
        %v2149 = vunpack.c.l.s4 1983009808
        %v2150 = vunpack.c.0.s8 %v2149
        %v2151 = vlaneseq
        %v2152 = vshrl.u32 %v2151, 7
        %v2153 = vsub.s32 %v2150, %v2152
        %v2154 = vrot.slane %v2146, %v2153
        %v2156 = vunpack.c.l.s4 1983009808
        %v2157 = vunpack.c.0.s8 %v2156
        %v2158 = vlaneseq
        %v2159 = vshrl.u32 %v2158, 7
        %v2160 = vsub.s32 %v2157, %v2159
        %v2161 = vrot.slane %v2147, %v2160
        %v2162 = vcombine.low %v1975, %v1977
        %v2163 = vcombine.high %v1975, %v1977
        %v2165 = vunpack.c.l.s4 1983009808
        %v2166 = vunpack.c.0.s8 %v2165
        %v2167 = vlaneseq
        %v2168 = vshrl.u32 %v2167, 7
        %v2169 = vsub.s32 %v2166, %v2168
        %v2170 = vrot.slane %v2162, %v2169
        %v2172 = vunpack.c.l.s4 1983009808
        %v2173 = vunpack.c.0.s8 %v2172
        %v2174 = vlaneseq
        %v2175 = vshrl.u32 %v2174, 7
        %v2176 = vsub.s32 %v2173, %v2175
        %v2177 = vrot.slane %v2163, %v2176
        %v2178 = vcombine.low %v2122, %v2138
        %v2179 = vcombine.high %v2122, %v2138
        %v2181 = vunpack.c.l.s4 1934713408
        %v2182 = vunpack.c.0.s8 %v2181
        %v2183 = vlaneseq
        %v2184 = vshrl.u32 %v2183, 7
        %v2185 = vsub.s32 %v2182, %v2184
        %v2186 = vrot.slane %v2178, %v2185
        %v2188 = vunpack.c.l.s4 1934713408
        %v2189 = vunpack.c.0.s8 %v2188
        %v2190 = vlaneseq
        %v2191 = vshrl.u32 %v2190, 7
        %v2192 = vsub.s32 %v2189, %v2191
        %v2193 = vrot.slane %v2179, %v2192
        %v2194 = vcombine.low %v2129, %v2145
        %v2195 = vcombine.high %v2129, %v2145
        %v2197 = vunpack.c.l.s4 1934713408
        %v2198 = vunpack.c.0.s8 %v2197
        %v2199 = vlaneseq
        %v2200 = vshrl.u32 %v2199, 7
        %v2201 = vsub.s32 %v2198, %v2200
        %v2202 = vrot.slane %v2194, %v2201
        %v2204 = vunpack.c.l.s4 1934713408
        %v2205 = vunpack.c.0.s8 %v2204
        %v2206 = vlaneseq
        %v2207 = vshrl.u32 %v2206, 7
        %v2208 = vsub.s32 %v2205, %v2207
        %v2209 = vrot.slane %v2195, %v2208
        %v2210 = vcombine.low %v2154, %v2170
        %v2211 = vcombine.high %v2154, %v2170
        %v2213 = vunpack.c.l.s4 1934713408
        %v2214 = vunpack.c.0.s8 %v2213
        %v2215 = vlaneseq
        %v2216 = vshrl.u32 %v2215, 7
        %v2217 = vsub.s32 %v2214, %v2216
        %v2218 = vrot.slane %v2210, %v2217
        %v2220 = vunpack.c.l.s4 1934713408
        %v2221 = vunpack.c.0.s8 %v2220
        %v2222 = vlaneseq
        %v2223 = vshrl.u32 %v2222, 7
        %v2224 = vsub.s32 %v2221, %v2223
        %v2225 = vrot.slane %v2211, %v2224
        %v2226 = vcombine.low %v2161, %v2177
        %v2227 = vcombine.high %v2161, %v2177
        %v2229 = vunpack.c.l.s4 1934713408
        %v2230 = vunpack.c.0.s8 %v2229
        %v2231 = vlaneseq
        %v2232 = vshrl.u32 %v2231, 7
        %v2233 = vsub.s32 %v2230, %v2232
        %v2234 = vrot.slane %v2226, %v2233
        %v2236 = vunpack.c.l.s4 1934713408
        %v2237 = vunpack.c.0.s8 %v2236
        %v2238 = vlaneseq
        %v2239 = vshrl.u32 %v2238, 7
        %v2240 = vsub.s32 %v2237, %v2239
        %v2241 = vrot.slane %v2227, %v2240
        %v2242 = vcombine.low %v2186, %v2218
        %v2243 = vcombine.high %v2186, %v2218
        %v2244 = vcombine.low %v2193, %v2225
        %v2245 = vcombine.high %v2193, %v2225
        %v2246 = vcombine.low %v2202, %v2234
        %v2247 = vcombine.high %v2202, %v2234
        %v2248 = vcombine.low %v2209, %v2241
        %v2249 = vcombine.high %v2209, %v2241
        %2252 = vrot.lane.b32.xlu0 %v1068, 112
        %v2253 = vpop.permute.xlu0 %2252
        %2254 = vrot.lane.b32.xlu0 %v1071, 112
        %v2255 = vpop.permute.xlu0 %2254
        %2258 = vrot.lane.b32.xlu0 %v1068, 96
        %v2259 = vpop.permute.xlu0 %2258
        %2260 = vrot.lane.b32.xlu0 %v1071, 96
        %v2261 = vpop.permute.xlu0 %2260
        %2264 = vrot.lane.b32.xlu0 %v1068, 80
        %v2265 = vpop.permute.xlu0 %2264
        %2266 = vrot.lane.b32.xlu0 %v1071, 80
        %v2267 = vpop.permute.xlu0 %2266
        %2270 = vrot.lane.b32.xlu0 %v1068, 64
        %v2271 = vpop.permute.xlu0 %2270
        %2272 = vrot.lane.b32.xlu0 %v1071, 64
        %v2273 = vpop.permute.xlu0 %2272
        %2276 = vrot.lane.b32.xlu0 %v1068, 48
        %v2277 = vpop.permute.xlu0 %2276
        %2278 = vrot.lane.b32.xlu0 %v1071, 48
        %v2279 = vpop.permute.xlu0 %2278
        %2282 = vrot.lane.b32.xlu0 %v1068, 32
        %v2283 = vpop.permute.xlu0 %2282
        %2284 = vrot.lane.b32.xlu0 %v1071, 32
        %v2285 = vpop.permute.xlu0 %2284
        %2288 = vrot.lane.b32.xlu0 %v1068, 16
        %v2289 = vpop.permute.xlu0 %2288
        %2290 = vrot.lane.b32.xlu0 %v1071, 16
        %v2291 = vpop.permute.xlu0 %2290
        %v2294 = vcombine.low %v1068, %v2259
        %v2295 = vcombine.high %v1068, %v2259
        %v2297 = vunpack.c.l.s4 1983009808
        %v2298 = vunpack.c.0.s8 %v2297
        %v2299 = vlaneseq
        %v2300 = vshrl.u32 %v2299, 7
        %v2301 = vsub.s32 %v2298, %v2300
        %v2302 = vrot.slane %v2294, %v2301
        %v2304 = vunpack.c.l.s4 1983009808
        %v2305 = vunpack.c.0.s8 %v2304
        %v2306 = vlaneseq
        %v2307 = vshrl.u32 %v2306, 7
        %v2308 = vsub.s32 %v2305, %v2307
        %v2309 = vrot.slane %v2295, %v2308
        %v2310 = vcombine.low %v2253, %v2265
        %v2311 = vcombine.high %v2253, %v2265
        %v2313 = vunpack.c.l.s4 1983009808
        %v2314 = vunpack.c.0.s8 %v2313
        %v2315 = vlaneseq
        %v2316 = vshrl.u32 %v2315, 7
        %v2317 = vsub.s32 %v2314, %v2316
        %v2318 = vrot.slane %v2310, %v2317
        %v2320 = vunpack.c.l.s4 1983009808
        %v2321 = vunpack.c.0.s8 %v2320
        %v2322 = vlaneseq
        %v2323 = vshrl.u32 %v2322, 7
        %v2324 = vsub.s32 %v2321, %v2323
        %v2325 = vrot.slane %v2311, %v2324
        %v2326 = vcombine.low %v2271, %v2283
        %v2327 = vcombine.high %v2271, %v2283
        %v2329 = vunpack.c.l.s4 1983009808
        %v2330 = vunpack.c.0.s8 %v2329
        %v2331 = vlaneseq
        %v2332 = vshrl.u32 %v2331, 7
        %v2333 = vsub.s32 %v2330, %v2332
        %v2334 = vrot.slane %v2326, %v2333
        %v2336 = vunpack.c.l.s4 1983009808
        %v2337 = vunpack.c.0.s8 %v2336
        %v2338 = vlaneseq
        %v2339 = vshrl.u32 %v2338, 7
        %v2340 = vsub.s32 %v2337, %v2339
        %v2341 = vrot.slane %v2327, %v2340
        %v2342 = vcombine.low %v2277, %v2289
        %v2343 = vcombine.high %v2277, %v2289
        %v2345 = vunpack.c.l.s4 1983009808
        %v2346 = vunpack.c.0.s8 %v2345
        %v2347 = vlaneseq
        %v2348 = vshrl.u32 %v2347, 7
        %v2349 = vsub.s32 %v2346, %v2348
        %v2350 = vrot.slane %v2342, %v2349
        %v2352 = vunpack.c.l.s4 1983009808
        %v2353 = vunpack.c.0.s8 %v2352
        %v2354 = vlaneseq
        %v2355 = vshrl.u32 %v2354, 7
        %v2356 = vsub.s32 %v2353, %v2355
        %v2357 = vrot.slane %v2343, %v2356
        %v2358 = vcombine.low %v2302, %v2318
        %v2359 = vcombine.high %v2302, %v2318
        %v2361 = vunpack.c.l.s4 1934713408
        %v2362 = vunpack.c.0.s8 %v2361
        %v2363 = vlaneseq
        %v2364 = vshrl.u32 %v2363, 7
        %v2365 = vsub.s32 %v2362, %v2364
        %v2366 = vrot.slane %v2358, %v2365
        %v2368 = vunpack.c.l.s4 1934713408
        %v2369 = vunpack.c.0.s8 %v2368
        %v2370 = vlaneseq
        %v2371 = vshrl.u32 %v2370, 7
        %v2372 = vsub.s32 %v2369, %v2371
        %v2373 = vrot.slane %v2359, %v2372
        %v2374 = vcombine.low %v2309, %v2325
        %v2375 = vcombine.high %v2309, %v2325
        %v2377 = vunpack.c.l.s4 1934713408
        %v2378 = vunpack.c.0.s8 %v2377
        %v2379 = vlaneseq
        %v2380 = vshrl.u32 %v2379, 7
        %v2381 = vsub.s32 %v2378, %v2380
        %v2382 = vrot.slane %v2374, %v2381
        %v2384 = vunpack.c.l.s4 1934713408
        %v2385 = vunpack.c.0.s8 %v2384
        %v2386 = vlaneseq
        %v2387 = vshrl.u32 %v2386, 7
        %v2388 = vsub.s32 %v2385, %v2387
        %v2389 = vrot.slane %v2375, %v2388
        %v2390 = vcombine.low %v2334, %v2350
        %v2391 = vcombine.high %v2334, %v2350
        %v2393 = vunpack.c.l.s4 1934713408
        %v2394 = vunpack.c.0.s8 %v2393
        %v2395 = vlaneseq
        %v2396 = vshrl.u32 %v2395, 7
        %v2397 = vsub.s32 %v2394, %v2396
        %v2398 = vrot.slane %v2390, %v2397
        %v2400 = vunpack.c.l.s4 1934713408
        %v2401 = vunpack.c.0.s8 %v2400
        %v2402 = vlaneseq
        %v2403 = vshrl.u32 %v2402, 7
        %v2404 = vsub.s32 %v2401, %v2403
        %v2405 = vrot.slane %v2391, %v2404
        %v2406 = vcombine.low %v2341, %v2357
        %v2407 = vcombine.high %v2341, %v2357
        %v2409 = vunpack.c.l.s4 1934713408
        %v2410 = vunpack.c.0.s8 %v2409
        %v2411 = vlaneseq
        %v2412 = vshrl.u32 %v2411, 7
        %v2413 = vsub.s32 %v2410, %v2412
        %v2414 = vrot.slane %v2406, %v2413
        %v2416 = vunpack.c.l.s4 1934713408
        %v2417 = vunpack.c.0.s8 %v2416
        %v2418 = vlaneseq
        %v2419 = vshrl.u32 %v2418, 7
        %v2420 = vsub.s32 %v2417, %v2419
        %v2421 = vrot.slane %v2407, %v2420
        %v2422 = vcombine.low %v2366, %v2398
        %v2423 = vcombine.high %v2366, %v2398
        %v2424 = vcombine.low %v2373, %v2405
        %v2425 = vcombine.high %v2373, %v2405
        %v2426 = vcombine.low %v2382, %v2414
        %v2427 = vcombine.high %v2382, %v2414
        %v2428 = vcombine.low %v2389, %v2421
        %v2429 = vcombine.high %v2389, %v2421
        %v2430 = vcombine.low %v1071, %v2261
        %v2431 = vcombine.high %v1071, %v2261
        %v2433 = vunpack.c.l.s4 1983009808
        %v2434 = vunpack.c.0.s8 %v2433
        %v2435 = vlaneseq
        %v2436 = vshrl.u32 %v2435, 7
        %v2437 = vsub.s32 %v2434, %v2436
        %v2438 = vrot.slane %v2430, %v2437
        %v2440 = vunpack.c.l.s4 1983009808
        %v2441 = vunpack.c.0.s8 %v2440
        %v2442 = vlaneseq
        %v2443 = vshrl.u32 %v2442, 7
        %v2444 = vsub.s32 %v2441, %v2443
        %v2445 = vrot.slane %v2431, %v2444
        %v2446 = vcombine.low %v2255, %v2267
        %v2447 = vcombine.high %v2255, %v2267
        %v2449 = vunpack.c.l.s4 1983009808
        %v2450 = vunpack.c.0.s8 %v2449
        %v2451 = vlaneseq
        %v2452 = vshrl.u32 %v2451, 7
        %v2453 = vsub.s32 %v2450, %v2452
        %v2454 = vrot.slane %v2446, %v2453
        %v2456 = vunpack.c.l.s4 1983009808
        %v2457 = vunpack.c.0.s8 %v2456
        %v2458 = vlaneseq
        %v2459 = vshrl.u32 %v2458, 7
        %v2460 = vsub.s32 %v2457, %v2459
        %v2461 = vrot.slane %v2447, %v2460
        %v2462 = vcombine.low %v2273, %v2285
        %v2463 = vcombine.high %v2273, %v2285
        %v2465 = vunpack.c.l.s4 1983009808
        %v2466 = vunpack.c.0.s8 %v2465
        %v2467 = vlaneseq
        %v2468 = vshrl.u32 %v2467, 7
        %v2469 = vsub.s32 %v2466, %v2468
        %v2470 = vrot.slane %v2462, %v2469
        %v2472 = vunpack.c.l.s4 1983009808
        %v2473 = vunpack.c.0.s8 %v2472
        %v2474 = vlaneseq
        %v2475 = vshrl.u32 %v2474, 7
        %v2476 = vsub.s32 %v2473, %v2475
        %v2477 = vrot.slane %v2463, %v2476
        %v2478 = vcombine.low %v2279, %v2291
        %v2479 = vcombine.high %v2279, %v2291
        %v2481 = vunpack.c.l.s4 1983009808
        %v2482 = vunpack.c.0.s8 %v2481
        %v2483 = vlaneseq
        %v2484 = vshrl.u32 %v2483, 7
        %v2485 = vsub.s32 %v2482, %v2484
        %v2486 = vrot.slane %v2478, %v2485
        %v2488 = vunpack.c.l.s4 1983009808
        %v2489 = vunpack.c.0.s8 %v2488
        %v2490 = vlaneseq
        %v2491 = vshrl.u32 %v2490, 7
        %v2492 = vsub.s32 %v2489, %v2491
        %v2493 = vrot.slane %v2479, %v2492
        %v2494 = vcombine.low %v2438, %v2454
        %v2495 = vcombine.high %v2438, %v2454
        %v2497 = vunpack.c.l.s4 1934713408
        %v2498 = vunpack.c.0.s8 %v2497
        %v2499 = vlaneseq
        %v2500 = vshrl.u32 %v2499, 7
        %v2501 = vsub.s32 %v2498, %v2500
        %v2502 = vrot.slane %v2494, %v2501
        %v2504 = vunpack.c.l.s4 1934713408
        %v2505 = vunpack.c.0.s8 %v2504
        %v2506 = vlaneseq
        %v2507 = vshrl.u32 %v2506, 7
        %v2508 = vsub.s32 %v2505, %v2507
        %v2509 = vrot.slane %v2495, %v2508
        %v2510 = vcombine.low %v2445, %v2461
        %v2511 = vcombine.high %v2445, %v2461
        %v2513 = vunpack.c.l.s4 1934713408
        %v2514 = vunpack.c.0.s8 %v2513
        %v2515 = vlaneseq
        %v2516 = vshrl.u32 %v2515, 7
        %v2517 = vsub.s32 %v2514, %v2516
        %v2518 = vrot.slane %v2510, %v2517
        %v2520 = vunpack.c.l.s4 1934713408
        %v2521 = vunpack.c.0.s8 %v2520
        %v2522 = vlaneseq
        %v2523 = vshrl.u32 %v2522, 7
        %v2524 = vsub.s32 %v2521, %v2523
        %v2525 = vrot.slane %v2511, %v2524
        %v2526 = vcombine.low %v2470, %v2486
        %v2527 = vcombine.high %v2470, %v2486
        %v2529 = vunpack.c.l.s4 1934713408
        %v2530 = vunpack.c.0.s8 %v2529
        %v2531 = vlaneseq
        %v2532 = vshrl.u32 %v2531, 7
        %v2533 = vsub.s32 %v2530, %v2532
        %v2534 = vrot.slane %v2526, %v2533
        %v2536 = vunpack.c.l.s4 1934713408
        %v2537 = vunpack.c.0.s8 %v2536
        %v2538 = vlaneseq
        %v2539 = vshrl.u32 %v2538, 7
        %v2540 = vsub.s32 %v2537, %v2539
        %v2541 = vrot.slane %v2527, %v2540
        %v2542 = vcombine.low %v2477, %v2493
        %v2543 = vcombine.high %v2477, %v2493
        %v2545 = vunpack.c.l.s4 1934713408
        %v2546 = vunpack.c.0.s8 %v2545
        %v2547 = vlaneseq
        %v2548 = vshrl.u32 %v2547, 7
        %v2549 = vsub.s32 %v2546, %v2548
        %v2550 = vrot.slane %v2542, %v2549
        %v2552 = vunpack.c.l.s4 1934713408
        %v2553 = vunpack.c.0.s8 %v2552
        %v2554 = vlaneseq
        %v2555 = vshrl.u32 %v2554, 7
        %v2556 = vsub.s32 %v2553, %v2555
        %v2557 = vrot.slane %v2543, %v2556
        %v2558 = vcombine.low %v2502, %v2534
        %v2559 = vcombine.high %v2502, %v2534
        %v2560 = vcombine.low %v2509, %v2541
        %v2561 = vcombine.high %v2509, %v2541
        %v2562 = vcombine.low %v2518, %v2550
        %v2563 = vcombine.high %v2518, %v2550
        %v2564 = vcombine.low %v2525, %v2557
        %v2565 = vcombine.high %v2525, %v2557
        %v2566 = vcombine.low %v2422, %v2424
        %v2567 = vcombine.high %v2422, %v2424
        %v2569 = vunpack.c.l.s4 1983009808
        %v2570 = vunpack.c.0.s8 %v2569
        %v2571 = vlaneseq
        %v2572 = vshrl.u32 %v2571, 7
        %v2573 = vsub.s32 %v2570, %v2572
        %v2574 = vrot.slane %v2566, %v2573
        %v2576 = vunpack.c.l.s4 1983009808
        %v2577 = vunpack.c.0.s8 %v2576
        %v2578 = vlaneseq
        %v2579 = vshrl.u32 %v2578, 7
        %v2580 = vsub.s32 %v2577, %v2579
        %v2581 = vrot.slane %v2567, %v2580
        %v2582 = vcombine.low %v2423, %v2425
        %v2583 = vcombine.high %v2423, %v2425
        %v2585 = vunpack.c.l.s4 1983009808
        %v2586 = vunpack.c.0.s8 %v2585
        %v2587 = vlaneseq
        %v2588 = vshrl.u32 %v2587, 7
        %v2589 = vsub.s32 %v2586, %v2588
        %v2590 = vrot.slane %v2582, %v2589
        %v2592 = vunpack.c.l.s4 1983009808
        %v2593 = vunpack.c.0.s8 %v2592
        %v2594 = vlaneseq
        %v2595 = vshrl.u32 %v2594, 7
        %v2596 = vsub.s32 %v2593, %v2595
        %v2597 = vrot.slane %v2583, %v2596
        %v2598 = vcombine.low %v2426, %v2428
        %v2599 = vcombine.high %v2426, %v2428
        %v2601 = vunpack.c.l.s4 1983009808
        %v2602 = vunpack.c.0.s8 %v2601
        %v2603 = vlaneseq
        %v2604 = vshrl.u32 %v2603, 7
        %v2605 = vsub.s32 %v2602, %v2604
        %v2606 = vrot.slane %v2598, %v2605
        %v2608 = vunpack.c.l.s4 1983009808
        %v2609 = vunpack.c.0.s8 %v2608
        %v2610 = vlaneseq
        %v2611 = vshrl.u32 %v2610, 7
        %v2612 = vsub.s32 %v2609, %v2611
        %v2613 = vrot.slane %v2599, %v2612
        %v2614 = vcombine.low %v2427, %v2429
        %v2615 = vcombine.high %v2427, %v2429
        %v2617 = vunpack.c.l.s4 1983009808
        %v2618 = vunpack.c.0.s8 %v2617
        %v2619 = vlaneseq
        %v2620 = vshrl.u32 %v2619, 7
        %v2621 = vsub.s32 %v2618, %v2620
        %v2622 = vrot.slane %v2614, %v2621
        %v2624 = vunpack.c.l.s4 1983009808
        %v2625 = vunpack.c.0.s8 %v2624
        %v2626 = vlaneseq
        %v2627 = vshrl.u32 %v2626, 7
        %v2628 = vsub.s32 %v2625, %v2627
        %v2629 = vrot.slane %v2615, %v2628
        %v2630 = vcombine.low %v2574, %v2590
        %v2631 = vcombine.high %v2574, %v2590
        %v2633 = vunpack.c.l.s4 1934713408
        %v2634 = vunpack.c.0.s8 %v2633
        %v2635 = vlaneseq
        %v2636 = vshrl.u32 %v2635, 7
        %v2637 = vsub.s32 %v2634, %v2636
        %v2638 = vrot.slane %v2630, %v2637
        %v2640 = vunpack.c.l.s4 1934713408
        %v2641 = vunpack.c.0.s8 %v2640
        %v2642 = vlaneseq
        %v2643 = vshrl.u32 %v2642, 7
        %v2644 = vsub.s32 %v2641, %v2643
        %v2645 = vrot.slane %v2631, %v2644
        %v2646 = vcombine.low %v2581, %v2597
        %v2647 = vcombine.high %v2581, %v2597
        %v2649 = vunpack.c.l.s4 1934713408
        %v2650 = vunpack.c.0.s8 %v2649
        %v2651 = vlaneseq
        %v2652 = vshrl.u32 %v2651, 7
        %v2653 = vsub.s32 %v2650, %v2652
        %v2654 = vrot.slane %v2646, %v2653
        %v2656 = vunpack.c.l.s4 1934713408
        %v2657 = vunpack.c.0.s8 %v2656
        %v2658 = vlaneseq
        %v2659 = vshrl.u32 %v2658, 7
        %v2660 = vsub.s32 %v2657, %v2659
        %v2661 = vrot.slane %v2647, %v2660
        %v2662 = vcombine.low %v2606, %v2622
        %v2663 = vcombine.high %v2606, %v2622
        %v2665 = vunpack.c.l.s4 1934713408
        %v2666 = vunpack.c.0.s8 %v2665
        %v2667 = vlaneseq
        %v2668 = vshrl.u32 %v2667, 7
        %v2669 = vsub.s32 %v2666, %v2668
        %v2670 = vrot.slane %v2662, %v2669
        %v2672 = vunpack.c.l.s4 1934713408
        %v2673 = vunpack.c.0.s8 %v2672
        %v2674 = vlaneseq
        %v2675 = vshrl.u32 %v2674, 7
        %v2676 = vsub.s32 %v2673, %v2675
        %v2677 = vrot.slane %v2663, %v2676
        %v2678 = vcombine.low %v2613, %v2629
        %v2679 = vcombine.high %v2613, %v2629
        %v2681 = vunpack.c.l.s4 1934713408
        %v2682 = vunpack.c.0.s8 %v2681
        %v2683 = vlaneseq
        %v2684 = vshrl.u32 %v2683, 7
        %v2685 = vsub.s32 %v2682, %v2684
        %v2686 = vrot.slane %v2678, %v2685
        %v2688 = vunpack.c.l.s4 1934713408
        %v2689 = vunpack.c.0.s8 %v2688
        %v2690 = vlaneseq
        %v2691 = vshrl.u32 %v2690, 7
        %v2692 = vsub.s32 %v2689, %v2691
        %v2693 = vrot.slane %v2679, %v2692
        %v2694 = vcombine.low %v2638, %v2670
        %v2695 = vcombine.high %v2638, %v2670
        %v2696 = vcombine.low %v2645, %v2677
        %v2697 = vcombine.high %v2645, %v2677
        %v2698 = vcombine.low %v2654, %v2686
        %v2699 = vcombine.high %v2654, %v2686
        %v2700 = vcombine.low %v2661, %v2693
        %v2701 = vcombine.high %v2661, %v2693
        %v2702 = vcombine.low %v2558, %v2560
        %v2703 = vcombine.high %v2558, %v2560
        %v2705 = vunpack.c.l.s4 1983009808
        %v2706 = vunpack.c.0.s8 %v2705
        %v2707 = vlaneseq
        %v2708 = vshrl.u32 %v2707, 7
        %v2709 = vsub.s32 %v2706, %v2708
        %v2710 = vrot.slane %v2702, %v2709
        %v2712 = vunpack.c.l.s4 1983009808
        %v2713 = vunpack.c.0.s8 %v2712
        %v2714 = vlaneseq
        %v2715 = vshrl.u32 %v2714, 7
        %v2716 = vsub.s32 %v2713, %v2715
        %v2717 = vrot.slane %v2703, %v2716
        %v2718 = vcombine.low %v2559, %v2561
        %v2719 = vcombine.high %v2559, %v2561
        %v2721 = vunpack.c.l.s4 1983009808
        %v2722 = vunpack.c.0.s8 %v2721
        %v2723 = vlaneseq
        %v2724 = vshrl.u32 %v2723, 7
        %v2725 = vsub.s32 %v2722, %v2724
        %v2726 = vrot.slane %v2718, %v2725
        %v2728 = vunpack.c.l.s4 1983009808
        %v2729 = vunpack.c.0.s8 %v2728
        %v2730 = vlaneseq
        %v2731 = vshrl.u32 %v2730, 7
        %v2732 = vsub.s32 %v2729, %v2731
        %v2733 = vrot.slane %v2719, %v2732
        %v2734 = vcombine.low %v2562, %v2564
        %v2735 = vcombine.high %v2562, %v2564
        %v2737 = vunpack.c.l.s4 1983009808
        %v2738 = vunpack.c.0.s8 %v2737
        %v2739 = vlaneseq
        %v2740 = vshrl.u32 %v2739, 7
        %v2741 = vsub.s32 %v2738, %v2740
        %v2742 = vrot.slane %v2734, %v2741
        %v2744 = vunpack.c.l.s4 1983009808
        %v2745 = vunpack.c.0.s8 %v2744
        %v2746 = vlaneseq
        %v2747 = vshrl.u32 %v2746, 7
        %v2748 = vsub.s32 %v2745, %v2747
        %v2749 = vrot.slane %v2735, %v2748
        %v2750 = vcombine.low %v2563, %v2565
        %v2751 = vcombine.high %v2563, %v2565
        %v2753 = vunpack.c.l.s4 1983009808
        %v2754 = vunpack.c.0.s8 %v2753
        %v2755 = vlaneseq
        %v2756 = vshrl.u32 %v2755, 7
        %v2757 = vsub.s32 %v2754, %v2756
        %v2758 = vrot.slane %v2750, %v2757
        %v2760 = vunpack.c.l.s4 1983009808
        %v2761 = vunpack.c.0.s8 %v2760
        %v2762 = vlaneseq
        %v2763 = vshrl.u32 %v2762, 7
        %v2764 = vsub.s32 %v2761, %v2763
        %v2765 = vrot.slane %v2751, %v2764
        %v2766 = vcombine.low %v2710, %v2726
        %v2767 = vcombine.high %v2710, %v2726
        %v2769 = vunpack.c.l.s4 1934713408
        %v2770 = vunpack.c.0.s8 %v2769
        %v2771 = vlaneseq
        %v2772 = vshrl.u32 %v2771, 7
        %v2773 = vsub.s32 %v2770, %v2772
        %v2774 = vrot.slane %v2766, %v2773
        %v2776 = vunpack.c.l.s4 1934713408
        %v2777 = vunpack.c.0.s8 %v2776
        %v2778 = vlaneseq
        %v2779 = vshrl.u32 %v2778, 7
        %v2780 = vsub.s32 %v2777, %v2779
        %v2781 = vrot.slane %v2767, %v2780
        %v2782 = vcombine.low %v2717, %v2733
        %v2783 = vcombine.high %v2717, %v2733
        %v2785 = vunpack.c.l.s4 1934713408
        %v2786 = vunpack.c.0.s8 %v2785
        %v2787 = vlaneseq
        %v2788 = vshrl.u32 %v2787, 7
        %v2789 = vsub.s32 %v2786, %v2788
        %v2790 = vrot.slane %v2782, %v2789
        %v2792 = vunpack.c.l.s4 1934713408
        %v2793 = vunpack.c.0.s8 %v2792
        %v2794 = vlaneseq
        %v2795 = vshrl.u32 %v2794, 7
        %v2796 = vsub.s32 %v2793, %v2795
        %v2797 = vrot.slane %v2783, %v2796
        %v2798 = vcombine.low %v2742, %v2758
        %v2799 = vcombine.high %v2742, %v2758
        %v2801 = vunpack.c.l.s4 1934713408
        %v2802 = vunpack.c.0.s8 %v2801
        %v2803 = vlaneseq
        %v2804 = vshrl.u32 %v2803, 7
        %v2805 = vsub.s32 %v2802, %v2804
        %v2806 = vrot.slane %v2798, %v2805
        %v2808 = vunpack.c.l.s4 1934713408
        %v2809 = vunpack.c.0.s8 %v2808
        %v2810 = vlaneseq
        %v2811 = vshrl.u32 %v2810, 7
        %v2812 = vsub.s32 %v2809, %v2811
        %v2813 = vrot.slane %v2799, %v2812
        %v2814 = vcombine.low %v2749, %v2765
        %v2815 = vcombine.high %v2749, %v2765
        %v2817 = vunpack.c.l.s4 1934713408
        %v2818 = vunpack.c.0.s8 %v2817
        %v2819 = vlaneseq
        %v2820 = vshrl.u32 %v2819, 7
        %v2821 = vsub.s32 %v2818, %v2820
        %v2822 = vrot.slane %v2814, %v2821
        %v2824 = vunpack.c.l.s4 1934713408
        %v2825 = vunpack.c.0.s8 %v2824
        %v2826 = vlaneseq
        %v2827 = vshrl.u32 %v2826, 7
        %v2828 = vsub.s32 %v2825, %v2827
        %v2829 = vrot.slane %v2815, %v2828
        %v2830 = vcombine.low %v2774, %v2806
        %v2831 = vcombine.high %v2774, %v2806
        %v2832 = vcombine.low %v2781, %v2813
        %v2833 = vcombine.high %v2781, %v2813
        %v2834 = vcombine.low %v2790, %v2822
        %v2835 = vcombine.high %v2790, %v2822
        %v2836 = vcombine.low %v2797, %v2829
        %v2837 = vcombine.high %v2797, %v2829
        %v2838 = vpack.c.bf16 %v1654, %v1518
        %v2839 = vpack.c.bf16 %v1655, %v1519
        %v2840 = vpack.c.bf16 %v1656, %v1520
        %v2841 = vpack.c.bf16 %v1657, %v1521
        %v2842 = vpack.c.bf16 %v1658, %v1522
        %v2843 = vpack.c.bf16 %v1659, %v1523
        %v2844 = vpack.c.bf16 %v1660, %v1524
        %v2845 = vpack.c.bf16 %v1661, %v1525
        %v2846 = vpack.c.bf16 %v2242, %v2106
        %v2847 = vpack.c.bf16 %v2243, %v2107
        %v2848 = vpack.c.bf16 %v2244, %v2108
        %v2849 = vpack.c.bf16 %v2245, %v2109
        %v2850 = vpack.c.bf16 %v2246, %v2110
        %v2851 = vpack.c.bf16 %v2247, %v2111
        %v2852 = vpack.c.bf16 %v2248, %v2112
        %v2853 = vpack.c.bf16 %v2249, %v2113
        %vm2854 = vcmask 130048
        %v2856 = vsel %vm2854, %v2838, 0
        %v2859 = vsel %vm2854, %v2846, 0
        %2861 = vmatprep.subr.bf16.mxu0 0
        %2862 = vmatpush1.bf16.xpose.msra.mxu0 %v2859
        %2863 = vmatprep.subr.bf16.mxu0 0
        %2864 = vmatpush1.bf16.xpose.msra.mxu0 0
        %2865 = vmatprep.subr.bf16.mxu0 0
        %2866 = vmatpush1.bf16.xpose.msra.mxu0 0
        %2867 = vmatprep.subr.bf16.mxu0 0
        %2868 = vmatpush1.bf16.xpose.msra.mxu0 0
        %2869 = vmatprep.subr.bf16.mxu0 0
        %2870 = vmatpush1.bf16.xpose.msra.mxu0 0
        %2871 = vmatprep.subr.bf16.mxu0 0
        %2872 = vmatpush1.bf16.xpose.msra.mxu0 0
        %2873 = vmatprep.subr.bf16.mxu0 0
        %2874 = vmatpush1.bf16.xpose.msra.mxu0 0
        %2875 = vmatprep.subr.bf16.mxu0 0
        %2876 = vmatpush1.bf16.xpose.msra.mxu0 0
        %2877 = vmatprep.subr.bf16.mxu0 0
        %2878 = vmatpush1.bf16.xpose.msra.mxu0 0
        %2879 = vmatprep.subr.bf16.mxu0 0
        %2880 = vmatpush1.bf16.xpose.msra.mxu0 0
        %2881 = vmatprep.subr.bf16.mxu0 0
        %2882 = vmatpush1.bf16.xpose.msra.mxu0 0
        %2883 = vmatprep.subr.bf16.mxu0 0
        %2884 = vmatpush1.bf16.xpose.msra.mxu0 0
        %2885 = vmatprep.subr.bf16.mxu0 0
        %2886 = vmatpush1.bf16.xpose.msra.mxu0 0
        %2887 = vmatprep.subr.bf16.mxu0 0
        %2888 = vmatpush1.bf16.xpose.msra.mxu0 0
        %2889 = vmatprep.subr.bf16.mxu0 0
        %2890 = vmatpush1.bf16.xpose.msra.mxu0 0
        %2891 = vmatprep.subr.bf16.mxu0 0
        %2892 = vmatpush1.bf16.xpose.msra.mxu0 0
        %2893 = vmatprep.mubr.bf16.mxu0 0
        %2894 = vmatmul.mubr.bf16.gmra.mrb[0].mxu0 %v2856
        %v2895 = vpop.f32.mrb[0].mxu0
        %v2896 = vadd.f32 0.0, %v2895
        %v2897 = vpop.f32.mrb[0].mxu0
        %v2898 = vpop.f32.mrb[0].mxu0
        %v2899 = vadd.f32 0.0, %v2898
        %v2900 = vpop.f32.mrb[0].mxu0
        %2901 = vdwg.mxu0
        %v2903 = vsel %vm2854, %v2839, 0
        %v2906 = vsel %vm2854, %v2847, 0
        %2908 = vmatprep.subr.bf16.mxu0 0
        %2909 = vmatpush1.bf16.xpose.msra.mxu0 %v2906
        %2910 = vmatprep.subr.bf16.mxu0 0
        %2911 = vmatpush1.bf16.xpose.msra.mxu0 0
        %2912 = vmatprep.subr.bf16.mxu0 0
        %2913 = vmatpush1.bf16.xpose.msra.mxu0 0
        %2914 = vmatprep.subr.bf16.mxu0 0
        %2915 = vmatpush1.bf16.xpose.msra.mxu0 0
        %2916 = vmatprep.subr.bf16.mxu0 0
        %2917 = vmatpush1.bf16.xpose.msra.mxu0 0
        %2918 = vmatprep.subr.bf16.mxu0 0
        %2919 = vmatpush1.bf16.xpose.msra.mxu0 0
        %2920 = vmatprep.subr.bf16.mxu0 0
        %2921 = vmatpush1.bf16.xpose.msra.mxu0 0
        %2922 = vmatprep.subr.bf16.mxu0 0
        %2923 = vmatpush1.bf16.xpose.msra.mxu0 0
        %2924 = vmatprep.subr.bf16.mxu0 0
        %2925 = vmatpush1.bf16.xpose.msra.mxu0 0
        %2926 = vmatprep.subr.bf16.mxu0 0
        %2927 = vmatpush1.bf16.xpose.msra.mxu0 0
        %2928 = vmatprep.subr.bf16.mxu0 0
        %2929 = vmatpush1.bf16.xpose.msra.mxu0 0
        %2930 = vmatprep.subr.bf16.mxu0 0
        %2931 = vmatpush1.bf16.xpose.msra.mxu0 0
        %2932 = vmatprep.subr.bf16.mxu0 0
        %2933 = vmatpush1.bf16.xpose.msra.mxu0 0
        %2934 = vmatprep.subr.bf16.mxu0 0
        %2935 = vmatpush1.bf16.xpose.msra.mxu0 0
        %2936 = vmatprep.subr.bf16.mxu0 0
        %2937 = vmatpush1.bf16.xpose.msra.mxu0 0
        %2938 = vmatprep.subr.bf16.mxu0 0
        %2939 = vmatpush1.bf16.xpose.msra.mxu0 0
        %2940 = vmatprep.mubr.bf16.mxu0 0
        %2941 = vmatmul.mubr.bf16.gmra.mrb[0].mxu0 %v2903
        %v2942 = vpop.f32.mrb[0].mxu0
        %v2943 = vadd.f32 0.0, %v2942
        %v2944 = vpop.f32.mrb[0].mxu0
        %v2945 = vpop.f32.mrb[0].mxu0
        %v2946 = vadd.f32 0.0, %v2945
        %v2947 = vpop.f32.mrb[0].mxu0
        %2948 = vdwg.mxu0
        %v2950 = vsel %vm2854, %v2840, 0
        %v2953 = vsel %vm2854, %v2848, 0
        %2955 = vmatprep.subr.bf16.mxu0 0
        %2956 = vmatpush1.bf16.xpose.msra.mxu0 %v2953
        %2957 = vmatprep.subr.bf16.mxu0 0
        %2958 = vmatpush1.bf16.xpose.msra.mxu0 0
        %2959 = vmatprep.subr.bf16.mxu0 0
        %2960 = vmatpush1.bf16.xpose.msra.mxu0 0
        %2961 = vmatprep.subr.bf16.mxu0 0
        %2962 = vmatpush1.bf16.xpose.msra.mxu0 0
        %2963 = vmatprep.subr.bf16.mxu0 0
        %2964 = vmatpush1.bf16.xpose.msra.mxu0 0
        %2965 = vmatprep.subr.bf16.mxu0 0
        %2966 = vmatpush1.bf16.xpose.msra.mxu0 0
        %2967 = vmatprep.subr.bf16.mxu0 0
        %2968 = vmatpush1.bf16.xpose.msra.mxu0 0
        %2969 = vmatprep.subr.bf16.mxu0 0
        %2970 = vmatpush1.bf16.xpose.msra.mxu0 0
        %2971 = vmatprep.subr.bf16.mxu0 0
        %2972 = vmatpush1.bf16.xpose.msra.mxu0 0
        %2973 = vmatprep.subr.bf16.mxu0 0
        %2974 = vmatpush1.bf16.xpose.msra.mxu0 0
        %2975 = vmatprep.subr.bf16.mxu0 0
        %2976 = vmatpush1.bf16.xpose.msra.mxu0 0
        %2977 = vmatprep.subr.bf16.mxu0 0
        %2978 = vmatpush1.bf16.xpose.msra.mxu0 0
        %2979 = vmatprep.subr.bf16.mxu0 0
        %2980 = vmatpush1.bf16.xpose.msra.mxu0 0
        %2981 = vmatprep.subr.bf16.mxu0 0
        %2982 = vmatpush1.bf16.xpose.msra.mxu0 0
        %2983 = vmatprep.subr.bf16.mxu0 0
        %2984 = vmatpush1.bf16.xpose.msra.mxu0 0
        %2985 = vmatprep.subr.bf16.mxu0 0
        %2986 = vmatpush1.bf16.xpose.msra.mxu0 0
        %2987 = vmatprep.mubr.bf16.mxu0 0
        %2988 = vmatmul.mubr.bf16.gmra.mrb[0].mxu0 %v2950
        %v2989 = vpop.f32.mrb[0].mxu0
        %v2990 = vadd.f32 0.0, %v2989
        %v2991 = vpop.f32.mrb[0].mxu0
        %v2992 = vpop.f32.mrb[0].mxu0
        %v2993 = vadd.f32 0.0, %v2992
        %v2994 = vpop.f32.mrb[0].mxu0
        %2995 = vdwg.mxu0
        %v2997 = vsel %vm2854, %v2841, 0
        %v3000 = vsel %vm2854, %v2849, 0
        %3002 = vmatprep.subr.bf16.mxu0 0
        %3003 = vmatpush1.bf16.xpose.msra.mxu0 %v3000
        %3004 = vmatprep.subr.bf16.mxu0 0
        %3005 = vmatpush1.bf16.xpose.msra.mxu0 0
        %3006 = vmatprep.subr.bf16.mxu0 0
        %3007 = vmatpush1.bf16.xpose.msra.mxu0 0
        %3008 = vmatprep.subr.bf16.mxu0 0
        %3009 = vmatpush1.bf16.xpose.msra.mxu0 0
        %3010 = vmatprep.subr.bf16.mxu0 0
        %3011 = vmatpush1.bf16.xpose.msra.mxu0 0
        %3012 = vmatprep.subr.bf16.mxu0 0
        %3013 = vmatpush1.bf16.xpose.msra.mxu0 0
        %3014 = vmatprep.subr.bf16.mxu0 0
        %3015 = vmatpush1.bf16.xpose.msra.mxu0 0
        %3016 = vmatprep.subr.bf16.mxu0 0
        %3017 = vmatpush1.bf16.xpose.msra.mxu0 0
        %3018 = vmatprep.subr.bf16.mxu0 0
        %3019 = vmatpush1.bf16.xpose.msra.mxu0 0
        %3020 = vmatprep.subr.bf16.mxu0 0
        %3021 = vmatpush1.bf16.xpose.msra.mxu0 0
        %3022 = vmatprep.subr.bf16.mxu0 0
        %3023 = vmatpush1.bf16.xpose.msra.mxu0 0
        %3024 = vmatprep.subr.bf16.mxu0 0
        %3025 = vmatpush1.bf16.xpose.msra.mxu0 0
        %3026 = vmatprep.subr.bf16.mxu0 0
        %3027 = vmatpush1.bf16.xpose.msra.mxu0 0
        %3028 = vmatprep.subr.bf16.mxu0 0
        %3029 = vmatpush1.bf16.xpose.msra.mxu0 0
        %3030 = vmatprep.subr.bf16.mxu0 0
        %3031 = vmatpush1.bf16.xpose.msra.mxu0 0
        %3032 = vmatprep.subr.bf16.mxu0 0
        %3033 = vmatpush1.bf16.xpose.msra.mxu0 0
        %3034 = vmatprep.mubr.bf16.mxu0 0
        %3035 = vmatmul.mubr.bf16.gmra.mrb[0].mxu0 %v2997
        %v3036 = vpop.f32.mrb[0].mxu0
        %v3037 = vadd.f32 0.0, %v3036
        %v3038 = vpop.f32.mrb[0].mxu0
        %v3039 = vpop.f32.mrb[0].mxu0
        %v3040 = vadd.f32 0.0, %v3039
        %v3041 = vpop.f32.mrb[0].mxu0
        %3042 = vdwg.mxu0
        %v3044 = vsel %vm2854, %v2842, 0
        %v3047 = vsel %vm2854, %v2850, 0
        %3049 = vmatprep.subr.bf16.mxu0 0
        %3050 = vmatpush1.bf16.xpose.msra.mxu0 %v3047
        %3051 = vmatprep.subr.bf16.mxu0 0
        %3052 = vmatpush1.bf16.xpose.msra.mxu0 0
        %3053 = vmatprep.subr.bf16.mxu0 0
        %3054 = vmatpush1.bf16.xpose.msra.mxu0 0
        %3055 = vmatprep.subr.bf16.mxu0 0
        %3056 = vmatpush1.bf16.xpose.msra.mxu0 0
        %3057 = vmatprep.subr.bf16.mxu0 0
        %3058 = vmatpush1.bf16.xpose.msra.mxu0 0
        %3059 = vmatprep.subr.bf16.mxu0 0
        %3060 = vmatpush1.bf16.xpose.msra.mxu0 0
        %3061 = vmatprep.subr.bf16.mxu0 0
        %3062 = vmatpush1.bf16.xpose.msra.mxu0 0
        %3063 = vmatprep.subr.bf16.mxu0 0
        %3064 = vmatpush1.bf16.xpose.msra.mxu0 0
        %3065 = vmatprep.subr.bf16.mxu0 0
        %3066 = vmatpush1.bf16.xpose.msra.mxu0 0
        %3067 = vmatprep.subr.bf16.mxu0 0
        %3068 = vmatpush1.bf16.xpose.msra.mxu0 0
        %3069 = vmatprep.subr.bf16.mxu0 0
        %3070 = vmatpush1.bf16.xpose.msra.mxu0 0
        %3071 = vmatprep.subr.bf16.mxu0 0
        %3072 = vmatpush1.bf16.xpose.msra.mxu0 0
        %3073 = vmatprep.subr.bf16.mxu0 0
        %3074 = vmatpush1.bf16.xpose.msra.mxu0 0
        %3075 = vmatprep.subr.bf16.mxu0 0
        %3076 = vmatpush1.bf16.xpose.msra.mxu0 0
        %3077 = vmatprep.subr.bf16.mxu0 0
        %3078 = vmatpush1.bf16.xpose.msra.mxu0 0
        %3079 = vmatprep.subr.bf16.mxu0 0
        %3080 = vmatpush1.bf16.xpose.msra.mxu0 0
        %3081 = vmatprep.mubr.bf16.mxu0 0
        %3082 = vmatmul.mubr.bf16.gmra.mrb[0].mxu0 %v3044
        %v3083 = vpop.f32.mrb[0].mxu0
        %v3084 = vadd.f32 0.0, %v3083
        %v3085 = vpop.f32.mrb[0].mxu0
        %v3086 = vpop.f32.mrb[0].mxu0
        %v3087 = vadd.f32 0.0, %v3086
        %v3088 = vpop.f32.mrb[0].mxu0
        %3089 = vdwg.mxu0
        %v3091 = vsel %vm2854, %v2843, 0
        %v3094 = vsel %vm2854, %v2851, 0
        %3096 = vmatprep.subr.bf16.mxu0 0
        %3097 = vmatpush1.bf16.xpose.msra.mxu0 %v3094
        %3098 = vmatprep.subr.bf16.mxu0 0
        %3099 = vmatpush1.bf16.xpose.msra.mxu0 0
        %3100 = vmatprep.subr.bf16.mxu0 0
        %3101 = vmatpush1.bf16.xpose.msra.mxu0 0
        %3102 = vmatprep.subr.bf16.mxu0 0
        %3103 = vmatpush1.bf16.xpose.msra.mxu0 0
        %3104 = vmatprep.subr.bf16.mxu0 0
        %3105 = vmatpush1.bf16.xpose.msra.mxu0 0
        %3106 = vmatprep.subr.bf16.mxu0 0
        %3107 = vmatpush1.bf16.xpose.msra.mxu0 0
        %3108 = vmatprep.subr.bf16.mxu0 0
        %3109 = vmatpush1.bf16.xpose.msra.mxu0 0
        %3110 = vmatprep.subr.bf16.mxu0 0
        %3111 = vmatpush1.bf16.xpose.msra.mxu0 0
        %3112 = vmatprep.subr.bf16.mxu0 0
        %3113 = vmatpush1.bf16.xpose.msra.mxu0 0
        %3114 = vmatprep.subr.bf16.mxu0 0
        %3115 = vmatpush1.bf16.xpose.msra.mxu0 0
        %3116 = vmatprep.subr.bf16.mxu0 0
        %3117 = vmatpush1.bf16.xpose.msra.mxu0 0
        %3118 = vmatprep.subr.bf16.mxu0 0
        %3119 = vmatpush1.bf16.xpose.msra.mxu0 0
        %3120 = vmatprep.subr.bf16.mxu0 0
        %3121 = vmatpush1.bf16.xpose.msra.mxu0 0
        %3122 = vmatprep.subr.bf16.mxu0 0
        %3123 = vmatpush1.bf16.xpose.msra.mxu0 0
        %3124 = vmatprep.subr.bf16.mxu0 0
        %3125 = vmatpush1.bf16.xpose.msra.mxu0 0
        %3126 = vmatprep.subr.bf16.mxu0 0
        %3127 = vmatpush1.bf16.xpose.msra.mxu0 0
        %3128 = vmatprep.mubr.bf16.mxu0 0
        %3129 = vmatmul.mubr.bf16.gmra.mrb[0].mxu0 %v3091
        %v3130 = vpop.f32.mrb[0].mxu0
        %v3131 = vadd.f32 0.0, %v3130
        %v3132 = vpop.f32.mrb[0].mxu0
        %v3133 = vpop.f32.mrb[0].mxu0
        %v3134 = vadd.f32 0.0, %v3133
        %v3135 = vpop.f32.mrb[0].mxu0
        %3136 = vdwg.mxu0
        %v3138 = vsel %vm2854, %v2844, 0
        %v3141 = vsel %vm2854, %v2852, 0
        %3143 = vmatprep.subr.bf16.mxu0 0
        %3144 = vmatpush1.bf16.xpose.msra.mxu0 %v3141
        %3145 = vmatprep.subr.bf16.mxu0 0
        %3146 = vmatpush1.bf16.xpose.msra.mxu0 0
        %3147 = vmatprep.subr.bf16.mxu0 0
        %3148 = vmatpush1.bf16.xpose.msra.mxu0 0
        %3149 = vmatprep.subr.bf16.mxu0 0
        %3150 = vmatpush1.bf16.xpose.msra.mxu0 0
        %3151 = vmatprep.subr.bf16.mxu0 0
        %3152 = vmatpush1.bf16.xpose.msra.mxu0 0
        %3153 = vmatprep.subr.bf16.mxu0 0
        %3154 = vmatpush1.bf16.xpose.msra.mxu0 0
        %3155 = vmatprep.subr.bf16.mxu0 0
        %3156 = vmatpush1.bf16.xpose.msra.mxu0 0
        %3157 = vmatprep.subr.bf16.mxu0 0
        %3158 = vmatpush1.bf16.xpose.msra.mxu0 0
        %3159 = vmatprep.subr.bf16.mxu0 0
        %3160 = vmatpush1.bf16.xpose.msra.mxu0 0
        %3161 = vmatprep.subr.bf16.mxu0 0
        %3162 = vmatpush1.bf16.xpose.msra.mxu0 0
        %3163 = vmatprep.subr.bf16.mxu0 0
        %3164 = vmatpush1.bf16.xpose.msra.mxu0 0
        %3165 = vmatprep.subr.bf16.mxu0 0
        %3166 = vmatpush1.bf16.xpose.msra.mxu0 0
        %3167 = vmatprep.subr.bf16.mxu0 0
        %3168 = vmatpush1.bf16.xpose.msra.mxu0 0
        %3169 = vmatprep.subr.bf16.mxu0 0
        %3170 = vmatpush1.bf16.xpose.msra.mxu0 0
        %3171 = vmatprep.subr.bf16.mxu0 0
        %3172 = vmatpush1.bf16.xpose.msra.mxu0 0
        %3173 = vmatprep.subr.bf16.mxu0 0
        %3174 = vmatpush1.bf16.xpose.msra.mxu0 0
        %3175 = vmatprep.mubr.bf16.mxu0 0
        %3176 = vmatmul.mubr.bf16.gmra.mrb[0].mxu0 %v3138
        %v3177 = vpop.f32.mrb[0].mxu0
        %v3178 = vadd.f32 0.0, %v3177
        %v3179 = vpop.f32.mrb[0].mxu0
        %v3180 = vpop.f32.mrb[0].mxu0
        %v3181 = vadd.f32 0.0, %v3180
        %v3182 = vpop.f32.mrb[0].mxu0
        %3183 = vdwg.mxu0
        %v3185 = vsel %vm2854, %v2845, 0
        %v3188 = vsel %vm2854, %v2853, 0
        %3190 = vmatprep.subr.bf16.mxu0 0
        %3191 = vmatpush1.bf16.xpose.msra.mxu0 %v3188
        %3192 = vmatprep.subr.bf16.mxu0 0
        %3193 = vmatpush1.bf16.xpose.msra.mxu0 0
        %3194 = vmatprep.subr.bf16.mxu0 0
        %3195 = vmatpush1.bf16.xpose.msra.mxu0 0
        %3196 = vmatprep.subr.bf16.mxu0 0
        %3197 = vmatpush1.bf16.xpose.msra.mxu0 0
        %3198 = vmatprep.subr.bf16.mxu0 0
        %3199 = vmatpush1.bf16.xpose.msra.mxu0 0
        %3200 = vmatprep.subr.bf16.mxu0 0
        %3201 = vmatpush1.bf16.xpose.msra.mxu0 0
        %3202 = vmatprep.subr.bf16.mxu0 0
        %3203 = vmatpush1.bf16.xpose.msra.mxu0 0
        %3204 = vmatprep.subr.bf16.mxu0 0
        %3205 = vmatpush1.bf16.xpose.msra.mxu0 0
        %3206 = vmatprep.subr.bf16.mxu0 0
        %3207 = vmatpush1.bf16.xpose.msra.mxu0 0
        %3208 = vmatprep.subr.bf16.mxu0 0
        %3209 = vmatpush1.bf16.xpose.msra.mxu0 0
        %3210 = vmatprep.subr.bf16.mxu0 0
        %3211 = vmatpush1.bf16.xpose.msra.mxu0 0
        %3212 = vmatprep.subr.bf16.mxu0 0
        %3213 = vmatpush1.bf16.xpose.msra.mxu0 0
        %3214 = vmatprep.subr.bf16.mxu0 0
        %3215 = vmatpush1.bf16.xpose.msra.mxu0 0
        %3216 = vmatprep.subr.bf16.mxu0 0
        %3217 = vmatpush1.bf16.xpose.msra.mxu0 0
        %3218 = vmatprep.subr.bf16.mxu0 0
        %3219 = vmatpush1.bf16.xpose.msra.mxu0 0
        %3220 = vmatprep.subr.bf16.mxu0 0
        %3221 = vmatpush1.bf16.xpose.msra.mxu0 0
        %3222 = vmatprep.mubr.bf16.mxu0 0
        %3223 = vmatmul.mubr.bf16.gmra.mrb[0].mxu0 %v3185
        %v3224 = vpop.f32.mrb[0].mxu0
        %v3225 = vadd.f32 0.0, %v3224
        %v3226 = vpop.f32.mrb[0].mxu0
        %v3227 = vpop.f32.mrb[0].mxu0
        %v3228 = vadd.f32 0.0, %v3227
        %v3229 = vpop.f32.mrb[0].mxu0
        %3230 = vdwg.mxu0
        %v3231 = vsel %vm2854, %v2896, -inf
        %3232 = vmax.xlane.f32.xlu0 %v3231
        %v3233 = vpop.xlane.xlu0 %3232
        %v3234 = vsel %vm2854, %v2899, -inf
        %3235 = vmax.xlane.f32.xlu0 %v3234
        %v3236 = vpop.xlane.xlu0 %3235
        %v3237 = vsel %vm2854, %v2943, -inf
        %3238 = vmax.xlane.f32.xlu0 %v3237
        %v3239 = vpop.xlane.xlu0 %3238
        %v3240 = vsel %vm2854, %v2946, -inf
        %3241 = vmax.xlane.f32.xlu0 %v3240
        %v3242 = vpop.xlane.xlu0 %3241
        %v3243 = vsel %vm2854, %v2990, -inf
        %3244 = vmax.xlane.f32.xlu0 %v3243
        %v3245 = vpop.xlane.xlu0 %3244
        %v3246 = vsel %vm2854, %v2993, -inf
        %3247 = vmax.xlane.f32.xlu0 %v3246
        %v3248 = vpop.xlane.xlu0 %3247
        %v3249 = vsel %vm2854, %v3037, -inf
        %3250 = vmax.xlane.f32.xlu0 %v3249
        %v3251 = vpop.xlane.xlu0 %3250
        %v3252 = vsel %vm2854, %v3040, -inf
        %3253 = vmax.xlane.f32.xlu0 %v3252
        %v3254 = vpop.xlane.xlu0 %3253
        %v3255 = vsel %vm2854, %v3084, -inf
        %3256 = vmax.xlane.f32.xlu0 %v3255
        %v3257 = vpop.xlane.xlu0 %3256
        %v3258 = vsel %vm2854, %v3087, -inf
        %3259 = vmax.xlane.f32.xlu0 %v3258
        %v3260 = vpop.xlane.xlu0 %3259
        %v3261 = vsel %vm2854, %v3131, -inf
        %3262 = vmax.xlane.f32.xlu0 %v3261
        %v3263 = vpop.xlane.xlu0 %3262
        %v3264 = vsel %vm2854, %v3134, -inf
        %3265 = vmax.xlane.f32.xlu0 %v3264
        %v3266 = vpop.xlane.xlu0 %3265
        %v3267 = vsel %vm2854, %v3178, -inf
        %3268 = vmax.xlane.f32.xlu0 %v3267
        %v3269 = vpop.xlane.xlu0 %3268
        %v3270 = vsel %vm2854, %v3181, -inf
        %3271 = vmax.xlane.f32.xlu0 %v3270
        %v3272 = vpop.xlane.xlu0 %3271
        %v3273 = vsel %vm2854, %v3225, -inf
        %3274 = vmax.xlane.f32.xlu0 %v3273
        %v3275 = vpop.xlane.xlu0 %3274
        %v3276 = vsel %vm2854, %v3228, -inf
        %3277 = vmax.xlane.f32.xlu0 %v3276
        %v3278 = vpop.xlane.xlu0 %3277
        %v3279 = vsub.f32 %v2896, %v3233
        %v3280 = vsub.f32 %v2899, %v3236
        %v3281 = vsub.f32 %v2943, %v3239
        %v3282 = vsub.f32 %v2946, %v3242
        %v3283 = vsub.f32 %v2990, %v3245
        %v3284 = vsub.f32 %v2993, %v3248
        %v3285 = vsub.f32 %v3037, %v3251
        %v3286 = vsub.f32 %v3040, %v3254
        %v3287 = vsub.f32 %v3084, %v3257
        %v3288 = vsub.f32 %v3087, %v3260
        %v3289 = vsub.f32 %v3131, %v3263
        %v3290 = vsub.f32 %v3134, %v3266
        %v3291 = vsub.f32 %v3178, %v3269
        %v3292 = vsub.f32 %v3181, %v3272
        %v3293 = vsub.f32 %v3225, %v3275
        %v3294 = vsub.f32 %v3228, %v3278
        %v3295 = vmul.f32 %v3279, 1.442695
        %v3296 = vpow.pop %v3295
        %v3297 = vmul.f32 %v3280, 1.442695
        %v3298 = vpow.pop %v3297
        %v3299 = vmul.f32 %v3281, 1.442695
        %v3300 = vpow.pop %v3299
        %v3301 = vmul.f32 %v3282, 1.442695
        %v3302 = vpow.pop %v3301
        %v3303 = vmul.f32 %v3283, 1.442695
        %v3304 = vpow.pop %v3303
        %v3305 = vmul.f32 %v3284, 1.442695
        %v3306 = vpow.pop %v3305
        %v3307 = vmul.f32 %v3285, 1.442695
        %v3308 = vpow.pop %v3307
        %v3309 = vmul.f32 %v3286, 1.442695
        %v3310 = vpow.pop %v3309
        %v3311 = vmul.f32 %v3287, 1.442695
        %v3312 = vpow.pop %v3311
        %v3313 = vmul.f32 %v3288, 1.442695
        %v3314 = vpow.pop %v3313
        %v3315 = vmul.f32 %v3289, 1.442695
        %v3316 = vpow.pop %v3315
        %v3317 = vmul.f32 %v3290, 1.442695
        %v3318 = vpow.pop %v3317
        %v3319 = vmul.f32 %v3291, 1.442695
        %v3320 = vpow.pop %v3319
        %v3321 = vmul.f32 %v3292, 1.442695
        %v3322 = vpow.pop %v3321
        %v3323 = vmul.f32 %v3293, 1.442695
        %v3324 = vpow.pop %v3323
        %v3325 = vmul.f32 %v3294, 1.442695
        %v3326 = vpow.pop %v3325
        %v3327 = vsel %vm2854, %v3296, 0.0
        %3328 = vadd.xlane.f32.xlu0 %v3327
        %v3329 = vpop.xlane.xlu0 %3328
        %v3330 = vsel %vm2854, %v3298, 0.0
        %3331 = vadd.xlane.f32.xlu0 %v3330
        %v3332 = vpop.xlane.xlu0 %3331
        %v3333 = vsel %vm2854, %v3300, 0.0
        %3334 = vadd.xlane.f32.xlu0 %v3333
        %v3335 = vpop.xlane.xlu0 %3334
        %v3336 = vsel %vm2854, %v3302, 0.0
        %3337 = vadd.xlane.f32.xlu0 %v3336
        %v3338 = vpop.xlane.xlu0 %3337
        %v3339 = vsel %vm2854, %v3304, 0.0
        %3340 = vadd.xlane.f32.xlu0 %v3339
        %v3341 = vpop.xlane.xlu0 %3340
        %v3342 = vsel %vm2854, %v3306, 0.0
        %3343 = vadd.xlane.f32.xlu0 %v3342
        %v3344 = vpop.xlane.xlu0 %3343
        %v3345 = vsel %vm2854, %v3308, 0.0
        %3346 = vadd.xlane.f32.xlu0 %v3345
        %v3347 = vpop.xlane.xlu0 %3346
        %v3348 = vsel %vm2854, %v3310, 0.0
        %3349 = vadd.xlane.f32.xlu0 %v3348
        %v3350 = vpop.xlane.xlu0 %3349
        %v3351 = vsel %vm2854, %v3312, 0.0
        %3352 = vadd.xlane.f32.xlu0 %v3351
        %v3353 = vpop.xlane.xlu0 %3352
        %v3354 = vsel %vm2854, %v3314, 0.0
        %3355 = vadd.xlane.f32.xlu0 %v3354
        %v3356 = vpop.xlane.xlu0 %3355
        %v3357 = vsel %vm2854, %v3316, 0.0
        %3358 = vadd.xlane.f32.xlu0 %v3357
        %v3359 = vpop.xlane.xlu0 %3358
        %v3360 = vsel %vm2854, %v3318, 0.0
        %3361 = vadd.xlane.f32.xlu0 %v3360
        %v3362 = vpop.xlane.xlu0 %3361
        %v3363 = vsel %vm2854, %v3320, 0.0
        %3364 = vadd.xlane.f32.xlu0 %v3363
        %v3365 = vpop.xlane.xlu0 %3364
        %v3366 = vsel %vm2854, %v3322, 0.0
        %3367 = vadd.xlane.f32.xlu0 %v3366
        %v3368 = vpop.xlane.xlu0 %3367
        %v3369 = vsel %vm2854, %v3324, 0.0
        %3370 = vadd.xlane.f32.xlu0 %v3369
        %v3371 = vpop.xlane.xlu0 %3370
        %v3372 = vsel %vm2854, %v3326, 0.0
        %3373 = vadd.xlane.f32.xlu0 %v3372
        %v3374 = vpop.xlane.xlu0 %3373
        %v3375 = vrcp.pop %v3329
        %v3376 = vrcp.pop %v3332
        %v3377 = vrcp.pop %v3335
        %v3378 = vrcp.pop %v3338
        %v3379 = vrcp.pop %v3341
        %v3380 = vrcp.pop %v3344
        %v3381 = vrcp.pop %v3347
        %v3382 = vrcp.pop %v3350
        %v3383 = vrcp.pop %v3353
        %v3384 = vrcp.pop %v3356
        %v3385 = vrcp.pop %v3359
        %v3386 = vrcp.pop %v3362
        %v3387 = vrcp.pop %v3365
        %v3388 = vrcp.pop %v3368
        %v3389 = vrcp.pop %v3371
        %v3390 = vrcp.pop %v3374
        %v3391 = vmul.f32 %v3296, %v3375
        %v3392 = vmul.f32 %v3298, %v3376
        %v3393 = vmul.f32 %v3300, %v3377
        %v3394 = vmul.f32 %v3302, %v3378
        %v3395 = vmul.f32 %v3304, %v3379
        %v3396 = vmul.f32 %v3306, %v3380
        %v3397 = vmul.f32 %v3308, %v3381
        %v3398 = vmul.f32 %v3310, %v3382
        %v3399 = vmul.f32 %v3312, %v3383
        %v3400 = vmul.f32 %v3314, %v3384
        %v3401 = vmul.f32 %v3316, %v3385
        %v3402 = vmul.f32 %v3318, %v3386
        %v3403 = vmul.f32 %v3320, %v3387
        %v3404 = vmul.f32 %v3322, %v3388
        %v3405 = vmul.f32 %v3324, %v3389
        %v3406 = vmul.f32 %v3326, %v3390
        %v3407 = vpack.c.bf16 %v3392, %v3391
        %v3408 = vpack.c.bf16 %v3394, %v3393
        %v3409 = vpack.c.bf16 %v3396, %v3395
        %v3410 = vpack.c.bf16 %v3398, %v3397
        %v3411 = vpack.c.bf16 %v3400, %v3399
        %v3412 = vpack.c.bf16 %v3402, %v3401
        %v3413 = vpack.c.bf16 %v3404, %v3403
        %v3414 = vpack.c.bf16 %v3406, %v3405
        %v3415 = vpack.c.bf16 %v2830, %v2694
        %v3416 = vpack.c.bf16 %v2831, %v2695
        %v3417 = vpack.c.bf16 %v2832, %v2696
        %v3418 = vpack.c.bf16 %v2833, %v2697
        %v3419 = vpack.c.bf16 %v2834, %v2698
        %v3420 = vpack.c.bf16 %v2835, %v2699
        %v3421 = vpack.c.bf16 %v2836, %v2700
        %v3422 = vpack.c.bf16 %v2837, %v2701
        %v3424 = vsel %vm2854, %v3407, 0
        %3426 = vmatprep.subr.bf16.mxu0 0
        %3427 = vmatpush1.bf16.msra.mxu0 %v3415
        %3428 = vmatprep.subr.bf16.mxu0 0
        %3429 = vmatpush1.bf16.msra.mxu0 0
        %3430 = vmatprep.subr.bf16.mxu0 0
        %3431 = vmatpush1.bf16.msra.mxu0 0
        %3432 = vmatprep.subr.bf16.mxu0 0
        %3433 = vmatpush1.bf16.msra.mxu0 0
        %3434 = vmatprep.subr.bf16.mxu0 0
        %3435 = vmatpush1.bf16.msra.mxu0 0
        %3436 = vmatprep.subr.bf16.mxu0 0
        %3437 = vmatpush1.bf16.msra.mxu0 0
        %3438 = vmatprep.subr.bf16.mxu0 0
        %3439 = vmatpush1.bf16.msra.mxu0 0
        %3440 = vmatprep.subr.bf16.mxu0 0
        %3441 = vmatpush1.bf16.msra.mxu0 0
        %3442 = vmatprep.subr.bf16.mxu0 0
        %3443 = vmatpush1.bf16.msra.mxu0 0
        %3444 = vmatprep.subr.bf16.mxu0 0
        %3445 = vmatpush1.bf16.msra.mxu0 0
        %3446 = vmatprep.subr.bf16.mxu0 0
        %3447 = vmatpush1.bf16.msra.mxu0 0
        %3448 = vmatprep.subr.bf16.mxu0 0
        %3449 = vmatpush1.bf16.msra.mxu0 0
        %3450 = vmatprep.subr.bf16.mxu0 0
        %3451 = vmatpush1.bf16.msra.mxu0 0
        %3452 = vmatprep.subr.bf16.mxu0 0
        %3453 = vmatpush1.bf16.msra.mxu0 0
        %3454 = vmatprep.subr.bf16.mxu0 0
        %3455 = vmatpush1.bf16.msra.mxu0 0
        %3456 = vmatprep.subr.bf16.mxu0 0
        %3457 = vmatpush1.bf16.msra.mxu0 0
        %3458 = vmatprep.mubr.bf16.mxu0 0
        %3459 = vmatmul.mubr.bf16.gmra.mrb[0].mxu0 %v3424
        %v3460 = vpop.f32.mrb[0].mxu0
        %v3461 = vadd.f32 0.0, %v3460
        %v3462 = vpop.f32.mrb[0].mxu0
        %v3463 = vpop.f32.mrb[0].mxu0
        %v3464 = vadd.f32 0.0, %v3463
        %v3465 = vpop.f32.mrb[0].mxu0
        %3466 = vdwg.mxu0
        %v3468 = vsel %vm2854, %v3408, 0
        %3470 = vmatprep.subr.bf16.mxu0 0
        %3471 = vmatpush1.bf16.msra.mxu0 %v3416
        %3472 = vmatprep.subr.bf16.mxu0 0
        %3473 = vmatpush1.bf16.msra.mxu0 0
        %3474 = vmatprep.subr.bf16.mxu0 0
        %3475 = vmatpush1.bf16.msra.mxu0 0
        %3476 = vmatprep.subr.bf16.mxu0 0
        %3477 = vmatpush1.bf16.msra.mxu0 0
        %3478 = vmatprep.subr.bf16.mxu0 0
        %3479 = vmatpush1.bf16.msra.mxu0 0
        %3480 = vmatprep.subr.bf16.mxu0 0
        %3481 = vmatpush1.bf16.msra.mxu0 0
        %3482 = vmatprep.subr.bf16.mxu0 0
        %3483 = vmatpush1.bf16.msra.mxu0 0
        %3484 = vmatprep.subr.bf16.mxu0 0
        %3485 = vmatpush1.bf16.msra.mxu0 0
        %3486 = vmatprep.subr.bf16.mxu0 0
        %3487 = vmatpush1.bf16.msra.mxu0 0
        %3488 = vmatprep.subr.bf16.mxu0 0
        %3489 = vmatpush1.bf16.msra.mxu0 0
        %3490 = vmatprep.subr.bf16.mxu0 0
        %3491 = vmatpush1.bf16.msra.mxu0 0
        %3492 = vmatprep.subr.bf16.mxu0 0
        %3493 = vmatpush1.bf16.msra.mxu0 0
        %3494 = vmatprep.subr.bf16.mxu0 0
        %3495 = vmatpush1.bf16.msra.mxu0 0
        %3496 = vmatprep.subr.bf16.mxu0 0
        %3497 = vmatpush1.bf16.msra.mxu0 0
        %3498 = vmatprep.subr.bf16.mxu0 0
        %3499 = vmatpush1.bf16.msra.mxu0 0
        %3500 = vmatprep.subr.bf16.mxu0 0
        %3501 = vmatpush1.bf16.msra.mxu0 0
        %3502 = vmatprep.mubr.bf16.mxu0 0
        %3503 = vmatmul.mubr.bf16.gmra.mrb[0].mxu0 %v3468
        %v3504 = vpop.f32.mrb[0].mxu0
        %v3505 = vadd.f32 0.0, %v3504
        %v3506 = vpop.f32.mrb[0].mxu0
        %v3507 = vpop.f32.mrb[0].mxu0
        %v3508 = vadd.f32 0.0, %v3507
        %v3509 = vpop.f32.mrb[0].mxu0
        %3510 = vdwg.mxu0
        %v3512 = vsel %vm2854, %v3409, 0
        %3514 = vmatprep.subr.bf16.mxu0 0
        %3515 = vmatpush1.bf16.msra.mxu0 %v3417
        %3516 = vmatprep.subr.bf16.mxu0 0
        %3517 = vmatpush1.bf16.msra.mxu0 0
        %3518 = vmatprep.subr.bf16.mxu0 0
        %3519 = vmatpush1.bf16.msra.mxu0 0
        %3520 = vmatprep.subr.bf16.mxu0 0
        %3521 = vmatpush1.bf16.msra.mxu0 0
        %3522 = vmatprep.subr.bf16.mxu0 0
        %3523 = vmatpush1.bf16.msra.mxu0 0
        %3524 = vmatprep.subr.bf16.mxu0 0
        %3525 = vmatpush1.bf16.msra.mxu0 0
        %3526 = vmatprep.subr.bf16.mxu0 0
        %3527 = vmatpush1.bf16.msra.mxu0 0
        %3528 = vmatprep.subr.bf16.mxu0 0
        %3529 = vmatpush1.bf16.msra.mxu0 0
        %3530 = vmatprep.subr.bf16.mxu0 0
        %3531 = vmatpush1.bf16.msra.mxu0 0
        %3532 = vmatprep.subr.bf16.mxu0 0
        %3533 = vmatpush1.bf16.msra.mxu0 0
        %3534 = vmatprep.subr.bf16.mxu0 0
        %3535 = vmatpush1.bf16.msra.mxu0 0
        %3536 = vmatprep.subr.bf16.mxu0 0
        %3537 = vmatpush1.bf16.msra.mxu0 0
        %3538 = vmatprep.subr.bf16.mxu0 0
        %3539 = vmatpush1.bf16.msra.mxu0 0
        %3540 = vmatprep.subr.bf16.mxu0 0
        %3541 = vmatpush1.bf16.msra.mxu0 0
        %3542 = vmatprep.subr.bf16.mxu0 0
        %3543 = vmatpush1.bf16.msra.mxu0 0
        %3544 = vmatprep.subr.bf16.mxu0 0
        %3545 = vmatpush1.bf16.msra.mxu0 0
        %3546 = vmatprep.mubr.bf16.mxu0 0
        %3547 = vmatmul.mubr.bf16.gmra.mrb[0].mxu0 %v3512
        %v3548 = vpop.f32.mrb[0].mxu0
        %v3549 = vadd.f32 0.0, %v3548
        %v3550 = vpop.f32.mrb[0].mxu0
        %v3551 = vpop.f32.mrb[0].mxu0
        %v3552 = vadd.f32 0.0, %v3551
        %v3553 = vpop.f32.mrb[0].mxu0
        %3554 = vdwg.mxu0
        %v3556 = vsel %vm2854, %v3410, 0
        %3558 = vmatprep.subr.bf16.mxu0 0
        %3559 = vmatpush1.bf16.msra.mxu0 %v3418
        %3560 = vmatprep.subr.bf16.mxu0 0
        %3561 = vmatpush1.bf16.msra.mxu0 0
        %3562 = vmatprep.subr.bf16.mxu0 0
        %3563 = vmatpush1.bf16.msra.mxu0 0
        %3564 = vmatprep.subr.bf16.mxu0 0
        %3565 = vmatpush1.bf16.msra.mxu0 0
        %3566 = vmatprep.subr.bf16.mxu0 0
        %3567 = vmatpush1.bf16.msra.mxu0 0
        %3568 = vmatprep.subr.bf16.mxu0 0
        %3569 = vmatpush1.bf16.msra.mxu0 0
        %3570 = vmatprep.subr.bf16.mxu0 0
        %3571 = vmatpush1.bf16.msra.mxu0 0
        %3572 = vmatprep.subr.bf16.mxu0 0
        %3573 = vmatpush1.bf16.msra.mxu0 0
        %3574 = vmatprep.subr.bf16.mxu0 0
        %3575 = vmatpush1.bf16.msra.mxu0 0
        %3576 = vmatprep.subr.bf16.mxu0 0
        %3577 = vmatpush1.bf16.msra.mxu0 0
        %3578 = vmatprep.subr.bf16.mxu0 0
        %3579 = vmatpush1.bf16.msra.mxu0 0
        %3580 = vmatprep.subr.bf16.mxu0 0
        %3581 = vmatpush1.bf16.msra.mxu0 0
        %3582 = vmatprep.subr.bf16.mxu0 0
        %3583 = vmatpush1.bf16.msra.mxu0 0
        %3584 = vmatprep.subr.bf16.mxu0 0
        %3585 = vmatpush1.bf16.msra.mxu0 0
        %3586 = vmatprep.subr.bf16.mxu0 0
        %3587 = vmatpush1.bf16.msra.mxu0 0
        %3588 = vmatprep.subr.bf16.mxu0 0
        %3589 = vmatpush1.bf16.msra.mxu0 0
        %3590 = vmatprep.mubr.bf16.mxu0 0
        %3591 = vmatmul.mubr.bf16.gmra.mrb[0].mxu0 %v3556
        %v3592 = vpop.f32.mrb[0].mxu0
        %v3593 = vadd.f32 0.0, %v3592
        %v3594 = vpop.f32.mrb[0].mxu0
        %v3595 = vpop.f32.mrb[0].mxu0
        %v3596 = vadd.f32 0.0, %v3595
        %v3597 = vpop.f32.mrb[0].mxu0
        %3598 = vdwg.mxu0
        %v3600 = vsel %vm2854, %v3411, 0
        %3602 = vmatprep.subr.bf16.mxu0 0
        %3603 = vmatpush1.bf16.msra.mxu0 %v3419
        %3604 = vmatprep.subr.bf16.mxu0 0
        %3605 = vmatpush1.bf16.msra.mxu0 0
        %3606 = vmatprep.subr.bf16.mxu0 0
        %3607 = vmatpush1.bf16.msra.mxu0 0
        %3608 = vmatprep.subr.bf16.mxu0 0
        %3609 = vmatpush1.bf16.msra.mxu0 0
        %3610 = vmatprep.subr.bf16.mxu0 0
        %3611 = vmatpush1.bf16.msra.mxu0 0
        %3612 = vmatprep.subr.bf16.mxu0 0
        %3613 = vmatpush1.bf16.msra.mxu0 0
        %3614 = vmatprep.subr.bf16.mxu0 0
        %3615 = vmatpush1.bf16.msra.mxu0 0
        %3616 = vmatprep.subr.bf16.mxu0 0
        %3617 = vmatpush1.bf16.msra.mxu0 0
        %3618 = vmatprep.subr.bf16.mxu0 0
        %3619 = vmatpush1.bf16.msra.mxu0 0
        %3620 = vmatprep.subr.bf16.mxu0 0
        %3621 = vmatpush1.bf16.msra.mxu0 0
        %3622 = vmatprep.subr.bf16.mxu0 0
        %3623 = vmatpush1.bf16.msra.mxu0 0
        %3624 = vmatprep.subr.bf16.mxu0 0
        %3625 = vmatpush1.bf16.msra.mxu0 0
        %3626 = vmatprep.subr.bf16.mxu0 0
        %3627 = vmatpush1.bf16.msra.mxu0 0
        %3628 = vmatprep.subr.bf16.mxu0 0
        %3629 = vmatpush1.bf16.msra.mxu0 0
        %3630 = vmatprep.subr.bf16.mxu0 0
        %3631 = vmatpush1.bf16.msra.mxu0 0
        %3632 = vmatprep.subr.bf16.mxu0 0
        %3633 = vmatpush1.bf16.msra.mxu0 0
        %3634 = vmatprep.mubr.bf16.mxu0 0
        %3635 = vmatmul.mubr.bf16.gmra.mrb[0].mxu0 %v3600
        %v3636 = vpop.f32.mrb[0].mxu0
        %v3637 = vadd.f32 0.0, %v3636
        %v3638 = vpop.f32.mrb[0].mxu0
        %v3639 = vpop.f32.mrb[0].mxu0
        %v3640 = vadd.f32 0.0, %v3639
        %v3641 = vpop.f32.mrb[0].mxu0
        %3642 = vdwg.mxu0
        %v3644 = vsel %vm2854, %v3412, 0
        %3646 = vmatprep.subr.bf16.mxu0 0
        %3647 = vmatpush1.bf16.msra.mxu0 %v3420
        %3648 = vmatprep.subr.bf16.mxu0 0
        %3649 = vmatpush1.bf16.msra.mxu0 0
        %3650 = vmatprep.subr.bf16.mxu0 0
        %3651 = vmatpush1.bf16.msra.mxu0 0
        %3652 = vmatprep.subr.bf16.mxu0 0
        %3653 = vmatpush1.bf16.msra.mxu0 0
        %3654 = vmatprep.subr.bf16.mxu0 0
        %3655 = vmatpush1.bf16.msra.mxu0 0
        %3656 = vmatprep.subr.bf16.mxu0 0
        %3657 = vmatpush1.bf16.msra.mxu0 0
        %3658 = vmatprep.subr.bf16.mxu0 0
        %3659 = vmatpush1.bf16.msra.mxu0 0
        %3660 = vmatprep.subr.bf16.mxu0 0
        %3661 = vmatpush1.bf16.msra.mxu0 0
        %3662 = vmatprep.subr.bf16.mxu0 0
        %3663 = vmatpush1.bf16.msra.mxu0 0
        %3664 = vmatprep.subr.bf16.mxu0 0
        %3665 = vmatpush1.bf16.msra.mxu0 0
        %3666 = vmatprep.subr.bf16.mxu0 0
        %3667 = vmatpush1.bf16.msra.mxu0 0
        %3668 = vmatprep.subr.bf16.mxu0 0
        %3669 = vmatpush1.bf16.msra.mxu0 0
        %3670 = vmatprep.subr.bf16.mxu0 0
        %3671 = vmatpush1.bf16.msra.mxu0 0
        %3672 = vmatprep.subr.bf16.mxu0 0
        %3673 = vmatpush1.bf16.msra.mxu0 0
        %3674 = vmatprep.subr.bf16.mxu0 0
        %3675 = vmatpush1.bf16.msra.mxu0 0
        %3676 = vmatprep.subr.bf16.mxu0 0
        %3677 = vmatpush1.bf16.msra.mxu0 0
        %3678 = vmatprep.mubr.bf16.mxu0 0
        %3679 = vmatmul.mubr.bf16.gmra.mrb[0].mxu0 %v3644
        %v3680 = vpop.f32.mrb[0].mxu0
        %v3681 = vadd.f32 0.0, %v3680
        %v3682 = vpop.f32.mrb[0].mxu0
        %v3683 = vpop.f32.mrb[0].mxu0
        %v3684 = vadd.f32 0.0, %v3683
        %v3685 = vpop.f32.mrb[0].mxu0
        %3686 = vdwg.mxu0
        %v3688 = vsel %vm2854, %v3413, 0
        %3690 = vmatprep.subr.bf16.mxu0 0
        %3691 = vmatpush1.bf16.msra.mxu0 %v3421
        %3692 = vmatprep.subr.bf16.mxu0 0
        %3693 = vmatpush1.bf16.msra.mxu0 0
        %3694 = vmatprep.subr.bf16.mxu0 0
        %3695 = vmatpush1.bf16.msra.mxu0 0
        %3696 = vmatprep.subr.bf16.mxu0 0
        %3697 = vmatpush1.bf16.msra.mxu0 0
        %3698 = vmatprep.subr.bf16.mxu0 0
        %3699 = vmatpush1.bf16.msra.mxu0 0
        %3700 = vmatprep.subr.bf16.mxu0 0
        %3701 = vmatpush1.bf16.msra.mxu0 0
        %3702 = vmatprep.subr.bf16.mxu0 0
        %3703 = vmatpush1.bf16.msra.mxu0 0
        %3704 = vmatprep.subr.bf16.mxu0 0
        %3705 = vmatpush1.bf16.msra.mxu0 0
        %3706 = vmatprep.subr.bf16.mxu0 0
        %3707 = vmatpush1.bf16.msra.mxu0 0
        %3708 = vmatprep.subr.bf16.mxu0 0
        %3709 = vmatpush1.bf16.msra.mxu0 0
        %3710 = vmatprep.subr.bf16.mxu0 0
        %3711 = vmatpush1.bf16.msra.mxu0 0
        %3712 = vmatprep.subr.bf16.mxu0 0
        %3713 = vmatpush1.bf16.msra.mxu0 0
        %3714 = vmatprep.subr.bf16.mxu0 0
        %3715 = vmatpush1.bf16.msra.mxu0 0
        %3716 = vmatprep.subr.bf16.mxu0 0
        %3717 = vmatpush1.bf16.msra.mxu0 0
        %3718 = vmatprep.subr.bf16.mxu0 0
        %3719 = vmatpush1.bf16.msra.mxu0 0
        %3720 = vmatprep.subr.bf16.mxu0 0
        %3721 = vmatpush1.bf16.msra.mxu0 0
        %3722 = vmatprep.mubr.bf16.mxu0 0
        %3723 = vmatmul.mubr.bf16.gmra.mrb[0].mxu0 %v3688
        %v3724 = vpop.f32.mrb[0].mxu0
        %v3725 = vadd.f32 0.0, %v3724
        %v3726 = vpop.f32.mrb[0].mxu0
        %v3727 = vpop.f32.mrb[0].mxu0
        %v3728 = vadd.f32 0.0, %v3727
        %v3729 = vpop.f32.mrb[0].mxu0
        %3730 = vdwg.mxu0
        %v3732 = vsel %vm2854, %v3414, 0
        %3734 = vmatprep.subr.bf16.mxu0 0
        %3735 = vmatpush1.bf16.msra.mxu0 %v3422
        %3736 = vmatprep.subr.bf16.mxu0 0
        %3737 = vmatpush1.bf16.msra.mxu0 0
        %3738 = vmatprep.subr.bf16.mxu0 0
        %3739 = vmatpush1.bf16.msra.mxu0 0
        %3740 = vmatprep.subr.bf16.mxu0 0
        %3741 = vmatpush1.bf16.msra.mxu0 0
        %3742 = vmatprep.subr.bf16.mxu0 0
        %3743 = vmatpush1.bf16.msra.mxu0 0
        %3744 = vmatprep.subr.bf16.mxu0 0
        %3745 = vmatpush1.bf16.msra.mxu0 0
        %3746 = vmatprep.subr.bf16.mxu0 0
        %3747 = vmatpush1.bf16.msra.mxu0 0
        %3748 = vmatprep.subr.bf16.mxu0 0
        %3749 = vmatpush1.bf16.msra.mxu0 0
        %3750 = vmatprep.subr.bf16.mxu0 0
        %3751 = vmatpush1.bf16.msra.mxu0 0
        %3752 = vmatprep.subr.bf16.mxu0 0
        %3753 = vmatpush1.bf16.msra.mxu0 0
        %3754 = vmatprep.subr.bf16.mxu0 0
        %3755 = vmatpush1.bf16.msra.mxu0 0
        %3756 = vmatprep.subr.bf16.mxu0 0
        %3757 = vmatpush1.bf16.msra.mxu0 0
        %3758 = vmatprep.subr.bf16.mxu0 0
        %3759 = vmatpush1.bf16.msra.mxu0 0
        %3760 = vmatprep.subr.bf16.mxu0 0
        %3761 = vmatpush1.bf16.msra.mxu0 0
        %3762 = vmatprep.subr.bf16.mxu0 0
        %3763 = vmatpush1.bf16.msra.mxu0 0
        %3764 = vmatprep.subr.bf16.mxu0 0
        %3765 = vmatpush1.bf16.msra.mxu0 0
        %3766 = vmatprep.mubr.bf16.mxu0 0
        %3767 = vmatmul.mubr.bf16.gmra.mrb[0].mxu0 %v3732
        %v3768 = vpop.f32.mrb[0].mxu0
        %v3769 = vadd.f32 0.0, %v3768
        %v3770 = vpop.f32.mrb[0].mxu0
        %v3771 = vpop.f32.mrb[0].mxu0
        %v3772 = vadd.f32 0.0, %v3771
        %v3773 = vpop.f32.mrb[0].mxu0
        %3774 = vdwg.mxu0
        %v3775 = vcombine.low %v3461, %v3549
        %v3776 = vcombine.high %v3461, %v3549
        %v3778 = vunpack.c.l.s4 1983009808
        %v3779 = vunpack.c.0.s8 %v3778
        %v3780 = vlaneseq
        %v3781 = vshrl.u32 %v3780, 7
        %v3782 = vsub.s32 %v3779, %v3781
        %v3783 = vrot.slane %v3775, %v3782
        %v3785 = vunpack.c.l.s4 1983009808
        %v3786 = vunpack.c.0.s8 %v3785
        %v3787 = vlaneseq
        %v3788 = vshrl.u32 %v3787, 7
        %v3789 = vsub.s32 %v3786, %v3788
        %v3790 = vrot.slane %v3776, %v3789
        %v3791 = vcombine.low %v3505, %v3593
        %v3792 = vcombine.high %v3505, %v3593
        %v3794 = vunpack.c.l.s4 1983009808
        %v3795 = vunpack.c.0.s8 %v3794
        %v3796 = vlaneseq
        %v3797 = vshrl.u32 %v3796, 7
        %v3798 = vsub.s32 %v3795, %v3797
        %v3799 = vrot.slane %v3791, %v3798
        %v3801 = vunpack.c.l.s4 1983009808
        %v3802 = vunpack.c.0.s8 %v3801
        %v3803 = vlaneseq
        %v3804 = vshrl.u32 %v3803, 7
        %v3805 = vsub.s32 %v3802, %v3804
        %v3806 = vrot.slane %v3792, %v3805
        %v3807 = vcombine.low %v3637, %v3725
        %v3808 = vcombine.high %v3637, %v3725
        %v3810 = vunpack.c.l.s4 1983009808
        %v3811 = vunpack.c.0.s8 %v3810
        %v3812 = vlaneseq
        %v3813 = vshrl.u32 %v3812, 7
        %v3814 = vsub.s32 %v3811, %v3813
        %v3815 = vrot.slane %v3807, %v3814
        %v3817 = vunpack.c.l.s4 1983009808
        %v3818 = vunpack.c.0.s8 %v3817
        %v3819 = vlaneseq
        %v3820 = vshrl.u32 %v3819, 7
        %v3821 = vsub.s32 %v3818, %v3820
        %v3822 = vrot.slane %v3808, %v3821
        %v3823 = vcombine.low %v3681, %v3769
        %v3824 = vcombine.high %v3681, %v3769
        %v3826 = vunpack.c.l.s4 1983009808
        %v3827 = vunpack.c.0.s8 %v3826
        %v3828 = vlaneseq
        %v3829 = vshrl.u32 %v3828, 7
        %v3830 = vsub.s32 %v3827, %v3829
        %v3831 = vrot.slane %v3823, %v3830
        %v3833 = vunpack.c.l.s4 1983009808
        %v3834 = vunpack.c.0.s8 %v3833
        %v3835 = vlaneseq
        %v3836 = vshrl.u32 %v3835, 7
        %v3837 = vsub.s32 %v3834, %v3836
        %v3838 = vrot.slane %v3824, %v3837
        %v3839 = vcombine.low %v3783, %v3799
        %v3840 = vcombine.high %v3783, %v3799
        %v3842 = vunpack.c.l.s4 1934713408
        %v3843 = vunpack.c.0.s8 %v3842
        %v3844 = vlaneseq
        %v3845 = vshrl.u32 %v3844, 7
        %v3846 = vsub.s32 %v3843, %v3845
        %v3847 = vrot.slane %v3839, %v3846
        %v3849 = vunpack.c.l.s4 1934713408
        %v3850 = vunpack.c.0.s8 %v3849
        %v3851 = vlaneseq
        %v3852 = vshrl.u32 %v3851, 7
        %v3853 = vsub.s32 %v3850, %v3852
        %v3854 = vrot.slane %v3840, %v3853
        %v3855 = vcombine.low %v3790, %v3806
        %v3856 = vcombine.high %v3790, %v3806
        %v3858 = vunpack.c.l.s4 1934713408
        %v3859 = vunpack.c.0.s8 %v3858
        %v3860 = vlaneseq
        %v3861 = vshrl.u32 %v3860, 7
        %v3862 = vsub.s32 %v3859, %v3861
        %v3863 = vrot.slane %v3855, %v3862
        %v3865 = vunpack.c.l.s4 1934713408
        %v3866 = vunpack.c.0.s8 %v3865
        %v3867 = vlaneseq
        %v3868 = vshrl.u32 %v3867, 7
        %v3869 = vsub.s32 %v3866, %v3868
        %v3870 = vrot.slane %v3856, %v3869
        %v3871 = vcombine.low %v3815, %v3831
        %v3872 = vcombine.high %v3815, %v3831
        %v3874 = vunpack.c.l.s4 1934713408
        %v3875 = vunpack.c.0.s8 %v3874
        %v3876 = vlaneseq
        %v3877 = vshrl.u32 %v3876, 7
        %v3878 = vsub.s32 %v3875, %v3877
        %v3879 = vrot.slane %v3871, %v3878
        %v3881 = vunpack.c.l.s4 1934713408
        %v3882 = vunpack.c.0.s8 %v3881
        %v3883 = vlaneseq
        %v3884 = vshrl.u32 %v3883, 7
        %v3885 = vsub.s32 %v3882, %v3884
        %v3886 = vrot.slane %v3872, %v3885
        %v3887 = vcombine.low %v3822, %v3838
        %v3888 = vcombine.high %v3822, %v3838
        %v3890 = vunpack.c.l.s4 1934713408
        %v3891 = vunpack.c.0.s8 %v3890
        %v3892 = vlaneseq
        %v3893 = vshrl.u32 %v3892, 7
        %v3894 = vsub.s32 %v3891, %v3893
        %v3895 = vrot.slane %v3887, %v3894
        %v3897 = vunpack.c.l.s4 1934713408
        %v3898 = vunpack.c.0.s8 %v3897
        %v3899 = vlaneseq
        %v3900 = vshrl.u32 %v3899, 7
        %v3901 = vsub.s32 %v3898, %v3900
        %v3902 = vrot.slane %v3888, %v3901
        %v3903 = vcombine.low %v3847, %v3879
        %v3904 = vcombine.high %v3847, %v3879
        %v3905 = vcombine.low %v3854, %v3886
        %v3906 = vcombine.high %v3854, %v3886
        %v3907 = vcombine.low %v3863, %v3895
        %v3908 = vcombine.high %v3863, %v3895
        %v3909 = vcombine.low %v3870, %v3902
        %v3910 = vcombine.high %v3870, %v3902
        %v3911 = vcombine.low %v3464, %v3552
        %v3912 = vcombine.high %v3464, %v3552
        %v3914 = vunpack.c.l.s4 1983009808
        %v3915 = vunpack.c.0.s8 %v3914
        %v3916 = vlaneseq
        %v3917 = vshrl.u32 %v3916, 7
        %v3918 = vsub.s32 %v3915, %v3917
        %v3919 = vrot.slane %v3911, %v3918
        %v3921 = vunpack.c.l.s4 1983009808
        %v3922 = vunpack.c.0.s8 %v3921
        %v3923 = vlaneseq
        %v3924 = vshrl.u32 %v3923, 7
        %v3925 = vsub.s32 %v3922, %v3924
        %v3926 = vrot.slane %v3912, %v3925
        %v3927 = vcombine.low %v3508, %v3596
        %v3928 = vcombine.high %v3508, %v3596
        %v3930 = vunpack.c.l.s4 1983009808
        %v3931 = vunpack.c.0.s8 %v3930
        %v3932 = vlaneseq
        %v3933 = vshrl.u32 %v3932, 7
        %v3934 = vsub.s32 %v3931, %v3933
        %v3935 = vrot.slane %v3927, %v3934
        %v3937 = vunpack.c.l.s4 1983009808
        %v3938 = vunpack.c.0.s8 %v3937
        %v3939 = vlaneseq
        %v3940 = vshrl.u32 %v3939, 7
        %v3941 = vsub.s32 %v3938, %v3940
        %v3942 = vrot.slane %v3928, %v3941
        %v3943 = vcombine.low %v3640, %v3728
        %v3944 = vcombine.high %v3640, %v3728
        %v3946 = vunpack.c.l.s4 1983009808
        %v3947 = vunpack.c.0.s8 %v3946
        %v3948 = vlaneseq
        %v3949 = vshrl.u32 %v3948, 7
        %v3950 = vsub.s32 %v3947, %v3949
        %v3951 = vrot.slane %v3943, %v3950
        %v3953 = vunpack.c.l.s4 1983009808
        %v3954 = vunpack.c.0.s8 %v3953
        %v3955 = vlaneseq
        %v3956 = vshrl.u32 %v3955, 7
        %v3957 = vsub.s32 %v3954, %v3956
        %v3958 = vrot.slane %v3944, %v3957
        %v3959 = vcombine.low %v3684, %v3772
        %v3960 = vcombine.high %v3684, %v3772
        %v3962 = vunpack.c.l.s4 1983009808
        %v3963 = vunpack.c.0.s8 %v3962
        %v3964 = vlaneseq
        %v3965 = vshrl.u32 %v3964, 7
        %v3966 = vsub.s32 %v3963, %v3965
        %v3967 = vrot.slane %v3959, %v3966
        %v3969 = vunpack.c.l.s4 1983009808
        %v3970 = vunpack.c.0.s8 %v3969
        %v3971 = vlaneseq
        %v3972 = vshrl.u32 %v3971, 7
        %v3973 = vsub.s32 %v3970, %v3972
        %v3974 = vrot.slane %v3960, %v3973
        %v3975 = vcombine.low %v3919, %v3935
        %v3976 = vcombine.high %v3919, %v3935
        %v3978 = vunpack.c.l.s4 1934713408
        %v3979 = vunpack.c.0.s8 %v3978
        %v3980 = vlaneseq
        %v3981 = vshrl.u32 %v3980, 7
        %v3982 = vsub.s32 %v3979, %v3981
        %v3983 = vrot.slane %v3975, %v3982
        %v3985 = vunpack.c.l.s4 1934713408
        %v3986 = vunpack.c.0.s8 %v3985
        %v3987 = vlaneseq
        %v3988 = vshrl.u32 %v3987, 7
        %v3989 = vsub.s32 %v3986, %v3988
        %v3990 = vrot.slane %v3976, %v3989
        %v3991 = vcombine.low %v3926, %v3942
        %v3992 = vcombine.high %v3926, %v3942
        %v3994 = vunpack.c.l.s4 1934713408
        %v3995 = vunpack.c.0.s8 %v3994
        %v3996 = vlaneseq
        %v3997 = vshrl.u32 %v3996, 7
        %v3998 = vsub.s32 %v3995, %v3997
        %v3999 = vrot.slane %v3991, %v3998
        %v4001 = vunpack.c.l.s4 1934713408
        %v4002 = vunpack.c.0.s8 %v4001
        %v4003 = vlaneseq
        %v4004 = vshrl.u32 %v4003, 7
        %v4005 = vsub.s32 %v4002, %v4004
        %v4006 = vrot.slane %v3992, %v4005
        %v4007 = vcombine.low %v3951, %v3967
        %v4008 = vcombine.high %v3951, %v3967
        %v4010 = vunpack.c.l.s4 1934713408
        %v4011 = vunpack.c.0.s8 %v4010
        %v4012 = vlaneseq
        %v4013 = vshrl.u32 %v4012, 7
        %v4014 = vsub.s32 %v4011, %v4013
        %v4015 = vrot.slane %v4007, %v4014
        %v4017 = vunpack.c.l.s4 1934713408
        %v4018 = vunpack.c.0.s8 %v4017
        %v4019 = vlaneseq
        %v4020 = vshrl.u32 %v4019, 7
        %v4021 = vsub.s32 %v4018, %v4020
        %v4022 = vrot.slane %v4008, %v4021
        %v4023 = vcombine.low %v3958, %v3974
        %v4024 = vcombine.high %v3958, %v3974
        %v4026 = vunpack.c.l.s4 1934713408
        %v4027 = vunpack.c.0.s8 %v4026
        %v4028 = vlaneseq
        %v4029 = vshrl.u32 %v4028, 7
        %v4030 = vsub.s32 %v4027, %v4029
        %v4031 = vrot.slane %v4023, %v4030
        %v4033 = vunpack.c.l.s4 1934713408
        %v4034 = vunpack.c.0.s8 %v4033
        %v4035 = vlaneseq
        %v4036 = vshrl.u32 %v4035, 7
        %v4037 = vsub.s32 %v4034, %v4036
        %v4038 = vrot.slane %v4024, %v4037
        %v4039 = vcombine.low %v3983, %v4015
        %v4040 = vcombine.high %v3983, %v4015
        %v4041 = vcombine.low %v3990, %v4022
        %v4042 = vcombine.high %v3990, %v4022
        %v4043 = vcombine.low %v3999, %v4031
        %v4044 = vcombine.high %v3999, %v4031
        %v4045 = vcombine.low %v4006, %v4038
        %v4046 = vcombine.high %v4006, %v4038
        %v4047 = vcombine.low %v3903, %v3905
        %v4048 = vcombine.high %v3903, %v3905
        %v4050 = vunpack.c.l.s4 1983009808
        %v4051 = vunpack.c.0.s8 %v4050
        %v4052 = vlaneseq
        %v4053 = vshrl.u32 %v4052, 7
        %v4054 = vsub.s32 %v4051, %v4053
        %v4055 = vrot.slane %v4047, %v4054
        %v4057 = vunpack.c.l.s4 1983009808
        %v4058 = vunpack.c.0.s8 %v4057
        %v4059 = vlaneseq
        %v4060 = vshrl.u32 %v4059, 7
        %v4061 = vsub.s32 %v4058, %v4060
        %v4062 = vrot.slane %v4048, %v4061
        %v4063 = vcombine.low %v3904, %v3906
        %v4064 = vcombine.high %v3904, %v3906
        %v4066 = vunpack.c.l.s4 1983009808
        %v4067 = vunpack.c.0.s8 %v4066
        %v4068 = vlaneseq
        %v4069 = vshrl.u32 %v4068, 7
        %v4070 = vsub.s32 %v4067, %v4069
        %v4071 = vrot.slane %v4063, %v4070
        %v4073 = vunpack.c.l.s4 1983009808
        %v4074 = vunpack.c.0.s8 %v4073
        %v4075 = vlaneseq
        %v4076 = vshrl.u32 %v4075, 7
        %v4077 = vsub.s32 %v4074, %v4076
        %v4078 = vrot.slane %v4064, %v4077
        %v4079 = vcombine.low %v3907, %v3909
        %v4080 = vcombine.high %v3907, %v3909
        %v4082 = vunpack.c.l.s4 1983009808
        %v4083 = vunpack.c.0.s8 %v4082
        %v4084 = vlaneseq
        %v4085 = vshrl.u32 %v4084, 7
        %v4086 = vsub.s32 %v4083, %v4085
        %v4087 = vrot.slane %v4079, %v4086
        %v4089 = vunpack.c.l.s4 1983009808
        %v4090 = vunpack.c.0.s8 %v4089
        %v4091 = vlaneseq
        %v4092 = vshrl.u32 %v4091, 7
        %v4093 = vsub.s32 %v4090, %v4092
        %v4094 = vrot.slane %v4080, %v4093
        %v4095 = vcombine.low %v3908, %v3910
        %v4096 = vcombine.high %v3908, %v3910
        %v4098 = vunpack.c.l.s4 1983009808
        %v4099 = vunpack.c.0.s8 %v4098
        %v4100 = vlaneseq
        %v4101 = vshrl.u32 %v4100, 7
        %v4102 = vsub.s32 %v4099, %v4101
        %v4103 = vrot.slane %v4095, %v4102
        %v4105 = vunpack.c.l.s4 1983009808
        %v4106 = vunpack.c.0.s8 %v4105
        %v4107 = vlaneseq
        %v4108 = vshrl.u32 %v4107, 7
        %v4109 = vsub.s32 %v4106, %v4108
        %v4110 = vrot.slane %v4096, %v4109
        %v4111 = vcombine.low %v4055, %v4071
        %v4112 = vcombine.high %v4055, %v4071
        %v4114 = vunpack.c.l.s4 1934713408
        %v4115 = vunpack.c.0.s8 %v4114
        %v4116 = vlaneseq
        %v4117 = vshrl.u32 %v4116, 7
        %v4118 = vsub.s32 %v4115, %v4117
        %v4119 = vrot.slane %v4111, %v4118
        %v4121 = vunpack.c.l.s4 1934713408
        %v4122 = vunpack.c.0.s8 %v4121
        %v4123 = vlaneseq
        %v4124 = vshrl.u32 %v4123, 7
        %v4125 = vsub.s32 %v4122, %v4124
        %v4126 = vrot.slane %v4112, %v4125
        %v4127 = vcombine.low %v4062, %v4078
        %v4128 = vcombine.high %v4062, %v4078
        %v4130 = vunpack.c.l.s4 1934713408
        %v4131 = vunpack.c.0.s8 %v4130
        %v4132 = vlaneseq
        %v4133 = vshrl.u32 %v4132, 7
        %v4134 = vsub.s32 %v4131, %v4133
        %v4135 = vrot.slane %v4127, %v4134
        %v4137 = vunpack.c.l.s4 1934713408
        %v4138 = vunpack.c.0.s8 %v4137
        %v4139 = vlaneseq
        %v4140 = vshrl.u32 %v4139, 7
        %v4141 = vsub.s32 %v4138, %v4140
        %v4142 = vrot.slane %v4128, %v4141
        %v4143 = vcombine.low %v4087, %v4103
        %v4144 = vcombine.high %v4087, %v4103
        %v4146 = vunpack.c.l.s4 1934713408
        %v4147 = vunpack.c.0.s8 %v4146
        %v4148 = vlaneseq
        %v4149 = vshrl.u32 %v4148, 7
        %v4150 = vsub.s32 %v4147, %v4149
        %v4151 = vrot.slane %v4143, %v4150
        %v4153 = vunpack.c.l.s4 1934713408
        %v4154 = vunpack.c.0.s8 %v4153
        %v4155 = vlaneseq
        %v4156 = vshrl.u32 %v4155, 7
        %v4157 = vsub.s32 %v4154, %v4156
        %v4158 = vrot.slane %v4144, %v4157
        %v4159 = vcombine.low %v4094, %v4110
        %v4160 = vcombine.high %v4094, %v4110
        %v4162 = vunpack.c.l.s4 1934713408
        %v4163 = vunpack.c.0.s8 %v4162
        %v4164 = vlaneseq
        %v4165 = vshrl.u32 %v4164, 7
        %v4166 = vsub.s32 %v4163, %v4165
        %v4167 = vrot.slane %v4159, %v4166
        %v4169 = vunpack.c.l.s4 1934713408
        %v4170 = vunpack.c.0.s8 %v4169
        %v4171 = vlaneseq
        %v4172 = vshrl.u32 %v4171, 7
        %v4173 = vsub.s32 %v4170, %v4172
        %v4174 = vrot.slane %v4160, %v4173
        %v4175 = vcombine.low %v4119, %v4151
        %v4176 = vcombine.high %v4119, %v4151
        %v4177 = vcombine.low %v4126, %v4158
        %v4178 = vcombine.high %v4126, %v4158
        %v4179 = vcombine.low %v4135, %v4167
        %v4180 = vcombine.high %v4135, %v4167
        %v4181 = vcombine.low %v4142, %v4174
        %v4182 = vcombine.high %v4142, %v4174
        %v4183 = vcombine.low %v4039, %v4041
        %v4184 = vcombine.high %v4039, %v4041
        %v4186 = vunpack.c.l.s4 1983009808
        %v4187 = vunpack.c.0.s8 %v4186
        %v4188 = vlaneseq
        %v4189 = vshrl.u32 %v4188, 7
        %v4190 = vsub.s32 %v4187, %v4189
        %v4191 = vrot.slane %v4183, %v4190
        %v4193 = vunpack.c.l.s4 1983009808
        %v4194 = vunpack.c.0.s8 %v4193
        %v4195 = vlaneseq
        %v4196 = vshrl.u32 %v4195, 7
        %v4197 = vsub.s32 %v4194, %v4196
        %v4198 = vrot.slane %v4184, %v4197
        %v4199 = vcombine.low %v4040, %v4042
        %v4200 = vcombine.high %v4040, %v4042
        %v4202 = vunpack.c.l.s4 1983009808
        %v4203 = vunpack.c.0.s8 %v4202
        %v4204 = vlaneseq
        %v4205 = vshrl.u32 %v4204, 7
        %v4206 = vsub.s32 %v4203, %v4205
        %v4207 = vrot.slane %v4199, %v4206
        %v4209 = vunpack.c.l.s4 1983009808
        %v4210 = vunpack.c.0.s8 %v4209
        %v4211 = vlaneseq
        %v4212 = vshrl.u32 %v4211, 7
        %v4213 = vsub.s32 %v4210, %v4212
        %v4214 = vrot.slane %v4200, %v4213
        %v4215 = vcombine.low %v4043, %v4045
        %v4216 = vcombine.high %v4043, %v4045
        %v4218 = vunpack.c.l.s4 1983009808
        %v4219 = vunpack.c.0.s8 %v4218
        %v4220 = vlaneseq
        %v4221 = vshrl.u32 %v4220, 7
        %v4222 = vsub.s32 %v4219, %v4221
        %v4223 = vrot.slane %v4215, %v4222
        %v4225 = vunpack.c.l.s4 1983009808
        %v4226 = vunpack.c.0.s8 %v4225
        %v4227 = vlaneseq
        %v4228 = vshrl.u32 %v4227, 7
        %v4229 = vsub.s32 %v4226, %v4228
        %v4230 = vrot.slane %v4216, %v4229
        %v4231 = vcombine.low %v4044, %v4046
        %v4232 = vcombine.high %v4044, %v4046
        %v4234 = vunpack.c.l.s4 1983009808
        %v4235 = vunpack.c.0.s8 %v4234
        %v4236 = vlaneseq
        %v4237 = vshrl.u32 %v4236, 7
        %v4238 = vsub.s32 %v4235, %v4237
        %v4239 = vrot.slane %v4231, %v4238
        %v4241 = vunpack.c.l.s4 1983009808
        %v4242 = vunpack.c.0.s8 %v4241
        %v4243 = vlaneseq
        %v4244 = vshrl.u32 %v4243, 7
        %v4245 = vsub.s32 %v4242, %v4244
        %v4246 = vrot.slane %v4232, %v4245
        %v4247 = vcombine.low %v4191, %v4207
        %v4248 = vcombine.high %v4191, %v4207
        %v4250 = vunpack.c.l.s4 1934713408
        %v4251 = vunpack.c.0.s8 %v4250
        %v4252 = vlaneseq
        %v4253 = vshrl.u32 %v4252, 7
        %v4254 = vsub.s32 %v4251, %v4253
        %v4255 = vrot.slane %v4247, %v4254
        %v4257 = vunpack.c.l.s4 1934713408
        %v4258 = vunpack.c.0.s8 %v4257
        %v4259 = vlaneseq
        %v4260 = vshrl.u32 %v4259, 7
        %v4261 = vsub.s32 %v4258, %v4260
        %v4262 = vrot.slane %v4248, %v4261
        %v4263 = vcombine.low %v4198, %v4214
        %v4264 = vcombine.high %v4198, %v4214
        %v4266 = vunpack.c.l.s4 1934713408
        %v4267 = vunpack.c.0.s8 %v4266
        %v4268 = vlaneseq
        %v4269 = vshrl.u32 %v4268, 7
        %v4270 = vsub.s32 %v4267, %v4269
        %v4271 = vrot.slane %v4263, %v4270
        %v4273 = vunpack.c.l.s4 1934713408
        %v4274 = vunpack.c.0.s8 %v4273
        %v4275 = vlaneseq
        %v4276 = vshrl.u32 %v4275, 7
        %v4277 = vsub.s32 %v4274, %v4276
        %v4278 = vrot.slane %v4264, %v4277
        %v4279 = vcombine.low %v4223, %v4239
        %v4280 = vcombine.high %v4223, %v4239
        %v4282 = vunpack.c.l.s4 1934713408
        %v4283 = vunpack.c.0.s8 %v4282
        %v4284 = vlaneseq
        %v4285 = vshrl.u32 %v4284, 7
        %v4286 = vsub.s32 %v4283, %v4285
        %v4287 = vrot.slane %v4279, %v4286
        %v4289 = vunpack.c.l.s4 1934713408
        %v4290 = vunpack.c.0.s8 %v4289
        %v4291 = vlaneseq
        %v4292 = vshrl.u32 %v4291, 7
        %v4293 = vsub.s32 %v4290, %v4292
        %v4294 = vrot.slane %v4280, %v4293
        %v4295 = vcombine.low %v4230, %v4246
        %v4296 = vcombine.high %v4230, %v4246
        %v4298 = vunpack.c.l.s4 1934713408
        %v4299 = vunpack.c.0.s8 %v4298
        %v4300 = vlaneseq
        %v4301 = vshrl.u32 %v4300, 7
        %v4302 = vsub.s32 %v4299, %v4301
        %v4303 = vrot.slane %v4295, %v4302
        %v4305 = vunpack.c.l.s4 1934713408
        %v4306 = vunpack.c.0.s8 %v4305
        %v4307 = vlaneseq
        %v4308 = vshrl.u32 %v4307, 7
        %v4309 = vsub.s32 %v4306, %v4308
        %v4310 = vrot.slane %v4296, %v4309
        %v4311 = vcombine.low %v4255, %v4287
        %v4312 = vcombine.high %v4255, %v4287
        %v4313 = vcombine.low %v4262, %v4294
        %v4314 = vcombine.high %v4262, %v4294
        %v4315 = vcombine.low %v4271, %v4303
        %v4316 = vcombine.high %v4271, %v4303
        %v4317 = vcombine.low %v4278, %v4310
        %v4318 = vcombine.high %v4278, %v4310
        %4321 = vrot.lane.b32.xlu0 %v4176, 16
        %v4322 = vpop.permute.xlu0 %4321
        %4323 = vrot.lane.b32.xlu0 %v4312, 16
        %v4324 = vpop.permute.xlu0 %4323
        %4329 = vrot.lane.b32.xlu0 %v4177, 32
        %v4330 = vpop.permute.xlu0 %4329
        %4331 = vrot.lane.b32.xlu0 %v4313, 32
        %v4332 = vpop.permute.xlu0 %4331
        %4337 = vrot.lane.b32.xlu0 %v4178, 48
        %v4338 = vpop.permute.xlu0 %4337
        %4339 = vrot.lane.b32.xlu0 %v4314, 48
        %v4340 = vpop.permute.xlu0 %4339
        %4345 = vrot.lane.b32.xlu0 %v4179, 64
        %v4346 = vpop.permute.xlu0 %4345
        %4347 = vrot.lane.b32.xlu0 %v4315, 64
        %v4348 = vpop.permute.xlu0 %4347
        %4353 = vrot.lane.b32.xlu0 %v4180, 80
        %v4354 = vpop.permute.xlu0 %4353
        %4355 = vrot.lane.b32.xlu0 %v4316, 80
        %v4356 = vpop.permute.xlu0 %4355
        %4361 = vrot.lane.b32.xlu0 %v4181, 96
        %v4362 = vpop.permute.xlu0 %4361
        %4363 = vrot.lane.b32.xlu0 %v4317, 96
        %v4364 = vpop.permute.xlu0 %4363
        %4369 = vrot.lane.b32.xlu0 %v4182, 112
        %v4370 = vpop.permute.xlu0 %4369
        %4371 = vrot.lane.b32.xlu0 %v4318, 112
        %v4372 = vpop.permute.xlu0 %4371
        %v4375 = vsel %vm2854, %v4175, %v4322
        %v4376 = vsel %vm2854, %v4311, %v4324
        %vm4377 = vcmask 261120
        %v4378 = vsel %vm4377, %v4375, %v4330
        %v4379 = vsel %vm4377, %v4376, %v4332
        %vm4380 = vcmask 392192
        %v4381 = vsel %vm4380, %v4378, %v4338
        %v4382 = vsel %vm4380, %v4379, %v4340
        %vm4383 = vcmask 523264
        %v4384 = vsel %vm4383, %v4381, %v4346
        %v4385 = vsel %vm4383, %v4382, %v4348
        %vm4386 = vcmask 654336
        %v4387 = vsel %vm4386, %v4384, %v4354
        %v4388 = vsel %vm4386, %v4385, %v4356
        %vm4389 = vcmask 785408
        %v4390 = vsel %vm4389, %v4387, %v4362
        %v4391 = vsel %vm4389, %v4388, %v4364
        %vm4392 = vcmask 916480
        %v4393 = vsel %vm4392, %v4390, %v4370
        %v4394 = vsel %vm4392, %v4391, %v4372
        %v4395 = vpack.c.bf16 %v4394, %v4393
        %v4396 = vld [vmem:[%s667] sm:$0xf]
        %v4397 = vld [vmem:[%s667 + $0x4] sm:$0xf]
        %v4398 = vld [vmem:[%s667 + $0x8] sm:$0xf]
        %v4399 = vld [vmem:[%s667 + $0xc] sm:$0xf]
        %v4400 = vld [vmem:[%s667 + $0x10] sm:$0xf]
        %v4401 = vld [vmem:[%s667 + $0x14] sm:$0xf]
        %v4402 = vld [vmem:[%s667 + $0x18] sm:$0xf]
        %v4403 = vld [vmem:[%s667 + $0x1c] sm:$0xf]
        %v4404 = vld [vmem:[%s667 + $0x20] sm:$0xf]
        %v4405 = vld [vmem:[%s667 + $0x24] sm:$0xf]
        %v4406 = vld [vmem:[%s667 + $0x28] sm:$0xf]
        %v4407 = vld [vmem:[%s667 + $0x2c] sm:$0xf]
        %v4408 = vld [vmem:[%s667 + $0x30] sm:$0xf]
        %v4409 = vld [vmem:[%s667 + $0x34] sm:$0xf]
        %v4410 = vld [vmem:[%s667 + $0x38] sm:$0xf]
        %v4411 = vld [vmem:[%s667 + $0x3c] sm:$0xf]
        %v4412 = vld [vmem:[%s784] sm:$0x1]
        %v4414 = vlaneseq
        %v4415 = vshrl.u32 %v4414, 7
        %v4416 = vsub.s32 0, %v4415
        %v4417 = vrot.slane %v4412, %v4416
        %v4435 = vunpack.c.l.b16 %v4396
        %v4436 = vunpack.c.l.b16 %v4397
        %v4437 = vunpack.c.l.b16 %v4398
        %v4438 = vunpack.c.l.b16 %v4399
        %v4439 = vunpack.c.l.b16 %v4400
        %v4440 = vunpack.c.l.b16 %v4401
        %v4441 = vunpack.c.l.b16 %v4402
        %v4442 = vunpack.c.l.b16 %v4403
        %v4443 = vunpack.c.l.b16 %v4404
        %v4444 = vunpack.c.l.b16 %v4405
        %v4445 = vunpack.c.l.b16 %v4406
        %v4446 = vunpack.c.l.b16 %v4407
        %v4447 = vunpack.c.l.b16 %v4408
        %v4448 = vunpack.c.l.b16 %v4409
        %v4449 = vunpack.c.l.b16 %v4410
        %v4450 = vunpack.c.l.b16 %v4411
        %v4451 = vpack.c.b16 %v4436, %v4435
        %v4452 = vpack.c.b16 %v4438, %v4437
        %v4453 = vpack.c.b16 %v4440, %v4439
        %v4454 = vpack.c.b16 %v4442, %v4441
        %v4455 = vpack.c.b16 %v4444, %v4443
        %v4456 = vpack.c.b16 %v4446, %v4445
        %v4457 = vpack.c.b16 %v4448, %v4447
        %v4458 = vpack.c.b16 %v4450, %v4449
        %4467 = vmatprep.subr.bf16.mxu0 0
        %4468 = vmatpush1.bf16.msra.mxu0 %v4451
        %4469 = vmatprep.subr.bf16.mxu0 0
        %4470 = vmatpush1.bf16.msra.mxu0 %v4452
        %4471 = vmatprep.subr.bf16.mxu0 0
        %4472 = vmatpush1.bf16.msra.mxu0 %v4453
        %4473 = vmatprep.subr.bf16.mxu0 0
        %4474 = vmatpush1.bf16.msra.mxu0 %v4454
        %4475 = vmatprep.subr.bf16.mxu0 0
        %4476 = vmatpush1.bf16.msra.mxu0 %v4455
        %4477 = vmatprep.subr.bf16.mxu0 0
        %4478 = vmatpush1.bf16.msra.mxu0 %v4456
        %4479 = vmatprep.subr.bf16.mxu0 0
        %4480 = vmatpush1.bf16.msra.mxu0 %v4457
        %4481 = vmatprep.subr.bf16.mxu0 0
        %4482 = vmatpush1.bf16.msra.mxu0 %v4458
        %4483 = vmatprep.subr.bf16.mxu0 0
        %4484 = vmatpush1.bf16.msra.mxu0 0
        %4485 = vmatprep.subr.bf16.mxu0 0
        %4486 = vmatpush1.bf16.msra.mxu0 0
        %4487 = vmatprep.subr.bf16.mxu0 0
        %4488 = vmatpush1.bf16.msra.mxu0 0
        %4489 = vmatprep.subr.bf16.mxu0 0
        %4490 = vmatpush1.bf16.msra.mxu0 0
        %4491 = vmatprep.subr.bf16.mxu0 0
        %4492 = vmatpush1.bf16.msra.mxu0 0
        %4493 = vmatprep.subr.bf16.mxu0 0
        %4494 = vmatpush1.bf16.msra.mxu0 0
        %4495 = vmatprep.subr.bf16.mxu0 0
        %4496 = vmatpush1.bf16.msra.mxu0 0
        %4497 = vmatprep.subr.bf16.mxu0 0
        %4498 = vmatpush1.bf16.msra.mxu0 0
        %4499 = vmatprep.mubr.bf16.mxu0 0
        %4500 = vmatmul.mubr.bf16.gmra.mrb[0].mxu0 %v4395
        %v4501 = vpop.f32.mrb[0].mxu0
        %v4502 = vadd.f32 %v4417, %v4501
        %v4503 = vpop.f32.mrb[0].mxu0
        %v4504 = vpop.f32.mrb[0].mxu0
        %v4505 = vadd.f32 %v4417, %v4504
        %v4506 = vpop.f32.mrb[0].mxu0
        %4507 = vdwg.mxu0
        %v4508 = vadd.f32 %v810, %v4502
        %v4509 = vadd.f32 %v811, %v4505
        %v4510 = vld [vmem:[%s794] sm:$0x1]
        %v4511 = vld [vmem:[%s797] sm:$0x1]
        %4512 = vadd.xlane.f32.xlu0 %v4508
        %v4513 = vpop.xlane.xlu0 %4512
        %4514 = vadd.xlane.f32.xlu0 %v4509
        %v4515 = vpop.xlane.xlu0 %4514
        %v4516 = vrcp.pop 128.0
        %v4517 = vmul.f32 %v4513, %v4516
        %v4518 = vmul.f32 %v4515, %v4516
        %v4519 = vsub.f32 %v4508, %v4517
        %v4520 = vsub.f32 %v4509, %v4518
        %v4521 = vmul.f32 %v4519, %v4519
        %v4522 = vmul.f32 %v4520, %v4520
        %4523 = vadd.xlane.f32.xlu0 %v4521
        %v4524 = vpop.xlane.xlu0 %4523
        %4525 = vadd.xlane.f32.xlu0 %v4522
        %v4526 = vpop.xlane.xlu0 %4525
        %v4527 = vmul.f32 %v4524, %v4516
        %v4528 = vmul.f32 %v4526, %v4516
        %v4529 = vadd.f32 %v4527, 1e-05
        %v4530 = vadd.f32 %v4528, 1e-05
        %v4531 = vrsqrt.pop %v4529
        %v4532 = vrsqrt.pop %v4530
        %v4533 = vmul.f32 %v4519, %v4531
        %v4534 = vmul.f32 %v4520, %v4532
        %v4536 = vlaneseq
        %v4537 = vshrl.u32 %v4536, 7
        %v4538 = vsub.s32 0, %v4537
        %v4539 = vrot.slane %v4510, %v4538
        %v4541 = vmul.f32 %v4533, %v4539
        %v4542 = vmul.f32 %v4534, %v4539
        %v4544 = vlaneseq
        %v4545 = vshrl.u32 %v4544, 7
        %v4546 = vsub.s32 0, %v4545
        %v4547 = vrot.slane %v4511, %v4546
        %v4549 = vadd.f32 %v4541, %v4547
        %v4550 = vadd.f32 %v4542, %v4547
        %v4551 = vpack.c.bf16 %v4550, %v4549
        %v4552 = vld [vmem:[%s676] sm:$0xff]
        %v4553 = vld [vmem:[%s676 + $0x8] sm:$0xff]
        %v4554 = vld [vmem:[%s676 + $0x10] sm:$0xff]
        %v4555 = vld [vmem:[%s676 + $0x18] sm:$0xff]
        %v4556 = vld [vmem:[%s676 + $0x20] sm:$0xff]
        %v4557 = vld [vmem:[%s676 + $0x28] sm:$0xff]
        %v4558 = vld [vmem:[%s676 + $0x30] sm:$0xff]
        %v4559 = vld [vmem:[%s676 + $0x38] sm:$0xff]
        %v4560 = vld [vmem:[%s676 + $0x40] sm:$0xff]
        %v4561 = vld [vmem:[%s676 + $0x48] sm:$0xff]
        %v4562 = vld [vmem:[%s676 + $0x50] sm:$0xff]
        %v4563 = vld [vmem:[%s676 + $0x58] sm:$0xff]
        %v4564 = vld [vmem:[%s676 + $0x60] sm:$0xff]
        %v4565 = vld [vmem:[%s676 + $0x68] sm:$0xff]
        %v4566 = vld [vmem:[%s676 + $0x70] sm:$0xff]
        %v4567 = vld [vmem:[%s676 + $0x78] sm:$0xff]
        %v4568 = vld [vmem:[%s788] sm:$0x3]
        %v4570 = vlaneseq
        %v4571 = vshrl.u32 %v4570, 7
        %v4572 = vsub.s32 0, %v4571
        %v4573 = vrot.slane %v4568, %v4572
        %v4574 = vlaneseq
        %v4575 = vshrl.u32 %v4574, 7
        %v4576 = vsub.s32 1, %v4575
        %v4577 = vrot.slane %v4568, %v4576
        %v4596 = vunpack.c.l.b16 %v4552
        %v4597 = vunpack.c.h.b16 %v4552
        %v4598 = vunpack.c.l.b16 %v4553
        %v4599 = vunpack.c.h.b16 %v4553
        %v4600 = vunpack.c.l.b16 %v4554
        %v4601 = vunpack.c.h.b16 %v4554
        %v4602 = vunpack.c.l.b16 %v4555
        %v4603 = vunpack.c.h.b16 %v4555
        %v4604 = vunpack.c.l.b16 %v4556
        %v4605 = vunpack.c.h.b16 %v4556
        %v4606 = vunpack.c.l.b16 %v4557
        %v4607 = vunpack.c.h.b16 %v4557
        %v4608 = vunpack.c.l.b16 %v4558
        %v4609 = vunpack.c.h.b16 %v4558
        %v4610 = vunpack.c.l.b16 %v4559
        %v4611 = vunpack.c.h.b16 %v4559
        %v4612 = vunpack.c.l.b16 %v4560
        %v4613 = vunpack.c.h.b16 %v4560
        %v4614 = vunpack.c.l.b16 %v4561
        %v4615 = vunpack.c.h.b16 %v4561
        %v4616 = vunpack.c.l.b16 %v4562
        %v4617 = vunpack.c.h.b16 %v4562
        %v4618 = vunpack.c.l.b16 %v4563
        %v4619 = vunpack.c.h.b16 %v4563
        %v4620 = vunpack.c.l.b16 %v4564
        %v4621 = vunpack.c.h.b16 %v4564
        %v4622 = vunpack.c.l.b16 %v4565
        %v4623 = vunpack.c.h.b16 %v4565
        %v4624 = vunpack.c.l.b16 %v4566
        %v4625 = vunpack.c.h.b16 %v4566
        %v4626 = vunpack.c.l.b16 %v4567
        %v4627 = vunpack.c.h.b16 %v4567
        %v4628 = vpack.c.b16 %v4598, %v4596
        %v4629 = vpack.c.b16 %v4599, %v4597
        %v4630 = vpack.c.b16 %v4602, %v4600
        %v4631 = vpack.c.b16 %v4603, %v4601
        %v4632 = vpack.c.b16 %v4606, %v4604
        %v4633 = vpack.c.b16 %v4607, %v4605
        %v4634 = vpack.c.b16 %v4610, %v4608
        %v4635 = vpack.c.b16 %v4611, %v4609
        %v4636 = vpack.c.b16 %v4614, %v4612
        %v4637 = vpack.c.b16 %v4615, %v4613
        %v4638 = vpack.c.b16 %v4618, %v4616
        %v4639 = vpack.c.b16 %v4619, %v4617
        %v4640 = vpack.c.b16 %v4622, %v4620
        %v4641 = vpack.c.b16 %v4623, %v4621
        %v4642 = vpack.c.b16 %v4626, %v4624
        %v4643 = vpack.c.b16 %v4627, %v4625
        %4660 = vmatprep.subr.bf16.mxu0 %v4629
        %4661 = vmatpush1.bf16.msra.mxu0 %v4628
        %4662 = vmatprep.subr.bf16.mxu0 %v4631
        %4663 = vmatpush1.bf16.msra.mxu0 %v4630
        %4664 = vmatprep.subr.bf16.mxu0 %v4633
        %4665 = vmatpush1.bf16.msra.mxu0 %v4632
        %4666 = vmatprep.subr.bf16.mxu0 %v4635
        %4667 = vmatpush1.bf16.msra.mxu0 %v4634
        %4668 = vmatprep.subr.bf16.mxu0 %v4637
        %4669 = vmatpush1.bf16.msra.mxu0 %v4636
        %4670 = vmatprep.subr.bf16.mxu0 %v4639
        %4671 = vmatpush1.bf16.msra.mxu0 %v4638
        %4672 = vmatprep.subr.bf16.mxu0 %v4641
        %4673 = vmatpush1.bf16.msra.mxu0 %v4640
        %4674 = vmatprep.subr.bf16.mxu0 %v4643
        %4675 = vmatpush1.bf16.msra.mxu0 %v4642
        %4676 = vmatprep.subr.bf16.mxu0 0
        %4677 = vmatpush1.bf16.msra.mxu0 0
        %4678 = vmatprep.subr.bf16.mxu0 0
        %4679 = vmatpush1.bf16.msra.mxu0 0
        %4680 = vmatprep.subr.bf16.mxu0 0
        %4681 = vmatpush1.bf16.msra.mxu0 0
        %4682 = vmatprep.subr.bf16.mxu0 0
        %4683 = vmatpush1.bf16.msra.mxu0 0
        %4684 = vmatprep.subr.bf16.mxu0 0
        %4685 = vmatpush1.bf16.msra.mxu0 0
        %4686 = vmatprep.subr.bf16.mxu0 0
        %4687 = vmatpush1.bf16.msra.mxu0 0
        %4688 = vmatprep.subr.bf16.mxu0 0
        %4689 = vmatpush1.bf16.msra.mxu0 0
        %4690 = vmatprep.subr.bf16.mxu0 0
        %4691 = vmatpush1.bf16.msra.mxu0 0
        %4692 = vmatprep.mubr.bf16.mxu0 0
        %4693 = vmatmul.mubr.bf16.gmra.mrb[0].mxu0 %v4551
        %v4694 = vpop.f32.mrb[0].mxu0
        %v4695 = vadd.f32 %v4573, %v4694
        %v4696 = vpop.f32.mrb[0].mxu0
        %v4697 = vadd.f32 %v4577, %v4696
        %v4698 = vpop.f32.mrb[0].mxu0
        %v4699 = vadd.f32 %v4573, %v4698
        %v4700 = vpop.f32.mrb[0].mxu0
        %v4701 = vadd.f32 %v4577, %v4700
        %4702 = vdwg.mxu0
        %v4703 = vmax.f32 %v4695, 0.0
        %v4704 = vmax.f32 %v4697, 0.0
        %v4705 = vmax.f32 %v4699, 0.0
        %v4706 = vmax.f32 %v4701, 0.0
        %v4707 = vpack.c.bf16 %v4705, %v4703
        %v4708 = vpack.c.bf16 %v4706, %v4704
        %v4709 = vld [vmem:[%s685] sm:$0xf]
        %v4710 = vld [vmem:[%s685 + $0x4] sm:$0xf]
        %v4711 = vld [vmem:[%s685 + $0x8] sm:$0xf]
        %v4712 = vld [vmem:[%s685 + $0xc] sm:$0xf]
        %v4713 = vld [vmem:[%s685 + $0x10] sm:$0xf]
        %v4714 = vld [vmem:[%s685 + $0x14] sm:$0xf]
        %v4715 = vld [vmem:[%s685 + $0x18] sm:$0xf]
        %v4716 = vld [vmem:[%s685 + $0x1c] sm:$0xf]
        %v4717 = vld [vmem:[%s685 + $0x20] sm:$0xf]
        %v4718 = vld [vmem:[%s685 + $0x24] sm:$0xf]
        %v4719 = vld [vmem:[%s685 + $0x28] sm:$0xf]
        %v4720 = vld [vmem:[%s685 + $0x2c] sm:$0xf]
        %v4721 = vld [vmem:[%s685 + $0x30] sm:$0xf]
        %v4722 = vld [vmem:[%s685 + $0x34] sm:$0xf]
        %v4723 = vld [vmem:[%s685 + $0x38] sm:$0xf]
        %v4724 = vld [vmem:[%s685 + $0x3c] sm:$0xf]
        %v4725 = vld [vmem:[%s685 + $0x40] sm:$0xf]
        %v4726 = vld [vmem:[%s685 + $0x44] sm:$0xf]
        %v4727 = vld [vmem:[%s685 + $0x48] sm:$0xf]
        %v4728 = vld [vmem:[%s685 + $0x4c] sm:$0xf]
        %v4729 = vld [vmem:[%s685 + $0x50] sm:$0xf]
        %v4730 = vld [vmem:[%s685 + $0x54] sm:$0xf]
        %v4731 = vld [vmem:[%s685 + $0x58] sm:$0xf]
        %v4732 = vld [vmem:[%s685 + $0x5c] sm:$0xf]
        %v4733 = vld [vmem:[%s685 + $0x60] sm:$0xf]
        %v4734 = vld [vmem:[%s685 + $0x64] sm:$0xf]
        %v4735 = vld [vmem:[%s685 + $0x68] sm:$0xf]
        %v4736 = vld [vmem:[%s685 + $0x6c] sm:$0xf]
        %v4737 = vld [vmem:[%s685 + $0x70] sm:$0xf]
        %v4738 = vld [vmem:[%s685 + $0x74] sm:$0xf]
        %v4739 = vld [vmem:[%s685 + $0x78] sm:$0xf]
        %v4740 = vld [vmem:[%s685 + $0x7c] sm:$0xf]
        %v4741 = vld [vmem:[%s791] sm:$0x1]
        %v4743 = vlaneseq
        %v4744 = vshrl.u32 %v4743, 7
        %v4745 = vsub.s32 0, %v4744
        %v4746 = vrot.slane %v4741, %v4745
        %v4780 = vunpack.c.l.b16 %v4709
        %v4781 = vunpack.c.l.b16 %v4710
        %v4782 = vunpack.c.l.b16 %v4711
        %v4783 = vunpack.c.l.b16 %v4712
        %v4784 = vunpack.c.l.b16 %v4713
        %v4785 = vunpack.c.l.b16 %v4714
        %v4786 = vunpack.c.l.b16 %v4715
        %v4787 = vunpack.c.l.b16 %v4716
        %v4788 = vunpack.c.l.b16 %v4717
        %v4789 = vunpack.c.l.b16 %v4718
        %v4790 = vunpack.c.l.b16 %v4719
        %v4791 = vunpack.c.l.b16 %v4720
        %v4792 = vunpack.c.l.b16 %v4721
        %v4793 = vunpack.c.l.b16 %v4722
        %v4794 = vunpack.c.l.b16 %v4723
        %v4795 = vunpack.c.l.b16 %v4724
        %v4796 = vunpack.c.l.b16 %v4725
        %v4797 = vunpack.c.l.b16 %v4726
        %v4798 = vunpack.c.l.b16 %v4727
        %v4799 = vunpack.c.l.b16 %v4728
        %v4800 = vunpack.c.l.b16 %v4729
        %v4801 = vunpack.c.l.b16 %v4730
        %v4802 = vunpack.c.l.b16 %v4731
        %v4803 = vunpack.c.l.b16 %v4732
        %v4804 = vunpack.c.l.b16 %v4733
        %v4805 = vunpack.c.l.b16 %v4734
        %v4806 = vunpack.c.l.b16 %v4735
        %v4807 = vunpack.c.l.b16 %v4736
        %v4808 = vunpack.c.l.b16 %v4737
        %v4809 = vunpack.c.l.b16 %v4738
        %v4810 = vunpack.c.l.b16 %v4739
        %v4811 = vunpack.c.l.b16 %v4740
        %v4812 = vpack.c.b16 %v4781, %v4780
        %v4813 = vpack.c.b16 %v4783, %v4782
        %v4814 = vpack.c.b16 %v4785, %v4784
        %v4815 = vpack.c.b16 %v4787, %v4786
        %v4816 = vpack.c.b16 %v4789, %v4788
        %v4817 = vpack.c.b16 %v4791, %v4790
        %v4818 = vpack.c.b16 %v4793, %v4792
        %v4819 = vpack.c.b16 %v4795, %v4794
        %v4820 = vpack.c.b16 %v4797, %v4796
        %v4821 = vpack.c.b16 %v4799, %v4798
        %v4822 = vpack.c.b16 %v4801, %v4800
        %v4823 = vpack.c.b16 %v4803, %v4802
        %v4824 = vpack.c.b16 %v4805, %v4804
        %v4825 = vpack.c.b16 %v4807, %v4806
        %v4826 = vpack.c.b16 %v4809, %v4808
        %v4827 = vpack.c.b16 %v4811, %v4810
        %4844 = vmatprep.subr.bf16.mxu0 0
        %4845 = vmatpush1.bf16.msra.mxu0 %v4812
        %4846 = vmatprep.subr.bf16.mxu0 0
        %4847 = vmatpush1.bf16.msra.mxu0 %v4813
        %4848 = vmatprep.subr.bf16.mxu0 0
        %4849 = vmatpush1.bf16.msra.mxu0 %v4814
        %4850 = vmatprep.subr.bf16.mxu0 0
        %4851 = vmatpush1.bf16.msra.mxu0 %v4815
        %4852 = vmatprep.subr.bf16.mxu0 0
        %4853 = vmatpush1.bf16.msra.mxu0 %v4816
        %4854 = vmatprep.subr.bf16.mxu0 0
        %4855 = vmatpush1.bf16.msra.mxu0 %v4817
        %4856 = vmatprep.subr.bf16.mxu0 0
        %4857 = vmatpush1.bf16.msra.mxu0 %v4818
        %4858 = vmatprep.subr.bf16.mxu0 0
        %4859 = vmatpush1.bf16.msra.mxu0 %v4819
        %4860 = vmatprep.subr.bf16.mxu0 0
        %4861 = vmatpush1.bf16.msra.mxu0 %v4820
        %4862 = vmatprep.subr.bf16.mxu0 0
        %4863 = vmatpush1.bf16.msra.mxu0 %v4821
        %4864 = vmatprep.subr.bf16.mxu0 0
        %4865 = vmatpush1.bf16.msra.mxu0 %v4822
        %4866 = vmatprep.subr.bf16.mxu0 0
        %4867 = vmatpush1.bf16.msra.mxu0 %v4823
        %4868 = vmatprep.subr.bf16.mxu0 0
        %4869 = vmatpush1.bf16.msra.mxu0 %v4824
        %4870 = vmatprep.subr.bf16.mxu0 0
        %4871 = vmatpush1.bf16.msra.mxu0 %v4825
        %4872 = vmatprep.subr.bf16.mxu0 0
        %4873 = vmatpush1.bf16.msra.mxu0 %v4826
        %4874 = vmatprep.subr.bf16.mxu0 0
        %4875 = vmatpush1.bf16.msra.mxu0 %v4827
        %4876 = vmatprep.mubr.bf16.mxu0 %v4708
        %4877 = vmatmul.mubr.bf16.gmra.mrb[0].mxu0 %v4707
        %v4878 = vpop.f32.mrb[0].mxu0
        %v4879 = vadd.f32 %v4746, %v4878
        %v4880 = vpop.f32.mrb[0].mxu0
        %v4881 = vpop.f32.mrb[0].mxu0
        %v4882 = vadd.f32 %v4746, %v4881
        %v4883 = vpop.f32.mrb[0].mxu0
        %4884 = vdwg.mxu0
        %v4885 = vadd.f32 %v4549, %v4879
        %v4886 = vadd.f32 %v4550, %v4882
        %v4887 = vld [vmem:[%s693] sm:$0x1]
        %v4888 = vld [vmem:[%s800] sm:$0x1]
        %4889 = vadd.xlane.f32.xlu0 %v4885
        %v4890 = vpop.xlane.xlu0 %4889
        %4891 = vadd.xlane.f32.xlu0 %v4886
        %v4892 = vpop.xlane.xlu0 %4891
        %v4893 = vmul.f32 %v4890, %v4516
        %v4894 = vmul.f32 %v4892, %v4516
        %v4895 = vsub.f32 %v4885, %v4893
        %v4896 = vsub.f32 %v4886, %v4894
        %v4897 = vmul.f32 %v4895, %v4895
        %v4898 = vmul.f32 %v4896, %v4896
        %4899 = vadd.xlane.f32.xlu0 %v4897
        %v4900 = vpop.xlane.xlu0 %4899
        %4901 = vadd.xlane.f32.xlu0 %v4898
        %v4902 = vpop.xlane.xlu0 %4901
        %v4903 = vmul.f32 %v4900, %v4516
        %v4904 = vmul.f32 %v4902, %v4516
        %v4905 = vadd.f32 %v4903, 1e-05
        %v4906 = vadd.f32 %v4904, 1e-05
        %v4907 = vrsqrt.pop %v4905
        %v4908 = vrsqrt.pop %v4906
        %v4909 = vmul.f32 %v4895, %v4907
        %v4910 = vmul.f32 %v4896, %v4908
        %v4912 = vlaneseq
        %v4913 = vshrl.u32 %v4912, 7
        %v4914 = vsub.s32 0, %v4913
        %v4915 = vrot.slane %v4887, %v4914
        %v4917 = vmul.f32 %v4909, %v4915
        %v4918 = vmul.f32 %v4910, %v4915
        %v4920 = vlaneseq
        %v4921 = vshrl.u32 %v4920, 7
        %v4922 = vsub.s32 0, %v4921
        %v4923 = vrot.slane %v4888, %v4922
        %v4925 = vadd.f32 %v4917, %v4923
        %v4926 = vadd.f32 %v4918, %v4923
        %4927 = vst [vmem:[#allocation2] sm:$0xff] %v4925
        %4928 = vst [vmem:[#allocation2 + $0x8] sm:$0xff] %v4926
        %p4929 = scmp.eq.s32.totalorder %s38, 5
        // Predicated region
        $region117: #{classifier3_forward.1} parent=79 // pred_check
          %p4930 = pneg %p4929
        $region118: #{classifier3_forward.1} parent=79 // pred_check_branch
          %4932 = sbr.rel (%p4930) target = $region120
        $region119: #{classifier3_forward.1} parent=79 // pred_region
          %v4933 = vadd.f32 %v4925, %v4926
          %v4934 = vrot.slane %v4933, 4
          %v4935 = vadd.f32 %v4933, %v4934
          %v4936 = vrot.slane %v4935, 2
          %v4937 = vadd.f32 %v4935, %v4936
          %v4938 = vrot.slane %v4937, 1
          %v4939 = vadd.f32 %v4937, %v4938
          %v4940 = vpack.c.bf16 %v4939, %v4939
          %v4941 = vld [vmem:[#allocation15] sm:$0xf]
          %v4942 = vld [vmem:[#allocation15 + $0x4] sm:$0xf]
          %v4943 = vld [vmem:[#allocation15 + $0x8] sm:$0xf]
          %v4944 = vld [vmem:[#allocation15 + $0xc] sm:$0xf]
          %v4945 = vld [vmem:[#allocation15 + $0x10] sm:$0xf]
          %v4946 = vld [vmem:[#allocation15 + $0x14] sm:$0xf]
          %v4947 = vld [vmem:[#allocation15 + $0x18] sm:$0xf]
          %v4948 = vld [vmem:[#allocation15 + $0x1c] sm:$0xf]
          %v4949 = vld [vmem:[#allocation15 + $0x20] sm:$0xf]
          %v4950 = vld [vmem:[#allocation15 + $0x24] sm:$0xf]
          %v4951 = vld [vmem:[#allocation15 + $0x28] sm:$0xf]
          %v4952 = vld [vmem:[#allocation15 + $0x2c] sm:$0xf]
          %v4953 = vld [vmem:[#allocation15 + $0x30] sm:$0xf]
          %v4954 = vld [vmem:[#allocation15 + $0x34] sm:$0xf]
          %v4955 = vld [vmem:[#allocation15 + $0x38] sm:$0xf]
          %v4956 = vld [vmem:[#allocation15 + $0x3c] sm:$0xf]
          %v4957 = vld [vmem:[%s14] sm:$0x1]
          %v4974 = vunpack.c.l.b16 %v4941
          %v4975 = vunpack.c.l.b16 %v4942
          %v4976 = vunpack.c.l.b16 %v4943
          %v4977 = vunpack.c.l.b16 %v4944
          %v4978 = vunpack.c.l.b16 %v4945
          %v4979 = vunpack.c.l.b16 %v4946
          %v4980 = vunpack.c.l.b16 %v4947
          %v4981 = vunpack.c.l.b16 %v4948
          %v4982 = vunpack.c.l.b16 %v4949
          %v4983 = vunpack.c.l.b16 %v4950
          %v4984 = vunpack.c.l.b16 %v4951
          %v4985 = vunpack.c.l.b16 %v4952
          %v4986 = vunpack.c.l.b16 %v4953
          %v4987 = vunpack.c.l.b16 %v4954
          %v4988 = vunpack.c.l.b16 %v4955
          %v4989 = vunpack.c.l.b16 %v4956
          %v4990 = vpack.c.b16 %v4975, %v4974
          %v4991 = vpack.c.b16 %v4977, %v4976
          %v4992 = vpack.c.b16 %v4979, %v4978
          %v4993 = vpack.c.b16 %v4981, %v4980
          %v4994 = vpack.c.b16 %v4983, %v4982
          %v4995 = vpack.c.b16 %v4985, %v4984
          %v4996 = vpack.c.b16 %v4987, %v4986
          %v4997 = vpack.c.b16 %v4989, %v4988
          %5006 = vmatprep.subr.bf16.mxu0 0
          %5007 = vmatpush1.bf16.msra.mxu0 %v4990
          %5008 = vmatprep.subr.bf16.mxu0 0
          %5009 = vmatpush1.bf16.msra.mxu0 %v4991
          %5010 = vmatprep.subr.bf16.mxu0 0
          %5011 = vmatpush1.bf16.msra.mxu0 %v4992
          %5012 = vmatprep.subr.bf16.mxu0 0
          %5013 = vmatpush1.bf16.msra.mxu0 %v4993
          %5014 = vmatprep.subr.bf16.mxu0 0
          %5015 = vmatpush1.bf16.msra.mxu0 %v4994
          %5016 = vmatprep.subr.bf16.mxu0 0
          %5017 = vmatpush1.bf16.msra.mxu0 %v4995
          %5018 = vmatprep.subr.bf16.mxu0 0
          %5019 = vmatpush1.bf16.msra.mxu0 %v4996
          %5020 = vmatprep.subr.bf16.mxu0 0
          %5021 = vmatpush1.bf16.msra.mxu0 %v4997
          %5022 = vmatprep.subr.bf16.mxu0 0
          %5023 = vmatpush1.bf16.msra.mxu0 0
          %5024 = vmatprep.subr.bf16.mxu0 0
          %5025 = vmatpush1.bf16.msra.mxu0 0
          %5026 = vmatprep.subr.bf16.mxu0 0
          %5027 = vmatpush1.bf16.msra.mxu0 0
          %5028 = vmatprep.subr.bf16.mxu0 0
          %5029 = vmatpush1.bf16.msra.mxu0 0
          %5030 = vmatprep.subr.bf16.mxu0 0
          %5031 = vmatpush1.bf16.msra.mxu0 0
          %5032 = vmatprep.subr.bf16.mxu0 0
          %5033 = vmatpush1.bf16.msra.mxu0 0
          %5034 = vmatprep.subr.bf16.mxu0 0
          %5035 = vmatpush1.bf16.msra.mxu0 0
          %5036 = vmatprep.subr.bf16.mxu0 0
          %5037 = vmatpush1.bf16.msra.mxu0 0
          %5038 = vmatprep.mubr.bf16.mxu0 0
          %5039 = vmatmul.mubr.bf16.gmra.mrb[0].mxu0 %v4940
          %v5040 = vpop.f32.mrb[0].mxu0
          %v5041 = vadd.f32 %v4957, %v5040
          %v5042 = vpop.f32.mrb[0].mxu0
          %v5043 = vpop.f32.mrb[0].mxu0
          %v5044 = vpop.f32.mrb[0].mxu0
          %5045 = vdwg.mxu0
          %5046 = vst [vmem:[#allocation17] sm:$0x1] %v5041
        $region120: #{classifier3_forward.1} parent=79 // pred_fallthru
          _
        // Predicated region
        $region121: #{classifier3_forward.1} parent=79 // pred_check
          %p5047 = pneg %p426
        $region122: #{classifier3_forward.1} parent=79 // pred_check_branch
          %5049 = sbr.rel (%p5047) target = $region124
        $region123: #{classifier3_forward.1} parent=79 // pred_region
          %s5051 = ssub.s32 16, 16
          %5052 = vsyncadd [#allocation5], %s5051
          %s5054 = sshll.u32 [#allocation17], 4
          %s5055 = int_to_ptr.vmem [resolvable:$true] %s5054
          %5057 = dma.vmem_to_hbm [thread:$0]  %s5055, 16, %s15, [#allocation5]
        $region124: #{classifier3_forward.1} parent=79 // pred_fallthru
          _
        // Predicated region
        $region125: #{classifier3_forward.1} parent=79 // pred_check
          %p5058 = pneg %p426
        $region126: #{classifier3_forward.1} parent=79 // pred_check_branch
          %5060 = sbr.rel (%p5058) target = $region128
        $region127: #{classifier3_forward.1} parent=79 // pred_region
          %5061 = dma.done [#allocation5], 16
        $region128: #{classifier3_forward.1} parent=79 // pred_fallthru
          _
      $region80: #{classifier3_forward.1} parent=5 // pred_fallthru
        _
      %p5062 = scmp.le.s32.totalorder 2, %s33
      // Predicated region
      $region129: #{classifier3_forward.1} parent=5 // pred_check
        %p5063 = pneg %p5062
      $region130: #{classifier3_forward.1} parent=5 // pred_check_branch
        %5065 = sbr.rel (%p5063) target = $region132
      $region131: #{classifier3_forward.1} parent=5 // pred_region
        %s5066 = ssub.s32 %s33, 2
      $region132: #{classifier3_forward.1} parent=5 // pred_fallthru
        _
    $region6: #{classifier3_forward.1} parent=1 // loop_footer
      %s37 = sadd.s32 1, %s33
    $region7: #{classifier3_forward.1} parent=1 // loop_footer_branch
      %32 = sbr.rel target = $region3
    $region8: #{classifier3_forward.1} parent=1 // loop_exit
      _
    %5067 = vsyncpa [#allocation4], 1
    %s5068 = scalar_lea.sflag [#allocation4], 1
    %5069 = vsyncpa %s5068, 1
    %5070 = vsyncpa [#allocation7], 1
    %s5071 = scalar_lea.sflag [#allocation7], 1
    %5072 = vsyncpa %s5071, 1
    %5073 = vsyncpa [#allocation10], 1
    %s5074 = scalar_lea.sflag [#allocation10], 1
    %5075 = vsyncpa %s5074, 1
    %5076 = vsyncpa [#allocation13], 1
    %s5077 = scalar_lea.sflag [#allocation13], 1
    %5078 = vsyncpa %s5077, 1
    %5079 = vsyncpa [#allocation16], 1
    %5080 = vsyncpa [#allocation5], 1
    %s5081 = scalar_lea.sflag [#allocation5], 1
    %5082 = vsyncpa %s5081, 1

</llo_original>
